<compile_context>
chip_gen: v7x
topology: tpu7x:2x2x1
jax: 0.10.0
libtpu: 0.0.40
codegen_flags: <defaults>
</compile_context>

<pallas_src>
from functools import partial

import jax
import jax.numpy as jnp
from jax.experimental import pallas as pl
from jax.experimental.pallas import tpu as pltpu

# ---------------- small, module-consistent sizes -------------------------
B          = 2                  # batch
BP         = 8                  # batch padded to one (8,128) sublane tile
C_IN       = 3                  # image channels
IMG        = 16                 # spatial size (stand-in for 224 crop)
C_FEAT     = 128                # backbone channels (stand-in for resnet50's 2048)
HIDDEN     = 128                # hidden_size; tie_weights=True -> embed == hidden
EMBED      = HIDDEN
VOCAB      = 256                # vocab size
T_CAP      = 8                  # caption length
T_SEQ      = T_CAP + 1          # image-feature token prepended
LENGTHS    = (9, 7)             # pack lengths, sorted descending, <= T_SEQ
HW         = IMG * IMG
KPATCH     = 3 * 3 * C_IN
KPATCH_PAD = 32                 # pad im2col K (27 -> 32) for an aligned MXU feed
N_PACK     = sum(LENGTHS)

_VMEM = pl.BlockSpec(memory_space=pltpu.MemorySpace.VMEM)


# ------------------------------ fused kernel -------------------------------
def fused_kernel(patch_ref, cw_ref, cb_ref, avg_ref, lw_ref, lb_ref, g_ref,
                 bta_ref, emb_ref, wih0_ref, b0_ref, wblk_ref, b1_ref,
                 fcw_ref, fcb_ref, out_ref):
    """Encoder (conv-as-matmul + ReLU + GAP + Linear + BN), 2-layer LSTM and the
    tied FC, all in one kernel.  Output rows are time-major: row t*BP + b."""
    H = HIDDEN
    f32 = jnp.float32
    bf16 = jnp.bfloat16

    # ---------------- EncoderCNN ----------------
    conv = jnp.dot(patch_ref[...], cw_ref[...],
                   preferred_element_type=f32) + cb_ref[...]
    conv = jnp.maximum(conv, 0.0)                            # (B*HW, C_FEAT)
    # global average pool as a matmul (avg_ref rows B..BP-1 are zero)
    pooled = jnp.dot(avg_ref[...], conv.astype(bf16),
                     preferred_element_type=f32)             # (BP, C_FEAT)
    feat = jnp.dot(pooled.astype(bf16), lw_ref[...],
                   preferred_element_type=f32) + lb_ref[...] # (BP, EMBED)
    # BatchNorm1d: batch mean / biased batch var over the B valid rows, eps=1e-5
    row = jax.lax.broadcasted_iota(jnp.int32, (BP, 1), 0)
    mask = (row < B).astype(f32)
    mu = jnp.sum(feat * mask, axis=0, keepdims=True) / B
    var = jnp.sum(((feat - mu) ** 2) * mask, axis=0, keepdims=True) / B
    features = (feat - mu) * jax.lax.rsqrt(var + 1e-5) * g_ref[...] + bta_ref[...]

    # ---------------- DecoderLSTM ----------------
    # layer-0 input-to-hidden matmuls hoisted out of the time loop (bias folded)
    wih0 = wih0_ref[...]                                     # (E, 4H) bf16
    b0 = b0_ref[...]                                         # (1, 4H) f32
    xg_feat = jnp.dot(features.astype(bf16), wih0,
                      preferred_element_type=f32) + b0       # (BP, 4H)
    xg_emb = jnp.dot(emb_ref[...], wih0,
                     preferred_element_type=f32) + b0        # (T_CAP*BP, 4H)

    w_block = wblk_ref[...]                                  # (2H, 8H) bf16
    fc_w = fcw_ref[...]                                      # (H, VOCAB) bf16
    b1b = jnp.broadcast_to(b1_ref[...], (BP, 4 * H))         # hoisted broadcasts
    fcb = jnp.broadcast_to(fcb_ref[...], (BP, VOCAB))

    def gates_to_hc(gates, c):
        # gate layout permuted offline to (i, f, o, g):
        # one sigmoid over a contiguous 3H slice, one tanh over H
        sig = jax.nn.sigmoid(gates[:, :3 * H])
        g = jnp.tanh(gates[:, 3 * H:])
        i = sig[:, 0 * H:1 * H]
        f = sig[:, 1 * H:2 * H]
        o = sig[:, 2 * H:3 * H]
        c_new = f * c + i * g
        h_new = o * jnp.tanh(c_new)
        return h_new, c_new

    c0 = c1 = jnp.zeros((BP, H), f32)
    h1_b = jnp.zeros((BP, H), bf16)
    hh0 = jnp.zeros((BP, 4 * H), f32)       # h0(t-1) @ whh0 ; zero at t = 0

    # Python-unrolled time loop: recurrent state stays in vregs; the only VMEM
    # writes on the critical path are the full-tile per-step logits stores.
    for t in range(T_SEQ):
        xg_t = xg_feat if t == 0 else xg_emb[(t - 1) * BP:t * BP, :]
        h0, c0 = gates_to_hc(xg_t + hh0, c0)
        # fused recurrent matmul over [h0(t), h1(t-1)]  (K = 2H = 256):
        #   cols [:4H]  -> h0(t) @ whh0   (layer-0 h-contribution, step t+1)
        #   cols [4H:]  -> h0(t) @ wih1 + h1(t-1) @ whh1  (layer-1 gates, step t)
        x1 = jnp.concatenate([h0.astype(bf16), h1_b], axis=1)   # (BP, 2H)
        big = jnp.dot(x1, w_block, preferred_element_type=f32)  # (BP, 8H)
        hh0 = big[:, :4 * H]
        h1, c1 = gates_to_hc(big[:, 4 * H:] + b1b, c1)
        h1_b = h1.astype(bf16)
        # tied FC per timestep; dropout(0.3) -> identity (eval)
        out_ref[t * BP:(t + 1) * BP, :] = (
            jnp.dot(h1_b, fc_w, preferred_element_type=f32) + fcb)


# ------------------------------ wrapper -----------------------------------
@partial(jax.jit, static_argnums=(2,))
def encoder_decoder_forward(images, captions, lengths, p):
    # ---- im2col (3x3, pad=1), NCHW -> NHWC, K padded 27 -> 32 (XLA, one-time) ----
    x = jnp.transpose(images, (0, 2, 3, 1))
    xp = jnp.pad(x, ((0, 0), (1, 1), (1, 1), (0, 0)))
    cols = [xp[:, di:di + IMG, dj:dj + IMG, :]
            for di in range(3) for dj in range(3)]
    patches = jnp.concatenate(cols, axis=-1).reshape(B * HW, KPATCH)
    patches = jnp.pad(patches, ((0, 0), (0, KPATCH_PAD - KPATCH)))
    patches = patches.astype(jnp.bfloat16)

    # ---- embedding lookup, time-major with the batch padded to BP=8 rows ----
    emb = jnp.take(p["embedding"], captions, axis=0)          # (B, T_CAP, E)
    emb_tm = jnp.transpose(emb, (1, 0, 2))                    # (T_CAP, B, E)
    emb_tm = jnp.pad(emb_tm, ((0, 0), (0, BP - B), (0, 0)))   # (T_CAP, BP, E)
    emb_flat = emb_tm.reshape(T_CAP * BP, EMBED).astype(jnp.bfloat16)

    # ---- single fused pallas_call: encoder + LSTM + FC all resident in VMEM ----
    logits_full = pl.pallas_call(
        fused_kernel,
        out_shape=jax.ShapeDtypeStruct((T_SEQ * BP, VOCAB), jnp.float32),
        in_specs=[_VMEM] * 15,
        out_specs=_VMEM,
    )(patches, p["conv_w"], p["conv_b"], p["avg_mat"], p["lin_w"], p["lin_b"],
      p["bn_gamma"], p["bn_beta"], emb_flat,
      p["wih0"], p["b0"], p["w_block"], p["b1"],
      p["fc_w"], p["fc_b"])

    # pack_padded_sequence row order: timestep-major over valid (t, b)
    idx = [t * BP + b for t in range(T_SEQ) for b in range(B) if t < lengths[b]]
    idx = jnp.asarray(idx, dtype=jnp.int32)
    return logits_full[idx]                                   # (N_PACK, VOCAB)


# ------------------------------ params -------------------------------------
def init_params(key):
    ks = jax.random.split(key, 12)
    H = HIDDEN
    k = H ** -0.5  # PyTorch LSTM default init range
    bf = jnp.bfloat16

    def perm(w):
        # PyTorch gate order (i, f, g, o) -> kernel layout (i, f, o, g)
        return jnp.concatenate([w[..., 0 * H:1 * H], w[..., 1 * H:2 * H],
                                w[..., 3 * H:4 * H], w[..., 2 * H:3 * H]],
                               axis=-1)

    emb = jax.random.uniform(ks[2], (VOCAB, EMBED), jnp.float32, -0.1, 0.1)
    conv_w = jax.random.normal(ks[0], (KPATCH, C_FEAT), jnp.float32) * 0.05
    conv_w = jnp.pad(conv_w, ((0, KPATCH_PAD - KPATCH), (0, 0)))   # zero-pad K

    wih0 = perm(jax.random.uniform(ks[3], (EMBED, 4 * H), jnp.float32, -k, k))
    whh0 = perm(jax.random.uniform(ks[4], (H, 4 * H), jnp.float32, -k, k))
    b0 = perm(jax.random.uniform(ks[5], (1, 4 * H), jnp.float32, -k, k)
              + jax.random.uniform(ks[6], (1, 4 * H), jnp.float32, -k, k))
    wih1 = perm(jax.random.uniform(ks[7], (H, 4 * H), jnp.float32, -k, k))
    whh1 = perm(jax.random.uniform(ks[8], (H, 4 * H), jnp.float32, -k, k))
    b1 = perm(jax.random.uniform(ks[9], (1, 4 * H), jnp.float32, -k, k)
              + jax.random.uniform(ks[10], (1, 4 * H), jnp.float32, -k, k))

    # fused recurrent block weight: [h0(t), h1(t-1)] @ [[whh0, wih1],[0, whh1]]
    w_block = jnp.concatenate(
        [jnp.concatenate([whh0, wih1], axis=1),
         jnp.concatenate([jnp.zeros((H, 4 * H), jnp.float32), whh1], axis=1)],
        axis=0)                                               # (2H, 8H)

    # global-average-pool matrix: row b has 1/HW over that batch's HW rows,
    # rows B..BP-1 are zero (batch padding)
    avg_mat = jnp.zeros((BP, B * HW), jnp.float32)
    avg_mat = avg_mat.at[:B].set(
        jnp.repeat(jnp.eye(B, dtype=jnp.float32), HW, axis=1) / HW)

    return dict(
        conv_w=conv_w.astype(bf),
        conv_b=jnp.zeros((1, C_FEAT), jnp.float32),
        avg_mat=avg_mat.astype(bf),
        lin_w=(jax.random.normal(ks[1], (C_FEAT, EMBED), jnp.float32)
               * 0.02).astype(bf),
        lin_b=jnp.zeros((1, EMBED), jnp.float32),
        bn_gamma=jnp.ones((1, EMBED), jnp.float32),
        bn_beta=jnp.zeros((1, EMBED), jnp.float32),
        embedding=emb,                        # f32 table for the wrapper lookup
        wih0=wih0.astype(bf),
        b0=b0,
        w_block=w_block.astype(bf),
        b1=b1,
        fc_w=emb.T.astype(bf),                # tie_weights=True
        fc_b=jnp.zeros((1, VOCAB), jnp.float32),
    )


# ------------------------------ main ----------------------------------------
if __name__ == "__main__":
    key = jax.random.PRNGKey(0)
    k_par, k_img, k_cap = jax.random.split(key, 3)

    params = init_params(k_par)
    images = jax.random.normal(k_img, (B, C_IN, IMG, IMG), jnp.float32)  # NCHW
    captions = jax.random.randint(k_cap, (B, T_CAP), 0, VOCAB, jnp.int32)

    logits = encoder_decoder_forward(images, captions, LENGTHS, params)
    logits = jax.block_until_ready(logits)

    assert logits.shape == (N_PACK, VOCAB), logits.shape
    assert logits.dtype == jnp.float32
    assert bool(jnp.all(jnp.isfinite(logits)))
    print("KERNEL_OK")
</pallas_src>

<mosaic_0001>
module attributes {stable_mosaic.version = 11 : i64} {
  func.func @fused_kernel(%arg0: memref<512x32xbf16, #tpu.memory_space<vmem>>, %arg1: memref<32x128xbf16, #tpu.memory_space<vmem>>, %arg2: memref<1x128xf32, #tpu.memory_space<vmem>>, %arg3: memref<8x512xbf16, #tpu.memory_space<vmem>>, %arg4: memref<128x128xbf16, #tpu.memory_space<vmem>>, %arg5: memref<1x128xf32, #tpu.memory_space<vmem>>, %arg6: memref<1x128xf32, #tpu.memory_space<vmem>>, %arg7: memref<1x128xf32, #tpu.memory_space<vmem>>, %arg8: memref<64x128xbf16, #tpu.memory_space<vmem>>, %arg9: memref<128x512xbf16, #tpu.memory_space<vmem>>, %arg10: memref<1x512xf32, #tpu.memory_space<vmem>>, %arg11: memref<256x1024xbf16, #tpu.memory_space<vmem>>, %arg12: memref<1x512xf32, #tpu.memory_space<vmem>>, %arg13: memref<128x256xbf16, #tpu.memory_space<vmem>>, %arg14: memref<1x256xf32, #tpu.memory_space<vmem>>, %arg15: memref<72x256xf32, #tpu.memory_space<vmem>>) attributes {dimension_semantics = [], scalar_prefetch = 0 : i64, scratch_operands = 0 : i64, tpu.core_type = #tpu.core_type<tc>} {
    %c0 = arith.constant 0 : index
    %c0_0 = arith.constant 0 : index
    %0 = vector.load %arg0[%c0, %c0_0] : memref<512x32xbf16, #tpu.memory_space<vmem>>, vector<512x32xbf16>
    %c0_1 = arith.constant 0 : index
    %c0_2 = arith.constant 0 : index
    %1 = vector.load %arg1[%c0_1, %c0_2] : memref<32x128xbf16, #tpu.memory_space<vmem>>, vector<32x128xbf16>
    %cst = arith.constant dense<0.000000e+00> : vector<512x128xf32>
    %2 = tpu.matmul %0, %1, %cst {dimension_numbers = #tpu.dot_dimension_numbers<[1], [0], [0], [1], [0, 0, 1, 1], [], []>} : vector<512x32xbf16>, vector<32x128xbf16>, vector<512x128xf32> -> vector<512x128xf32>
    %c0_3 = arith.constant 0 : index
    %c0_4 = arith.constant 0 : index
    %3 = vector.load %arg2[%c0_3, %c0_4] : memref<1x128xf32, #tpu.memory_space<vmem>>, vector<1x128xf32>
    %4 = vector.broadcast %3 : vector<1x128xf32> to vector<512x128xf32>
    %5 = arith.addf %2, %4 : vector<512x128xf32>
    %cst_5 = arith.constant 0.000000e+00 : f32
    %6 = vector.broadcast %cst_5 : f32 to vector<512x128xf32>
    %7 = arith.maximumf %5, %6 : vector<512x128xf32>
    %c0_6 = arith.constant 0 : index
    %c0_7 = arith.constant 0 : index
    %8 = vector.load %arg3[%c0_6, %c0_7] : memref<8x512xbf16, #tpu.memory_space<vmem>>, vector<8x512xbf16>
    %9 = arith.truncf %7 : vector<512x128xf32> to vector<512x128xbf16>
    %cst_8 = arith.constant dense<0.000000e+00> : vector<8x128xf32>
    %10 = tpu.matmul %8, %9, %cst_8 {dimension_numbers = #tpu.dot_dimension_numbers<[1], [0], [0], [1], [0, 0, 1, 1], [], []>} : vector<8x512xbf16>, vector<512x128xbf16>, vector<8x128xf32> -> vector<8x128xf32>
    %11 = arith.truncf %10 : vector<8x128xf32> to vector<8x128xbf16>
    %c0_9 = arith.constant 0 : index
    %c0_10 = arith.constant 0 : index
    %12 = vector.load %arg4[%c0_9, %c0_10] : memref<128x128xbf16, #tpu.memory_space<vmem>>, vector<128x128xbf16>
    %cst_11 = arith.constant dense<0.000000e+00> : vector<8x128xf32>
    %13 = tpu.matmul %11, %12, %cst_11 {dimension_numbers = #tpu.dot_dimension_numbers<[1], [0], [0], [1], [0, 0, 1, 1], [], []>} : vector<8x128xbf16>, vector<128x128xbf16>, vector<8x128xf32> -> vector<8x128xf32>
    %c0_12 = arith.constant 0 : index
    %c0_13 = arith.constant 0 : index
    %14 = vector.load %arg5[%c0_12, %c0_13] : memref<1x128xf32, #tpu.memory_space<vmem>>, vector<1x128xf32>
    %15 = vector.broadcast %14 : vector<1x128xf32> to vector<8x128xf32>
    %16 = arith.addf %13, %15 : vector<8x128xf32>
    %17 = tpu.iota {dimensions = array<i32: 0>} : vector<8x1xi32>
    %c2_i32 = arith.constant 2 : i32
    %18 = vector.broadcast %c2_i32 : i32 to vector<8x1xi32>
    %19 = arith.cmpi slt, %17, %18 : vector<8x1xi32>
    %20 = arith.extui %19 : vector<8x1xi1> to vector<8x1xi32>
    %21 = arith.sitofp %20 : vector<8x1xi32> to vector<8x1xf32>
    %22 = vector.broadcast %21 : vector<8x1xf32> to vector<8x128xf32>
    %23 = arith.mulf %16, %22 : vector<8x128xf32>
    %cst_14 = arith.constant dense<0.000000e+00> : vector<128xf32>
    %24 = vector.multi_reduction <add>, %23, %cst_14 [0] : vector<8x128xf32> to vector<128xf32>
    %25 = vector.shape_cast %24 : vector<128xf32> to vector<1x128xf32>
    %cst_15 = arith.constant 2.000000e+00 : f32
    %26 = vector.broadcast %cst_15 : f32 to vector<1x128xf32>
    %27 = arith.divf %25, %26 : vector<1x128xf32>
    %28 = vector.broadcast %27 : vector<1x128xf32> to vector<8x128xf32>
    %29 = arith.subf %16, %28 : vector<8x128xf32>
    %30 = arith.mulf %29, %29 : vector<8x128xf32>
    %31 = vector.broadcast %21 : vector<8x1xf32> to vector<8x128xf32>
    %32 = arith.mulf %30, %31 : vector<8x128xf32>
    %cst_16 = arith.constant dense<0.000000e+00> : vector<128xf32>
    %33 = vector.multi_reduction <add>, %32, %cst_16 [0] : vector<8x128xf32> to vector<128xf32>
    %34 = vector.shape_cast %33 : vector<128xf32> to vector<1x128xf32>
    %cst_17 = arith.constant 2.000000e+00 : f32
    %35 = vector.broadcast %cst_17 : f32 to vector<1x128xf32>
    %36 = arith.divf %34, %35 : vector<1x128xf32>
    %37 = vector.broadcast %27 : vector<1x128xf32> to vector<8x128xf32>
    %38 = arith.subf %16, %37 : vector<8x128xf32>
    %cst_18 = arith.constant 9.99999974E-6 : f32
    %39 = vector.broadcast %cst_18 : f32 to vector<1x128xf32>
    %40 = arith.addf %36, %39 : vector<1x128xf32>
    %41 = math.rsqrt %40 : vector<1x128xf32>
    %42 = vector.broadcast %41 : vector<1x128xf32> to vector<8x128xf32>
    %43 = arith.mulf %38, %42 : vector<8x128xf32>
    %c0_19 = arith.constant 0 : index
    %c0_20 = arith.constant 0 : index
    %44 = vector.load %arg6[%c0_19, %c0_20] : memref<1x128xf32, #tpu.memory_space<vmem>>, vector<1x128xf32>
    %45 = vector.broadcast %44 : vector<1x128xf32> to vector<8x128xf32>
    %46 = arith.mulf %43, %45 : vector<8x128xf32>
    %c0_21 = arith.constant 0 : index
    %c0_22 = arith.constant 0 : index
    %47 = vector.load %arg7[%c0_21, %c0_22] : memref<1x128xf32, #tpu.memory_space<vmem>>, vector<1x128xf32>
    %48 = vector.broadcast %47 : vector<1x128xf32> to vector<8x128xf32>
    %49 = arith.addf %46, %48 : vector<8x128xf32>
    %c0_23 = arith.constant 0 : index
    %c0_24 = arith.constant 0 : index
    %50 = vector.load %arg9[%c0_23, %c0_24] : memref<128x512xbf16, #tpu.memory_space<vmem>>, vector<128x512xbf16>
    %c0_25 = arith.constant 0 : index
    %c0_26 = arith.constant 0 : index
    %51 = vector.load %arg10[%c0_25, %c0_26] : memref<1x512xf32, #tpu.memory_space<vmem>>, vector<1x512xf32>
    %52 = arith.truncf %49 : vector<8x128xf32> to vector<8x128xbf16>
    %cst_27 = arith.constant dense<0.000000e+00> : vector<8x512xf32>
    %53 = tpu.matmul %52, %50, %cst_27 {dimension_numbers = #tpu.dot_dimension_numbers<[1], [0], [0], [1], [0, 0, 1, 1], [], []>} : vector<8x128xbf16>, vector<128x512xbf16>, vector<8x512xf32> -> vector<8x512xf32>
    %54 = vector.broadcast %51 : vector<1x512xf32> to vector<8x512xf32>
    %55 = arith.addf %53, %54 : vector<8x512xf32>
    %c0_28 = arith.constant 0 : index
    %c0_29 = arith.constant 0 : index
    %56 = vector.load %arg8[%c0_28, %c0_29] : memref<64x128xbf16, #tpu.memory_space<vmem>>, vector<64x128xbf16>
    %cst_30 = arith.constant dense<0.000000e+00> : vector<64x512xf32>
    %57 = tpu.matmul %56, %50, %cst_30 {dimension_numbers = #tpu.dot_dimension_numbers<[1], [0], [0], [1], [0, 0, 1, 1], [], []>} : vector<64x128xbf16>, vector<128x512xbf16>, vector<64x512xf32> -> vector<64x512xf32>
    %58 = vector.broadcast %51 : vector<1x512xf32> to vector<64x512xf32>
    %59 = arith.addf %57, %58 : vector<64x512xf32>
    %c0_31 = arith.constant 0 : index
    %c0_32 = arith.constant 0 : index
    %60 = vector.load %arg11[%c0_31, %c0_32] : memref<256x1024xbf16, #tpu.memory_space<vmem>>, vector<256x1024xbf16>
    %c0_33 = arith.constant 0 : index
    %c0_34 = arith.constant 0 : index
    %61 = vector.load %arg13[%c0_33, %c0_34] : memref<128x256xbf16, #tpu.memory_space<vmem>>, vector<128x256xbf16>
    %c0_35 = arith.constant 0 : index
    %c0_36 = arith.constant 0 : index
    %62 = vector.load %arg12[%c0_35, %c0_36] : memref<1x512xf32, #tpu.memory_space<vmem>>, vector<1x512xf32>
    %63 = vector.shape_cast %62 : vector<1x512xf32> to vector<1x512xf32>
    %64 = vector.broadcast %63 : vector<1x512xf32> to vector<8x512xf32>
    %c0_37 = arith.constant 0 : index
    %c0_38 = arith.constant 0 : index
    %65 = vector.load %arg14[%c0_37, %c0_38] : memref<1x256xf32, #tpu.memory_space<vmem>>, vector<1x256xf32>
    %66 = vector.shape_cast %65 : vector<1x256xf32> to vector<1x256xf32>
    %67 = vector.broadcast %66 : vector<1x256xf32> to vector<8x256xf32>
    %cst_39 = arith.constant 0.000000e+00 : f32
    %68 = vector.broadcast %cst_39 : f32 to vector<8x128xf32>
    %cst_40 = arith.constant 0.000000e+00 : bf16
    %69 = vector.broadcast %cst_40 : bf16 to vector<8x128xbf16>
    %cst_41 = arith.constant 0.000000e+00 : f32
    %70 = vector.broadcast %cst_41 : f32 to vector<8x512xf32>
    %71 = arith.addf %55, %70 : vector<8x512xf32>
    %72 = vector.extract_strided_slice %71 {offsets = [0, 0], sizes = [8, 384], strides = [1, 1]} : vector<8x512xf32> to vector<8x384xf32>
    %73 = arith.negf %72 : vector<8x384xf32>
    %74 = math.exp %73 : vector<8x384xf32>
    %cst_42 = arith.constant 1.000000e+00 : f32
    %75 = vector.broadcast %cst_42 : f32 to vector<8x384xf32>
    %76 = arith.addf %75, %74 : vector<8x384xf32>
    %77 = arith.divf %75, %76 : vector<8x384xf32>
    %78 = vector.extract_strided_slice %71 {offsets = [0, 384], sizes = [8, 128], strides = [1, 1]} : vector<8x512xf32> to vector<8x128xf32>
    %79 = math.tanh %78 : vector<8x128xf32>
    %80 = vector.extract_strided_slice %77 {offsets = [0, 0], sizes = [8, 128], strides = [1, 1]} : vector<8x384xf32> to vector<8x128xf32>
    %81 = vector.extract_strided_slice %77 {offsets = [0, 128], sizes = [8, 128], strides = [1, 1]} : vector<8x384xf32> to vector<8x128xf32>
    %82 = vector.extract_strided_slice %77 {offsets = [0, 256], sizes = [8, 128], strides = [1, 1]} : vector<8x384xf32> to vector<8x128xf32>
    %83 = arith.mulf %81, %68 : vector<8x128xf32>
    %84 = arith.mulf %80, %79 : vector<8x128xf32>
    %85 = arith.addf %83, %84 : vector<8x128xf32>
    %86 = math.tanh %85 : vector<8x128xf32>
    %87 = arith.mulf %82, %86 : vector<8x128xf32>
    %88 = arith.truncf %87 : vector<8x128xf32> to vector<8x128xbf16>
    %89 = tpu.concatenate %88, %69 in 1 : vector<8x128xbf16>, vector<8x128xbf16> -> vector<8x256xbf16>
    %cst_43 = arith.constant dense<0.000000e+00> : vector<8x1024xf32>
    %90 = tpu.matmul %89, %60, %cst_43 {dimension_numbers = #tpu.dot_dimension_numbers<[1], [0], [0], [1], [0, 0, 1, 1], [], []>} : vector<8x256xbf16>, vector<256x1024xbf16>, vector<8x1024xf32> -> vector<8x1024xf32>
    %91 = vector.extract_strided_slice %90 {offsets = [0, 0], sizes = [8, 512], strides = [1, 1]} : vector<8x1024xf32> to vector<8x512xf32>
    %92 = vector.extract_strided_slice %90 {offsets = [0, 512], sizes = [8, 512], strides = [1, 1]} : vector<8x1024xf32> to vector<8x512xf32>
    %93 = arith.addf %92, %64 : vector<8x512xf32>
    %94 = vector.extract_strided_slice %93 {offsets = [0, 0], sizes = [8, 384], strides = [1, 1]} : vector<8x512xf32> to vector<8x384xf32>
    %95 = arith.negf %94 : vector<8x384xf32>
    %96 = math.exp %95 : vector<8x384xf32>
    %cst_44 = arith.constant 1.000000e+00 : f32
    %97 = vector.broadcast %cst_44 : f32 to vector<8x384xf32>
    %98 = arith.addf %97, %96 : vector<8x384xf32>
    %99 = arith.divf %97, %98 : vector<8x384xf32>
    %100 = vector.extract_strided_slice %93 {offsets = [0, 384], sizes = [8, 128], strides = [1, 1]} : vector<8x512xf32> to vector<8x128xf32>
    %101 = math.tanh %100 : vector<8x128xf32>
    %102 = vector.extract_strided_slice %99 {offsets = [0, 0], sizes = [8, 128], strides = [1, 1]} : vector<8x384xf32> to vector<8x128xf32>
    %103 = vector.extract_strided_slice %99 {offsets = [0, 128], sizes = [8, 128], strides = [1, 1]} : vector<8x384xf32> to vector<8x128xf32>
    %104 = vector.extract_strided_slice %99 {offsets = [0, 256], sizes = [8, 128], strides = [1, 1]} : vector<8x384xf32> to vector<8x128xf32>
    %105 = arith.mulf %103, %68 : vector<8x128xf32>
    %106 = arith.mulf %102, %101 : vector<8x128xf32>
    %107 = arith.addf %105, %106 : vector<8x128xf32>
    %108 = math.tanh %107 : vector<8x128xf32>
    %109 = arith.mulf %104, %108 : vector<8x128xf32>
    %110 = arith.truncf %109 : vector<8x128xf32> to vector<8x128xbf16>
    %cst_45 = arith.constant dense<0.000000e+00> : vector<8x256xf32>
    %111 = tpu.matmul %110, %61, %cst_45 {dimension_numbers = #tpu.dot_dimension_numbers<[1], [0], [0], [1], [0, 0, 1, 1], [], []>} : vector<8x128xbf16>, vector<128x256xbf16>, vector<8x256xf32> -> vector<8x256xf32>
    %112 = arith.addf %111, %67 : vector<8x256xf32>
    %c0_46 = arith.constant 0 : index
    %c0_47 = arith.constant 0 : index
    %113 = vector.load %arg15[%c0_46, %c0_47] : memref<72x256xf32, #tpu.memory_space<vmem>>, vector<8x256xf32>
    tpu.vector_store %arg15[%c0_46, %c0_47], %112 {strides = array<i32>} : memref<72x256xf32, #tpu.memory_space<vmem>>, vector<8x256xf32>,
    %114 = vector.extract_strided_slice %59 {offsets = [0, 0], sizes = [8, 512], strides = [1, 1]} : vector<64x512xf32> to vector<8x512xf32>
    %115 = arith.addf %114, %91 : vector<8x512xf32>
    %116 = vector.extract_strided_slice %115 {offsets = [0, 0], sizes = [8, 384], strides = [1, 1]} : vector<8x512xf32> to vector<8x384xf32>
    %117 = arith.negf %116 : vector<8x384xf32>
    %118 = math.exp %117 : vector<8x384xf32>
    %cst_48 = arith.constant 1.000000e+00 : f32
    %119 = vector.broadcast %cst_48 : f32 to vector<8x384xf32>
    %120 = arith.addf %119, %118 : vector<8x384xf32>
    %121 = arith.divf %119, %120 : vector<8x384xf32>
    %122 = vector.extract_strided_slice %115 {offsets = [0, 384], sizes = [8, 128], strides = [1, 1]} : vector<8x512xf32> to vector<8x128xf32>
    %123 = math.tanh %122 : vector<8x128xf32>
    %124 = vector.extract_strided_slice %121 {offsets = [0, 0], sizes = [8, 128], strides = [1, 1]} : vector<8x384xf32> to vector<8x128xf32>
    %125 = vector.extract_strided_slice %121 {offsets = [0, 128], sizes = [8, 128], strides = [1, 1]} : vector<8x384xf32> to vector<8x128xf32>
    %126 = vector.extract_strided_slice %121 {offsets = [0, 256], sizes = [8, 128], strides = [1, 1]} : vector<8x384xf32> to vector<8x128xf32>
    %127 = arith.mulf %125, %85 : vector<8x128xf32>
    %128 = arith.mulf %124, %123 : vector<8x128xf32>
    %129 = arith.addf %127, %128 : vector<8x128xf32>
    %130 = math.tanh %129 : vector<8x128xf32>
    %131 = arith.mulf %126, %130 : vector<8x128xf32>
    %132 = arith.truncf %131 : vector<8x128xf32> to vector<8x128xbf16>
    %133 = tpu.concatenate %132, %110 in 1 : vector<8x128xbf16>, vector<8x128xbf16> -> vector<8x256xbf16>
    %cst_49 = arith.constant dense<0.000000e+00> : vector<8x1024xf32>
    %134 = tpu.matmul %133, %60, %cst_49 {dimension_numbers = #tpu.dot_dimension_numbers<[1], [0], [0], [1], [0, 0, 1, 1], [], []>} : vector<8x256xbf16>, vector<256x1024xbf16>, vector<8x1024xf32> -> vector<8x1024xf32>
    %135 = vector.extract_strided_slice %134 {offsets = [0, 0], sizes = [8, 512], strides = [1, 1]} : vector<8x1024xf32> to vector<8x512xf32>
    %136 = vector.extract_strided_slice %134 {offsets = [0, 512], sizes = [8, 512], strides = [1, 1]} : vector<8x1024xf32> to vector<8x512xf32>
    %137 = arith.addf %136, %64 : vector<8x512xf32>
    %138 = vector.extract_strided_slice %137 {offsets = [0, 0], sizes = [8, 384], strides = [1, 1]} : vector<8x512xf32> to vector<8x384xf32>
    %139 = arith.negf %138 : vector<8x384xf32>
    %140 = math.exp %139 : vector<8x384xf32>
    %cst_50 = arith.constant 1.000000e+00 : f32
    %141 = vector.broadcast %cst_50 : f32 to vector<8x384xf32>
    %142 = arith.addf %141, %140 : vector<8x384xf32>
    %143 = arith.divf %141, %142 : vector<8x384xf32>
    %144 = vector.extract_strided_slice %137 {offsets = [0, 384], sizes = [8, 128], strides = [1, 1]} : vector<8x512xf32> to vector<8x128xf32>
    %145 = math.tanh %144 : vector<8x128xf32>
    %146 = vector.extract_strided_slice %143 {offsets = [0, 0], sizes = [8, 128], strides = [1, 1]} : vector<8x384xf32> to vector<8x128xf32>
    %147 = vector.extract_strided_slice %143 {offsets = [0, 128], sizes = [8, 128], strides = [1, 1]} : vector<8x384xf32> to vector<8x128xf32>
    %148 = vector.extract_strided_slice %143 {offsets = [0, 256], sizes = [8, 128], strides = [1, 1]} : vector<8x384xf32> to vector<8x128xf32>
    %149 = arith.mulf %147, %107 : vector<8x128xf32>
    %150 = arith.mulf %146, %145 : vector<8x128xf32>
    %151 = arith.addf %149, %150 : vector<8x128xf32>
    %152 = math.tanh %151 : vector<8x128xf32>
    %153 = arith.mulf %148, %152 : vector<8x128xf32>
    %154 = arith.truncf %153 : vector<8x128xf32> to vector<8x128xbf16>
    %cst_51 = arith.constant dense<0.000000e+00> : vector<8x256xf32>
    %155 = tpu.matmul %154, %61, %cst_51 {dimension_numbers = #tpu.dot_dimension_numbers<[1], [0], [0], [1], [0, 0, 1, 1], [], []>} : vector<8x128xbf16>, vector<128x256xbf16>, vector<8x256xf32> -> vector<8x256xf32>
    %156 = arith.addf %155, %67 : vector<8x256xf32>
    %c8 = arith.constant 8 : index
    %c0_52 = arith.constant 0 : index
    %157 = vector.load %arg15[%c8, %c0_52] : memref<72x256xf32, #tpu.memory_space<vmem>>, vector<8x256xf32>
    tpu.vector_store %arg15[%c8, %c0_52], %156 {strides = array<i32>} : memref<72x256xf32, #tpu.memory_space<vmem>>, vector<8x256xf32>,
    %158 = vector.extract_strided_slice %59 {offsets = [8, 0], sizes = [8, 512], strides = [1, 1]} : vector<64x512xf32> to vector<8x512xf32>
    %159 = arith.addf %158, %135 : vector<8x512xf32>
    %160 = vector.extract_strided_slice %159 {offsets = [0, 0], sizes = [8, 384], strides = [1, 1]} : vector<8x512xf32> to vector<8x384xf32>
    %161 = arith.negf %160 : vector<8x384xf32>
    %162 = math.exp %161 : vector<8x384xf32>
    %cst_53 = arith.constant 1.000000e+00 : f32
    %163 = vector.broadcast %cst_53 : f32 to vector<8x384xf32>
    %164 = arith.addf %163, %162 : vector<8x384xf32>
    %165 = arith.divf %163, %164 : vector<8x384xf32>
    %166 = vector.extract_strided_slice %159 {offsets = [0, 384], sizes = [8, 128], strides = [1, 1]} : vector<8x512xf32> to vector<8x128xf32>
    %167 = math.tanh %166 : vector<8x128xf32>
    %168 = vector.extract_strided_slice %165 {offsets = [0, 0], sizes = [8, 128], strides = [1, 1]} : vector<8x384xf32> to vector<8x128xf32>
    %169 = vector.extract_strided_slice %165 {offsets = [0, 128], sizes = [8, 128], strides = [1, 1]} : vector<8x384xf32> to vector<8x128xf32>
    %170 = vector.extract_strided_slice %165 {offsets = [0, 256], sizes = [8, 128], strides = [1, 1]} : vector<8x384xf32> to vector<8x128xf32>
    %171 = arith.mulf %169, %129 : vector<8x128xf32>
    %172 = arith.mulf %168, %167 : vector<8x128xf32>
    %173 = arith.addf %171, %172 : vector<8x128xf32>
    %174 = math.tanh %173 : vector<8x128xf32>
    %175 = arith.mulf %170, %174 : vector<8x128xf32>
    %176 = arith.truncf %175 : vector<8x128xf32> to vector<8x128xbf16>
    %177 = tpu.concatenate %176, %154 in 1 : vector<8x128xbf16>, vector<8x128xbf16> -> vector<8x256xbf16>
    %cst_54 = arith.constant dense<0.000000e+00> : vector<8x1024xf32>
    %178 = tpu.matmul %177, %60, %cst_54 {dimension_numbers = #tpu.dot_dimension_numbers<[1], [0], [0], [1], [0, 0, 1, 1], [], []>} : vector<8x256xbf16>, vector<256x1024xbf16>, vector<8x1024xf32> -> vector<8x1024xf32>
    %179 = vector.extract_strided_slice %178 {offsets = [0, 0], sizes = [8, 512], strides = [1, 1]} : vector<8x1024xf32> to vector<8x512xf32>
    %180 = vector.extract_strided_slice %178 {offsets = [0, 512], sizes = [8, 512], strides = [1, 1]} : vector<8x1024xf32> to vector<8x512xf32>
    %181 = arith.addf %180, %64 : vector<8x512xf32>
    %182 = vector.extract_strided_slice %181 {offsets = [0, 0], sizes = [8, 384], strides = [1, 1]} : vector<8x512xf32> to vector<8x384xf32>
    %183 = arith.negf %182 : vector<8x384xf32>
    %184 = math.exp %183 : vector<8x384xf32>
    %cst_55 = arith.constant 1.000000e+00 : f32
    %185 = vector.broadcast %cst_55 : f32 to vector<8x384xf32>
    %186 = arith.addf %185, %184 : vector<8x384xf32>
    %187 = arith.divf %185, %186 : vector<8x384xf32>
    %188 = vector.extract_strided_slice %181 {offsets = [0, 384], sizes = [8, 128], strides = [1, 1]} : vector<8x512xf32> to vector<8x128xf32>
    %189 = math.tanh %188 : vector<8x128xf32>
    %190 = vector.extract_strided_slice %187 {offsets = [0, 0], sizes = [8, 128], strides = [1, 1]} : vector<8x384xf32> to vector<8x128xf32>
    %191 = vector.extract_strided_slice %187 {offsets = [0, 128], sizes = [8, 128], strides = [1, 1]} : vector<8x384xf32> to vector<8x128xf32>
    %192 = vector.extract_strided_slice %187 {offsets = [0, 256], sizes = [8, 128], strides = [1, 1]} : vector<8x384xf32> to vector<8x128xf32>
    %193 = arith.mulf %191, %151 : vector<8x128xf32>
    %194 = arith.mulf %190, %189 : vector<8x128xf32>
    %195 = arith.addf %193, %194 : vector<8x128xf32>
    %196 = math.tanh %195 : vector<8x128xf32>
    %197 = arith.mulf %192, %196 : vector<8x128xf32>
    %198 = arith.truncf %197 : vector<8x128xf32> to vector<8x128xbf16>
    %cst_56 = arith.constant dense<0.000000e+00> : vector<8x256xf32>
    %199 = tpu.matmul %198, %61, %cst_56 {dimension_numbers = #tpu.dot_dimension_numbers<[1], [0], [0], [1], [0, 0, 1, 1], [], []>} : vector<8x128xbf16>, vector<128x256xbf16>, vector<8x256xf32> -> vector<8x256xf32>
    %200 = arith.addf %199, %67 : vector<8x256xf32>
    %c16 = arith.constant 16 : index
    %c0_57 = arith.constant 0 : index
    %201 = vector.load %arg15[%c16, %c0_57] : memref<72x256xf32, #tpu.memory_space<vmem>>, vector<8x256xf32>
    tpu.vector_store %arg15[%c16, %c0_57], %200 {strides = array<i32>} : memref<72x256xf32, #tpu.memory_space<vmem>>, vector<8x256xf32>,
    %202 = vector.extract_strided_slice %59 {offsets = [16, 0], sizes = [8, 512], strides = [1, 1]} : vector<64x512xf32> to vector<8x512xf32>
    %203 = arith.addf %202, %179 : vector<8x512xf32>
    %204 = vector.extract_strided_slice %203 {offsets = [0, 0], sizes = [8, 384], strides = [1, 1]} : vector<8x512xf32> to vector<8x384xf32>
    %205 = arith.negf %204 : vector<8x384xf32>
    %206 = math.exp %205 : vector<8x384xf32>
    %cst_58 = arith.constant 1.000000e+00 : f32
    %207 = vector.broadcast %cst_58 : f32 to vector<8x384xf32>
    %208 = arith.addf %207, %206 : vector<8x384xf32>
    %209 = arith.divf %207, %208 : vector<8x384xf32>
    %210 = vector.extract_strided_slice %203 {offsets = [0, 384], sizes = [8, 128], strides = [1, 1]} : vector<8x512xf32> to vector<8x128xf32>
    %211 = math.tanh %210 : vector<8x128xf32>
    %212 = vector.extract_strided_slice %209 {offsets = [0, 0], sizes = [8, 128], strides = [1, 1]} : vector<8x384xf32> to vector<8x128xf32>
    %213 = vector.extract_strided_slice %209 {offsets = [0, 128], sizes = [8, 128], strides = [1, 1]} : vector<8x384xf32> to vector<8x128xf32>
    %214 = vector.extract_strided_slice %209 {offsets = [0, 256], sizes = [8, 128], strides = [1, 1]} : vector<8x384xf32> to vector<8x128xf32>
    %215 = arith.mulf %213, %173 : vector<8x128xf32>
    %216 = arith.mulf %212, %211 : vector<8x128xf32>
    %217 = arith.addf %215, %216 : vector<8x128xf32>
    %218 = math.tanh %217 : vector<8x128xf32>
    %219 = arith.mulf %214, %218 : vector<8x128xf32>
    %220 = arith.truncf %219 : vector<8x128xf32> to vector<8x128xbf16>
    %221 = tpu.concatenate %220, %198 in 1 : vector<8x128xbf16>, vector<8x128xbf16> -> vector<8x256xbf16>
    %cst_59 = arith.constant dense<0.000000e+00> : vector<8x1024xf32>
    %222 = tpu.matmul %221, %60, %cst_59 {dimension_numbers = #tpu.dot_dimension_numbers<[1], [0], [0], [1], [0, 0, 1, 1], [], []>} : vector<8x256xbf16>, vector<256x1024xbf16>, vector<8x1024xf32> -> vector<8x1024xf32>
    %223 = vector.extract_strided_slice %222 {offsets = [0, 0], sizes = [8, 512], strides = [1, 1]} : vector<8x1024xf32> to vector<8x512xf32>
    %224 = vector.extract_strided_slice %222 {offsets = [0, 512], sizes = [8, 512], strides = [1, 1]} : vector<8x1024xf32> to vector<8x512xf32>
    %225 = arith.addf %224, %64 : vector<8x512xf32>
    %226 = vector.extract_strided_slice %225 {offsets = [0, 0], sizes = [8, 384], strides = [1, 1]} : vector<8x512xf32> to vector<8x384xf32>
    %227 = arith.negf %226 : vector<8x384xf32>
    %228 = math.exp %227 : vector<8x384xf32>
    %cst_60 = arith.constant 1.000000e+00 : f32
    %229 = vector.broadcast %cst_60 : f32 to vector<8x384xf32>
    %230 = arith.addf %229, %228 : vector<8x384xf32>
    %231 = arith.divf %229, %230 : vector<8x384xf32>
    %232 = vector.extract_strided_slice %225 {offsets = [0, 384], sizes = [8, 128], strides = [1, 1]} : vector<8x512xf32> to vector<8x128xf32>
    %233 = math.tanh %232 : vector<8x128xf32>
    %234 = vector.extract_strided_slice %231 {offsets = [0, 0], sizes = [8, 128], strides = [1, 1]} : vector<8x384xf32> to vector<8x128xf32>
    %235 = vector.extract_strided_slice %231 {offsets = [0, 128], sizes = [8, 128], strides = [1, 1]} : vector<8x384xf32> to vector<8x128xf32>
    %236 = vector.extract_strided_slice %231 {offsets = [0, 256], sizes = [8, 128], strides = [1, 1]} : vector<8x384xf32> to vector<8x128xf32>
    %237 = arith.mulf %235, %195 : vector<8x128xf32>
    %238 = arith.mulf %234, %233 : vector<8x128xf32>
    %239 = arith.addf %237, %238 : vector<8x128xf32>
    %240 = math.tanh %239 : vector<8x128xf32>
    %241 = arith.mulf %236, %240 : vector<8x128xf32>
    %242 = arith.truncf %241 : vector<8x128xf32> to vector<8x128xbf16>
    %cst_61 = arith.constant dense<0.000000e+00> : vector<8x256xf32>
    %243 = tpu.matmul %242, %61, %cst_61 {dimension_numbers = #tpu.dot_dimension_numbers<[1], [0], [0], [1], [0, 0, 1, 1], [], []>} : vector<8x128xbf16>, vector<128x256xbf16>, vector<8x256xf32> -> vector<8x256xf32>
    %244 = arith.addf %243, %67 : vector<8x256xf32>
    %c24 = arith.constant 24 : index
    %c0_62 = arith.constant 0 : index
    %245 = vector.load %arg15[%c24, %c0_62] : memref<72x256xf32, #tpu.memory_space<vmem>>, vector<8x256xf32>
    tpu.vector_store %arg15[%c24, %c0_62], %244 {strides = array<i32>} : memref<72x256xf32, #tpu.memory_space<vmem>>, vector<8x256xf32>,
    %246 = vector.extract_strided_slice %59 {offsets = [24, 0], sizes = [8, 512], strides = [1, 1]} : vector<64x512xf32> to vector<8x512xf32>
    %247 = arith.addf %246, %223 : vector<8x512xf32>
    %248 = vector.extract_strided_slice %247 {offsets = [0, 0], sizes = [8, 384], strides = [1, 1]} : vector<8x512xf32> to vector<8x384xf32>
    %249 = arith.negf %248 : vector<8x384xf32>
    %250 = math.exp %249 : vector<8x384xf32>
    %cst_63 = arith.constant 1.000000e+00 : f32
    %251 = vector.broadcast %cst_63 : f32 to vector<8x384xf32>
    %252 = arith.addf %251, %250 : vector<8x384xf32>
    %253 = arith.divf %251, %252 : vector<8x384xf32>
    %254 = vector.extract_strided_slice %247 {offsets = [0, 384], sizes = [8, 128], strides = [1, 1]} : vector<8x512xf32> to vector<8x128xf32>
    %255 = math.tanh %254 : vector<8x128xf32>
    %256 = vector.extract_strided_slice %253 {offsets = [0, 0], sizes = [8, 128], strides = [1, 1]} : vector<8x384xf32> to vector<8x128xf32>
    %257 = vector.extract_strided_slice %253 {offsets = [0, 128], sizes = [8, 128], strides = [1, 1]} : vector<8x384xf32> to vector<8x128xf32>
    %258 = vector.extract_strided_slice %253 {offsets = [0, 256], sizes = [8, 128], strides = [1, 1]} : vector<8x384xf32> to vector<8x128xf32>
    %259 = arith.mulf %257, %217 : vector<8x128xf32>
    %260 = arith.mulf %256, %255 : vector<8x128xf32>
    %261 = arith.addf %259, %260 : vector<8x128xf32>
    %262 = math.tanh %261 : vector<8x128xf32>
    %263 = arith.mulf %258, %262 : vector<8x128xf32>
    %264 = arith.truncf %263 : vector<8x128xf32> to vector<8x128xbf16>
    %265 = tpu.concatenate %264, %242 in 1 : vector<8x128xbf16>, vector<8x128xbf16> -> vector<8x256xbf16>
    %cst_64 = arith.constant dense<0.000000e+00> : vector<8x1024xf32>
    %266 = tpu.matmul %265, %60, %cst_64 {dimension_numbers = #tpu.dot_dimension_numbers<[1], [0], [0], [1], [0, 0, 1, 1], [], []>} : vector<8x256xbf16>, vector<256x1024xbf16>, vector<8x1024xf32> -> vector<8x1024xf32>
    %267 = vector.extract_strided_slice %266 {offsets = [0, 0], sizes = [8, 512], strides = [1, 1]} : vector<8x1024xf32> to vector<8x512xf32>
    %268 = vector.extract_strided_slice %266 {offsets = [0, 512], sizes = [8, 512], strides = [1, 1]} : vector<8x1024xf32> to vector<8x512xf32>
    %269 = arith.addf %268, %64 : vector<8x512xf32>
    %270 = vector.extract_strided_slice %269 {offsets = [0, 0], sizes = [8, 384], strides = [1, 1]} : vector<8x512xf32> to vector<8x384xf32>
    %271 = arith.negf %270 : vector<8x384xf32>
    %272 = math.exp %271 : vector<8x384xf32>
    %cst_65 = arith.constant 1.000000e+00 : f32
    %273 = vector.broadcast %cst_65 : f32 to vector<8x384xf32>
    %274 = arith.addf %273, %272 : vector<8x384xf32>
    %275 = arith.divf %273, %274 : vector<8x384xf32>
    %276 = vector.extract_strided_slice %269 {offsets = [0, 384], sizes = [8, 128], strides = [1, 1]} : vector<8x512xf32> to vector<8x128xf32>
    %277 = math.tanh %276 : vector<8x128xf32>
    %278 = vector.extract_strided_slice %275 {offsets = [0, 0], sizes = [8, 128], strides = [1, 1]} : vector<8x384xf32> to vector<8x128xf32>
    %279 = vector.extract_strided_slice %275 {offsets = [0, 128], sizes = [8, 128], strides = [1, 1]} : vector<8x384xf32> to vector<8x128xf32>
    %280 = vector.extract_strided_slice %275 {offsets = [0, 256], sizes = [8, 128], strides = [1, 1]} : vector<8x384xf32> to vector<8x128xf32>
    %281 = arith.mulf %279, %239 : vector<8x128xf32>
    %282 = arith.mulf %278, %277 : vector<8x128xf32>
    %283 = arith.addf %281, %282 : vector<8x128xf32>
    %284 = math.tanh %283 : vector<8x128xf32>
    %285 = arith.mulf %280, %284 : vector<8x128xf32>
    %286 = arith.truncf %285 : vector<8x128xf32> to vector<8x128xbf16>
    %cst_66 = arith.constant dense<0.000000e+00> : vector<8x256xf32>
    %287 = tpu.matmul %286, %61, %cst_66 {dimension_numbers = #tpu.dot_dimension_numbers<[1], [0], [0], [1], [0, 0, 1, 1], [], []>} : vector<8x128xbf16>, vector<128x256xbf16>, vector<8x256xf32> -> vector<8x256xf32>
    %288 = arith.addf %287, %67 : vector<8x256xf32>
    %c32 = arith.constant 32 : index
    %c0_67 = arith.constant 0 : index
    %289 = vector.load %arg15[%c32, %c0_67] : memref<72x256xf32, #tpu.memory_space<vmem>>, vector<8x256xf32>
    tpu.vector_store %arg15[%c32, %c0_67], %288 {strides = array<i32>} : memref<72x256xf32, #tpu.memory_space<vmem>>, vector<8x256xf32>,
    %290 = vector.extract_strided_slice %59 {offsets = [32, 0], sizes = [8, 512], strides = [1, 1]} : vector<64x512xf32> to vector<8x512xf32>
    %291 = arith.addf %290, %267 : vector<8x512xf32>
    %292 = vector.extract_strided_slice %291 {offsets = [0, 0], sizes = [8, 384], strides = [1, 1]} : vector<8x512xf32> to vector<8x384xf32>
    %293 = arith.negf %292 : vector<8x384xf32>
    %294 = math.exp %293 : vector<8x384xf32>
    %cst_68 = arith.constant 1.000000e+00 : f32
    %295 = vector.broadcast %cst_68 : f32 to vector<8x384xf32>
    %296 = arith.addf %295, %294 : vector<8x384xf32>
    %297 = arith.divf %295, %296 : vector<8x384xf32>
    %298 = vector.extract_strided_slice %291 {offsets = [0, 384], sizes = [8, 128], strides = [1, 1]} : vector<8x512xf32> to vector<8x128xf32>
    %299 = math.tanh %298 : vector<8x128xf32>
    %300 = vector.extract_strided_slice %297 {offsets = [0, 0], sizes = [8, 128], strides = [1, 1]} : vector<8x384xf32> to vector<8x128xf32>
    %301 = vector.extract_strided_slice %297 {offsets = [0, 128], sizes = [8, 128], strides = [1, 1]} : vector<8x384xf32> to vector<8x128xf32>
    %302 = vector.extract_strided_slice %297 {offsets = [0, 256], sizes = [8, 128], strides = [1, 1]} : vector<8x384xf32> to vector<8x128xf32>
    %303 = arith.mulf %301, %261 : vector<8x128xf32>
    %304 = arith.mulf %300, %299 : vector<8x128xf32>
    %305 = arith.addf %303, %304 : vector<8x128xf32>
    %306 = math.tanh %305 : vector<8x128xf32>
    %307 = arith.mulf %302, %306 : vector<8x128xf32>
    %308 = arith.truncf %307 : vector<8x128xf32> to vector<8x128xbf16>
    %309 = tpu.concatenate %308, %286 in 1 : vector<8x128xbf16>, vector<8x128xbf16> -> vector<8x256xbf16>
    %cst_69 = arith.constant dense<0.000000e+00> : vector<8x1024xf32>
    %310 = tpu.matmul %309, %60, %cst_69 {dimension_numbers = #tpu.dot_dimension_numbers<[1], [0], [0], [1], [0, 0, 1, 1], [], []>} : vector<8x256xbf16>, vector<256x1024xbf16>, vector<8x1024xf32> -> vector<8x1024xf32>
    %311 = vector.extract_strided_slice %310 {offsets = [0, 0], sizes = [8, 512], strides = [1, 1]} : vector<8x1024xf32> to vector<8x512xf32>
    %312 = vector.extract_strided_slice %310 {offsets = [0, 512], sizes = [8, 512], strides = [1, 1]} : vector<8x1024xf32> to vector<8x512xf32>
    %313 = arith.addf %312, %64 : vector<8x512xf32>
    %314 = vector.extract_strided_slice %313 {offsets = [0, 0], sizes = [8, 384], strides = [1, 1]} : vector<8x512xf32> to vector<8x384xf32>
    %315 = arith.negf %314 : vector<8x384xf32>
    %316 = math.exp %315 : vector<8x384xf32>
    %cst_70 = arith.constant 1.000000e+00 : f32
    %317 = vector.broadcast %cst_70 : f32 to vector<8x384xf32>
    %318 = arith.addf %317, %316 : vector<8x384xf32>
    %319 = arith.divf %317, %318 : vector<8x384xf32>
    %320 = vector.extract_strided_slice %313 {offsets = [0, 384], sizes = [8, 128], strides = [1, 1]} : vector<8x512xf32> to vector<8x128xf32>
    %321 = math.tanh %320 : vector<8x128xf32>
    %322 = vector.extract_strided_slice %319 {offsets = [0, 0], sizes = [8, 128], strides = [1, 1]} : vector<8x384xf32> to vector<8x128xf32>
    %323 = vector.extract_strided_slice %319 {offsets = [0, 128], sizes = [8, 128], strides = [1, 1]} : vector<8x384xf32> to vector<8x128xf32>
    %324 = vector.extract_strided_slice %319 {offsets = [0, 256], sizes = [8, 128], strides = [1, 1]} : vector<8x384xf32> to vector<8x128xf32>
    %325 = arith.mulf %323, %283 : vector<8x128xf32>
    %326 = arith.mulf %322, %321 : vector<8x128xf32>
    %327 = arith.addf %325, %326 : vector<8x128xf32>
    %328 = math.tanh %327 : vector<8x128xf32>
    %329 = arith.mulf %324, %328 : vector<8x128xf32>
    %330 = arith.truncf %329 : vector<8x128xf32> to vector<8x128xbf16>
    %cst_71 = arith.constant dense<0.000000e+00> : vector<8x256xf32>
    %331 = tpu.matmul %330, %61, %cst_71 {dimension_numbers = #tpu.dot_dimension_numbers<[1], [0], [0], [1], [0, 0, 1, 1], [], []>} : vector<8x128xbf16>, vector<128x256xbf16>, vector<8x256xf32> -> vector<8x256xf32>
    %332 = arith.addf %331, %67 : vector<8x256xf32>
    %c40 = arith.constant 40 : index
    %c0_72 = arith.constant 0 : index
    %333 = vector.load %arg15[%c40, %c0_72] : memref<72x256xf32, #tpu.memory_space<vmem>>, vector<8x256xf32>
    tpu.vector_store %arg15[%c40, %c0_72], %332 {strides = array<i32>} : memref<72x256xf32, #tpu.memory_space<vmem>>, vector<8x256xf32>,
    %334 = vector.extract_strided_slice %59 {offsets = [40, 0], sizes = [8, 512], strides = [1, 1]} : vector<64x512xf32> to vector<8x512xf32>
    %335 = arith.addf %334, %311 : vector<8x512xf32>
    %336 = vector.extract_strided_slice %335 {offsets = [0, 0], sizes = [8, 384], strides = [1, 1]} : vector<8x512xf32> to vector<8x384xf32>
    %337 = arith.negf %336 : vector<8x384xf32>
    %338 = math.exp %337 : vector<8x384xf32>
    %cst_73 = arith.constant 1.000000e+00 : f32
    %339 = vector.broadcast %cst_73 : f32 to vector<8x384xf32>
    %340 = arith.addf %339, %338 : vector<8x384xf32>
    %341 = arith.divf %339, %340 : vector<8x384xf32>
    %342 = vector.extract_strided_slice %335 {offsets = [0, 384], sizes = [8, 128], strides = [1, 1]} : vector<8x512xf32> to vector<8x128xf32>
    %343 = math.tanh %342 : vector<8x128xf32>
    %344 = vector.extract_strided_slice %341 {offsets = [0, 0], sizes = [8, 128], strides = [1, 1]} : vector<8x384xf32> to vector<8x128xf32>
    %345 = vector.extract_strided_slice %341 {offsets = [0, 128], sizes = [8, 128], strides = [1, 1]} : vector<8x384xf32> to vector<8x128xf32>
    %346 = vector.extract_strided_slice %341 {offsets = [0, 256], sizes = [8, 128], strides = [1, 1]} : vector<8x384xf32> to vector<8x128xf32>
    %347 = arith.mulf %345, %305 : vector<8x128xf32>
    %348 = arith.mulf %344, %343 : vector<8x128xf32>
    %349 = arith.addf %347, %348 : vector<8x128xf32>
    %350 = math.tanh %349 : vector<8x128xf32>
    %351 = arith.mulf %346, %350 : vector<8x128xf32>
    %352 = arith.truncf %351 : vector<8x128xf32> to vector<8x128xbf16>
    %353 = tpu.concatenate %352, %330 in 1 : vector<8x128xbf16>, vector<8x128xbf16> -> vector<8x256xbf16>
    %cst_74 = arith.constant dense<0.000000e+00> : vector<8x1024xf32>
    %354 = tpu.matmul %353, %60, %cst_74 {dimension_numbers = #tpu.dot_dimension_numbers<[1], [0], [0], [1], [0, 0, 1, 1], [], []>} : vector<8x256xbf16>, vector<256x1024xbf16>, vector<8x1024xf32> -> vector<8x1024xf32>
    %355 = vector.extract_strided_slice %354 {offsets = [0, 0], sizes = [8, 512], strides = [1, 1]} : vector<8x1024xf32> to vector<8x512xf32>
    %356 = vector.extract_strided_slice %354 {offsets = [0, 512], sizes = [8, 512], strides = [1, 1]} : vector<8x1024xf32> to vector<8x512xf32>
    %357 = arith.addf %356, %64 : vector<8x512xf32>
    %358 = vector.extract_strided_slice %357 {offsets = [0, 0], sizes = [8, 384], strides = [1, 1]} : vector<8x512xf32> to vector<8x384xf32>
    %359 = arith.negf %358 : vector<8x384xf32>
    %360 = math.exp %359 : vector<8x384xf32>
    %cst_75 = arith.constant 1.000000e+00 : f32
    %361 = vector.broadcast %cst_75 : f32 to vector<8x384xf32>
    %362 = arith.addf %361, %360 : vector<8x384xf32>
    %363 = arith.divf %361, %362 : vector<8x384xf32>
    %364 = vector.extract_strided_slice %357 {offsets = [0, 384], sizes = [8, 128], strides = [1, 1]} : vector<8x512xf32> to vector<8x128xf32>
    %365 = math.tanh %364 : vector<8x128xf32>
    %366 = vector.extract_strided_slice %363 {offsets = [0, 0], sizes = [8, 128], strides = [1, 1]} : vector<8x384xf32> to vector<8x128xf32>
    %367 = vector.extract_strided_slice %363 {offsets = [0, 128], sizes = [8, 128], strides = [1, 1]} : vector<8x384xf32> to vector<8x128xf32>
    %368 = vector.extract_strided_slice %363 {offsets = [0, 256], sizes = [8, 128], strides = [1, 1]} : vector<8x384xf32> to vector<8x128xf32>
    %369 = arith.mulf %367, %327 : vector<8x128xf32>
    %370 = arith.mulf %366, %365 : vector<8x128xf32>
    %371 = arith.addf %369, %370 : vector<8x128xf32>
    %372 = math.tanh %371 : vector<8x128xf32>
    %373 = arith.mulf %368, %372 : vector<8x128xf32>
    %374 = arith.truncf %373 : vector<8x128xf32> to vector<8x128xbf16>
    %cst_76 = arith.constant dense<0.000000e+00> : vector<8x256xf32>
    %375 = tpu.matmul %374, %61, %cst_76 {dimension_numbers = #tpu.dot_dimension_numbers<[1], [0], [0], [1], [0, 0, 1, 1], [], []>} : vector<8x128xbf16>, vector<128x256xbf16>, vector<8x256xf32> -> vector<8x256xf32>
    %376 = arith.addf %375, %67 : vector<8x256xf32>
    %c48 = arith.constant 48 : index
    %c0_77 = arith.constant 0 : index
    %377 = vector.load %arg15[%c48, %c0_77] : memref<72x256xf32, #tpu.memory_space<vmem>>, vector<8x256xf32>
    tpu.vector_store %arg15[%c48, %c0_77], %376 {strides = array<i32>} : memref<72x256xf32, #tpu.memory_space<vmem>>, vector<8x256xf32>,
    %378 = vector.extract_strided_slice %59 {offsets = [48, 0], sizes = [8, 512], strides = [1, 1]} : vector<64x512xf32> to vector<8x512xf32>
    %379 = arith.addf %378, %355 : vector<8x512xf32>
    %380 = vector.extract_strided_slice %379 {offsets = [0, 0], sizes = [8, 384], strides = [1, 1]} : vector<8x512xf32> to vector<8x384xf32>
    %381 = arith.negf %380 : vector<8x384xf32>
    %382 = math.exp %381 : vector<8x384xf32>
    %cst_78 = arith.constant 1.000000e+00 : f32
    %383 = vector.broadcast %cst_78 : f32 to vector<8x384xf32>
    %384 = arith.addf %383, %382 : vector<8x384xf32>
    %385 = arith.divf %383, %384 : vector<8x384xf32>
    %386 = vector.extract_strided_slice %379 {offsets = [0, 384], sizes = [8, 128], strides = [1, 1]} : vector<8x512xf32> to vector<8x128xf32>
    %387 = math.tanh %386 : vector<8x128xf32>
    %388 = vector.extract_strided_slice %385 {offsets = [0, 0], sizes = [8, 128], strides = [1, 1]} : vector<8x384xf32> to vector<8x128xf32>
    %389 = vector.extract_strided_slice %385 {offsets = [0, 128], sizes = [8, 128], strides = [1, 1]} : vector<8x384xf32> to vector<8x128xf32>
    %390 = vector.extract_strided_slice %385 {offsets = [0, 256], sizes = [8, 128], strides = [1, 1]} : vector<8x384xf32> to vector<8x128xf32>
    %391 = arith.mulf %389, %349 : vector<8x128xf32>
    %392 = arith.mulf %388, %387 : vector<8x128xf32>
    %393 = arith.addf %391, %392 : vector<8x128xf32>
    %394 = math.tanh %393 : vector<8x128xf32>
    %395 = arith.mulf %390, %394 : vector<8x128xf32>
    %396 = arith.truncf %395 : vector<8x128xf32> to vector<8x128xbf16>
    %397 = tpu.concatenate %396, %374 in 1 : vector<8x128xbf16>, vector<8x128xbf16> -> vector<8x256xbf16>
    %cst_79 = arith.constant dense<0.000000e+00> : vector<8x1024xf32>
    %398 = tpu.matmul %397, %60, %cst_79 {dimension_numbers = #tpu.dot_dimension_numbers<[1], [0], [0], [1], [0, 0, 1, 1], [], []>} : vector<8x256xbf16>, vector<256x1024xbf16>, vector<8x1024xf32> -> vector<8x1024xf32>
    %399 = vector.extract_strided_slice %398 {offsets = [0, 0], sizes = [8, 512], strides = [1, 1]} : vector<8x1024xf32> to vector<8x512xf32>
    %400 = vector.extract_strided_slice %398 {offsets = [0, 512], sizes = [8, 512], strides = [1, 1]} : vector<8x1024xf32> to vector<8x512xf32>
    %401 = arith.addf %400, %64 : vector<8x512xf32>
    %402 = vector.extract_strided_slice %401 {offsets = [0, 0], sizes = [8, 384], strides = [1, 1]} : vector<8x512xf32> to vector<8x384xf32>
    %403 = arith.negf %402 : vector<8x384xf32>
    %404 = math.exp %403 : vector<8x384xf32>
    %cst_80 = arith.constant 1.000000e+00 : f32
    %405 = vector.broadcast %cst_80 : f32 to vector<8x384xf32>
    %406 = arith.addf %405, %404 : vector<8x384xf32>
    %407 = arith.divf %405, %406 : vector<8x384xf32>
    %408 = vector.extract_strided_slice %401 {offsets = [0, 384], sizes = [8, 128], strides = [1, 1]} : vector<8x512xf32> to vector<8x128xf32>
    %409 = math.tanh %408 : vector<8x128xf32>
    %410 = vector.extract_strided_slice %407 {offsets = [0, 0], sizes = [8, 128], strides = [1, 1]} : vector<8x384xf32> to vector<8x128xf32>
    %411 = vector.extract_strided_slice %407 {offsets = [0, 128], sizes = [8, 128], strides = [1, 1]} : vector<8x384xf32> to vector<8x128xf32>
    %412 = vector.extract_strided_slice %407 {offsets = [0, 256], sizes = [8, 128], strides = [1, 1]} : vector<8x384xf32> to vector<8x128xf32>
    %413 = arith.mulf %411, %371 : vector<8x128xf32>
    %414 = arith.mulf %410, %409 : vector<8x128xf32>
    %415 = arith.addf %413, %414 : vector<8x128xf32>
    %416 = math.tanh %415 : vector<8x128xf32>
    %417 = arith.mulf %412, %416 : vector<8x128xf32>
    %418 = arith.truncf %417 : vector<8x128xf32> to vector<8x128xbf16>
    %cst_81 = arith.constant dense<0.000000e+00> : vector<8x256xf32>
    %419 = tpu.matmul %418, %61, %cst_81 {dimension_numbers = #tpu.dot_dimension_numbers<[1], [0], [0], [1], [0, 0, 1, 1], [], []>} : vector<8x128xbf16>, vector<128x256xbf16>, vector<8x256xf32> -> vector<8x256xf32>
    %420 = arith.addf %419, %67 : vector<8x256xf32>
    %c56 = arith.constant 56 : index
    %c0_82 = arith.constant 0 : index
    %421 = vector.load %arg15[%c56, %c0_82] : memref<72x256xf32, #tpu.memory_space<vmem>>, vector<8x256xf32>
    tpu.vector_store %arg15[%c56, %c0_82], %420 {strides = array<i32>} : memref<72x256xf32, #tpu.memory_space<vmem>>, vector<8x256xf32>,
    %422 = vector.extract_strided_slice %59 {offsets = [56, 0], sizes = [8, 512], strides = [1, 1]} : vector<64x512xf32> to vector<8x512xf32>
    %423 = arith.addf %422, %399 : vector<8x512xf32>
    %424 = vector.extract_strided_slice %423 {offsets = [0, 0], sizes = [8, 384], strides = [1, 1]} : vector<8x512xf32> to vector<8x384xf32>
    %425 = arith.negf %424 : vector<8x384xf32>
    %426 = math.exp %425 : vector<8x384xf32>
    %cst_83 = arith.constant 1.000000e+00 : f32
    %427 = vector.broadcast %cst_83 : f32 to vector<8x384xf32>
    %428 = arith.addf %427, %426 : vector<8x384xf32>
    %429 = arith.divf %427, %428 : vector<8x384xf32>
    %430 = vector.extract_strided_slice %423 {offsets = [0, 384], sizes = [8, 128], strides = [1, 1]} : vector<8x512xf32> to vector<8x128xf32>
    %431 = math.tanh %430 : vector<8x128xf32>
    %432 = vector.extract_strided_slice %429 {offsets = [0, 0], sizes = [8, 128], strides = [1, 1]} : vector<8x384xf32> to vector<8x128xf32>
    %433 = vector.extract_strided_slice %429 {offsets = [0, 128], sizes = [8, 128], strides = [1, 1]} : vector<8x384xf32> to vector<8x128xf32>
    %434 = vector.extract_strided_slice %429 {offsets = [0, 256], sizes = [8, 128], strides = [1, 1]} : vector<8x384xf32> to vector<8x128xf32>
    %435 = arith.mulf %433, %393 : vector<8x128xf32>
    %436 = arith.mulf %432, %431 : vector<8x128xf32>
    %437 = arith.addf %435, %436 : vector<8x128xf32>
    %438 = math.tanh %437 : vector<8x128xf32>
    %439 = arith.mulf %434, %438 : vector<8x128xf32>
    %440 = arith.truncf %439 : vector<8x128xf32> to vector<8x128xbf16>
    %441 = tpu.concatenate %440, %418 in 1 : vector<8x128xbf16>, vector<8x128xbf16> -> vector<8x256xbf16>
    %cst_84 = arith.constant dense<0.000000e+00> : vector<8x1024xf32>
    %442 = tpu.matmul %441, %60, %cst_84 {dimension_numbers = #tpu.dot_dimension_numbers<[1], [0], [0], [1], [0, 0, 1, 1], [], []>} : vector<8x256xbf16>, vector<256x1024xbf16>, vector<8x1024xf32> -> vector<8x1024xf32>
    %443 = vector.extract_strided_slice %442 {offsets = [0, 512], sizes = [8, 512], strides = [1, 1]} : vector<8x1024xf32> to vector<8x512xf32>
    %444 = arith.addf %443, %64 : vector<8x512xf32>
    %445 = vector.extract_strided_slice %444 {offsets = [0, 0], sizes = [8, 384], strides = [1, 1]} : vector<8x512xf32> to vector<8x384xf32>
    %446 = arith.negf %445 : vector<8x384xf32>
    %447 = math.exp %446 : vector<8x384xf32>
    %cst_85 = arith.constant 1.000000e+00 : f32
    %448 = vector.broadcast %cst_85 : f32 to vector<8x384xf32>
    %449 = arith.addf %448, %447 : vector<8x384xf32>
    %450 = arith.divf %448, %449 : vector<8x384xf32>
    %451 = vector.extract_strided_slice %444 {offsets = [0, 384], sizes = [8, 128], strides = [1, 1]} : vector<8x512xf32> to vector<8x128xf32>
    %452 = math.tanh %451 : vector<8x128xf32>
    %453 = vector.extract_strided_slice %450 {offsets = [0, 0], sizes = [8, 128], strides = [1, 1]} : vector<8x384xf32> to vector<8x128xf32>
    %454 = vector.extract_strided_slice %450 {offsets = [0, 128], sizes = [8, 128], strides = [1, 1]} : vector<8x384xf32> to vector<8x128xf32>
    %455 = vector.extract_strided_slice %450 {offsets = [0, 256], sizes = [8, 128], strides = [1, 1]} : vector<8x384xf32> to vector<8x128xf32>
    %456 = arith.mulf %454, %415 : vector<8x128xf32>
    %457 = arith.mulf %453, %452 : vector<8x128xf32>
    %458 = arith.addf %456, %457 : vector<8x128xf32>
    %459 = math.tanh %458 : vector<8x128xf32>
    %460 = arith.mulf %455, %459 : vector<8x128xf32>
    %461 = arith.truncf %460 : vector<8x128xf32> to vector<8x128xbf16>
    %cst_86 = arith.constant dense<0.000000e+00> : vector<8x256xf32>
    %462 = tpu.matmul %461, %61, %cst_86 {dimension_numbers = #tpu.dot_dimension_numbers<[1], [0], [0], [1], [0, 0, 1, 1], [], []>} : vector<8x128xbf16>, vector<128x256xbf16>, vector<8x256xf32> -> vector<8x256xf32>
    %463 = arith.addf %462, %67 : vector<8x256xf32>
    %c64 = arith.constant 64 : index
    %c0_87 = arith.constant 0 : index
    %464 = vector.load %arg15[%c64, %c0_87] : memref<72x256xf32, #tpu.memory_space<vmem>>, vector<8x256xf32>
    tpu.vector_store %arg15[%c64, %c0_87], %463 {strides = array<i32>} : memref<72x256xf32, #tpu.memory_space<vmem>>, vector<8x256xf32>,
    return
  }
}

</mosaic_0001>

<llo_original>
// kernel: encoder_decoder_forward.1
$region0: #{encoder_decoder_forward.1}
  #allocation0 [shape = 'u32[]', space=smem, size = 0x4, offset = 0x4, fixed_abs, tag = 'smem constant byte address 0x4 - core index']
  #allocation1 [shape = 'u32[144,128]{1,0:T(1,128)}', space=vmem, size = 0x12000, scoped, tag = 'internal scratch']
  %s0 = inlined_call_operand.vmem [shape: bf16[512,32], index: 0, kind: input, shape index: {}]
  %s1 = inlined_call_operand.vmem [shape: bf16[32,128], index: 1, kind: input, shape index: {}]
  %s2 = inlined_call_operand.vmem [shape: f32[1,128], index: 2, kind: input, shape index: {}]
  %s3 = inlined_call_operand.vmem [shape: bf16[8,512], index: 3, kind: input, shape index: {}]
  %s4 = inlined_call_operand.vmem [shape: bf16[128,128], index: 4, kind: input, shape index: {}]
  %s5 = inlined_call_operand.vmem [shape: f32[1,128], index: 5, kind: input, shape index: {}]
  %s6 = inlined_call_operand.vmem [shape: f32[1,128], index: 6, kind: input, shape index: {}]
  %s7 = inlined_call_operand.vmem [shape: f32[1,128], index: 7, kind: input, shape index: {}]
  %s8 = inlined_call_operand.vmem [shape: bf16[64,128], index: 8, kind: input, shape index: {}]
  %s9 = inlined_call_operand.vmem [shape: bf16[128,512], index: 9, kind: input, shape index: {}]
  %s10 = inlined_call_operand.vmem [shape: f32[1,512], index: 10, kind: input, shape index: {}]
  %s11 = inlined_call_operand.vmem [shape: bf16[256,1024], index: 11, kind: input, shape index: {}]
  %s12 = inlined_call_operand.vmem [shape: f32[1,512], index: 12, kind: input, shape index: {}]
  %s13 = inlined_call_operand.vmem [shape: bf16[128,256], index: 13, kind: input, shape index: {}]
  %s14 = inlined_call_operand.vmem [shape: f32[1,256], index: 14, kind: input, shape index: {}]
  %s15 = inlined_call_operand.vmem [shape: f32[72,256], index: 15, kind: output, shape index: {}]
  %s16 = sld [smem:[#allocation0]]
  $region70: #{encoder_decoder_forward.1} parent=0
    _
  %s18 = ssub.s32 1, %s16
  %s19 = scalar_select 0, %s18, %s16
  // Predicated region
  $region2: #{encoder_decoder_forward.1} parent=0 // pred_check
    _
  $region3: #{encoder_decoder_forward.1} parent=0 // pred_check_branch
    %21 = sbr.rel (0) target = $region5
  $region4: #{encoder_decoder_forward.1} parent=0 // pred_region
    _
  $region5: #{encoder_decoder_forward.1} parent=0 // pred_fallthru
    _
  // Predicated region
  $region6: #{encoder_decoder_forward.1} parent=0 // pred_check
    _
  $region7: #{encoder_decoder_forward.1} parent=0 // pred_check_branch
    %23 = sbr.rel (0) target = $region9
  $region8: #{encoder_decoder_forward.1} parent=0 // pred_region
    _
  $region9: #{encoder_decoder_forward.1} parent=0 // pred_fallthru
    _
  // Predicated region
  $region10: #{encoder_decoder_forward.1} parent=0 // pred_check
    _
  $region11: #{encoder_decoder_forward.1} parent=0 // pred_check_branch
    %25 = sbr.rel (0) target = $region13
  $region12: #{encoder_decoder_forward.1} parent=0 // pred_region
    _
  $region13: #{encoder_decoder_forward.1} parent=0 // pred_fallthru
    _
  // Predicated region
  $region14: #{encoder_decoder_forward.1} parent=0 // pred_check
    _
  $region15: #{encoder_decoder_forward.1} parent=0 // pred_check_branch
    %27 = sbr.rel (0) target = $region17
  $region16: #{encoder_decoder_forward.1} parent=0 // pred_region
    _
  $region17: #{encoder_decoder_forward.1} parent=0 // pred_fallthru
    _
  // Predicated region
  $region18: #{encoder_decoder_forward.1} parent=0 // pred_check
    _
  $region19: #{encoder_decoder_forward.1} parent=0 // pred_check_branch
    %29 = sbr.rel (0) target = $region21
  $region20: #{encoder_decoder_forward.1} parent=0 // pred_region
    _
  $region21: #{encoder_decoder_forward.1} parent=0 // pred_fallthru
    _
  // Predicated region
  $region22: #{encoder_decoder_forward.1} parent=0 // pred_check
    _
  $region23: #{encoder_decoder_forward.1} parent=0 // pred_check_branch
    %31 = sbr.rel (0) target = $region25
  $region24: #{encoder_decoder_forward.1} parent=0 // pred_region
    _
  $region25: #{encoder_decoder_forward.1} parent=0 // pred_fallthru
    _
  // Predicated region
  $region26: #{encoder_decoder_forward.1} parent=0 // pred_check
    _
  $region27: #{encoder_decoder_forward.1} parent=0 // pred_check_branch
    %33 = sbr.rel (0) target = $region29
  $region28: #{encoder_decoder_forward.1} parent=0 // pred_region
    _
  $region29: #{encoder_decoder_forward.1} parent=0 // pred_fallthru
    _
  // Predicated region
  $region30: #{encoder_decoder_forward.1} parent=0 // pred_check
    _
  $region31: #{encoder_decoder_forward.1} parent=0 // pred_check_branch
    %35 = sbr.rel (0) target = $region33
  $region32: #{encoder_decoder_forward.1} parent=0 // pred_region
    _
  $region33: #{encoder_decoder_forward.1} parent=0 // pred_fallthru
    _
  // Predicated region
  $region34: #{encoder_decoder_forward.1} parent=0 // pred_check
    _
  $region35: #{encoder_decoder_forward.1} parent=0 // pred_check_branch
    %37 = sbr.rel (0) target = $region37
  $region36: #{encoder_decoder_forward.1} parent=0 // pred_region
    _
  $region37: #{encoder_decoder_forward.1} parent=0 // pred_fallthru
    _
  // Predicated region
  $region38: #{encoder_decoder_forward.1} parent=0 // pred_check
    _
  $region39: #{encoder_decoder_forward.1} parent=0 // pred_check_branch
    %39 = sbr.rel (0) target = $region41
  $region40: #{encoder_decoder_forward.1} parent=0 // pred_region
    _
  $region41: #{encoder_decoder_forward.1} parent=0 // pred_fallthru
    _
  // Predicated region
  $region42: #{encoder_decoder_forward.1} parent=0 // pred_check
    _
  $region43: #{encoder_decoder_forward.1} parent=0 // pred_check_branch
    %41 = sbr.rel (0) target = $region45
  $region44: #{encoder_decoder_forward.1} parent=0 // pred_region
    _
  $region45: #{encoder_decoder_forward.1} parent=0 // pred_fallthru
    _
  // Predicated region
  $region46: #{encoder_decoder_forward.1} parent=0 // pred_check
    _
  $region47: #{encoder_decoder_forward.1} parent=0 // pred_check_branch
    %43 = sbr.rel (0) target = $region49
  $region48: #{encoder_decoder_forward.1} parent=0 // pred_region
    _
  $region49: #{encoder_decoder_forward.1} parent=0 // pred_fallthru
    _
  // Predicated region
  $region50: #{encoder_decoder_forward.1} parent=0 // pred_check
    _
  $region51: #{encoder_decoder_forward.1} parent=0 // pred_check_branch
    %45 = sbr.rel (0) target = $region53
  $region52: #{encoder_decoder_forward.1} parent=0 // pred_region
    _
  $region53: #{encoder_decoder_forward.1} parent=0 // pred_fallthru
    _
  // Predicated region
  $region54: #{encoder_decoder_forward.1} parent=0 // pred_check
    _
  $region55: #{encoder_decoder_forward.1} parent=0 // pred_check_branch
    %47 = sbr.rel (0) target = $region57
  $region56: #{encoder_decoder_forward.1} parent=0 // pred_region
    _
  $region57: #{encoder_decoder_forward.1} parent=0 // pred_fallthru
    _
  // Predicated region
  $region58: #{encoder_decoder_forward.1} parent=0 // pred_check
    _
  $region59: #{encoder_decoder_forward.1} parent=0 // pred_check_branch
    %49 = sbr.rel (0) target = $region61
  $region60: #{encoder_decoder_forward.1} parent=0 // pred_region
    _
  $region61: #{encoder_decoder_forward.1} parent=0 // pred_fallthru
    _
  %v51 = vld [vmem:[%s0] sm:$0xf]
  %v52 = vld [vmem:[%s0 + $0x4] sm:$0xf]
  %v53 = vld [vmem:[%s0 + $0x8] sm:$0xf]
  %v54 = vld [vmem:[%s0 + $0xc] sm:$0xf]
  %v55 = vld [vmem:[%s0 + $0x10] sm:$0xf]
  %v56 = vld [vmem:[%s0 + $0x14] sm:$0xf]
  %v57 = vld [vmem:[%s0 + $0x18] sm:$0xf]
  %v58 = vld [vmem:[%s0 + $0x1c] sm:$0xf]
  %v59 = vld [vmem:[%s0 + $0x20] sm:$0xf]
  %v60 = vld [vmem:[%s0 + $0x24] sm:$0xf]
  %v61 = vld [vmem:[%s0 + $0x28] sm:$0xf]
  %v62 = vld [vmem:[%s0 + $0x2c] sm:$0xf]
  %v63 = vld [vmem:[%s0 + $0x30] sm:$0xf]
  %v64 = vld [vmem:[%s0 + $0x34] sm:$0xf]
  %v65 = vld [vmem:[%s0 + $0x38] sm:$0xf]
  %v66 = vld [vmem:[%s0 + $0x3c] sm:$0xf]
  %v67 = vld [vmem:[%s0 + $0x40] sm:$0xf]
  %v68 = vld [vmem:[%s0 + $0x44] sm:$0xf]
  %v69 = vld [vmem:[%s0 + $0x48] sm:$0xf]
  %v70 = vld [vmem:[%s0 + $0x4c] sm:$0xf]
  %v71 = vld [vmem:[%s0 + $0x50] sm:$0xf]
  %v72 = vld [vmem:[%s0 + $0x54] sm:$0xf]
  %v73 = vld [vmem:[%s0 + $0x58] sm:$0xf]
  %v74 = vld [vmem:[%s0 + $0x5c] sm:$0xf]
  %v75 = vld [vmem:[%s0 + $0x60] sm:$0xf]
  %v76 = vld [vmem:[%s0 + $0x64] sm:$0xf]
  %v77 = vld [vmem:[%s0 + $0x68] sm:$0xf]
  %v78 = vld [vmem:[%s0 + $0x6c] sm:$0xf]
  %v79 = vld [vmem:[%s0 + $0x70] sm:$0xf]
  %v80 = vld [vmem:[%s0 + $0x74] sm:$0xf]
  %v81 = vld [vmem:[%s0 + $0x78] sm:$0xf]
  %v82 = vld [vmem:[%s0 + $0x7c] sm:$0xf]
  %v83 = vld [vmem:[%s0 + $0x80] sm:$0xf]
  %v84 = vld [vmem:[%s0 + $0x84] sm:$0xf]
  %v85 = vld [vmem:[%s0 + $0x88] sm:$0xf]
  %v86 = vld [vmem:[%s0 + $0x8c] sm:$0xf]
  %v87 = vld [vmem:[%s0 + $0x90] sm:$0xf]
  %v88 = vld [vmem:[%s0 + $0x94] sm:$0xf]
  %v89 = vld [vmem:[%s0 + $0x98] sm:$0xf]
  %v90 = vld [vmem:[%s0 + $0x9c] sm:$0xf]
  %v91 = vld [vmem:[%s0 + $0xa0] sm:$0xf]
  %v92 = vld [vmem:[%s0 + $0xa4] sm:$0xf]
  %v93 = vld [vmem:[%s0 + $0xa8] sm:$0xf]
  %v94 = vld [vmem:[%s0 + $0xac] sm:$0xf]
  %v95 = vld [vmem:[%s0 + $0xb0] sm:$0xf]
  %v96 = vld [vmem:[%s0 + $0xb4] sm:$0xf]
  %v97 = vld [vmem:[%s0 + $0xb8] sm:$0xf]
  %v98 = vld [vmem:[%s0 + $0xbc] sm:$0xf]
  %v99 = vld [vmem:[%s0 + $0xc0] sm:$0xf]
  %v100 = vld [vmem:[%s0 + $0xc4] sm:$0xf]
  %v101 = vld [vmem:[%s0 + $0xc8] sm:$0xf]
  %v102 = vld [vmem:[%s0 + $0xcc] sm:$0xf]
  %v103 = vld [vmem:[%s0 + $0xd0] sm:$0xf]
  %v104 = vld [vmem:[%s0 + $0xd4] sm:$0xf]
  %v105 = vld [vmem:[%s0 + $0xd8] sm:$0xf]
  %v106 = vld [vmem:[%s0 + $0xdc] sm:$0xf]
  %v107 = vld [vmem:[%s0 + $0xe0] sm:$0xf]
  %v108 = vld [vmem:[%s0 + $0xe4] sm:$0xf]
  %v109 = vld [vmem:[%s0 + $0xe8] sm:$0xf]
  %v110 = vld [vmem:[%s0 + $0xec] sm:$0xf]
  %v111 = vld [vmem:[%s0 + $0xf0] sm:$0xf]
  %v112 = vld [vmem:[%s0 + $0xf4] sm:$0xf]
  %v113 = vld [vmem:[%s0 + $0xf8] sm:$0xf]
  %v114 = vld [vmem:[%s0 + $0xfc] sm:$0xf]
  %v115 = vld [vmem:[%s1] sm:$0xf]
  %v116 = vld [vmem:[%s1 + $0x4] sm:$0xf]
  %v117 = vld [vmem:[%s1 + $0x8] sm:$0xf]
  %v118 = vld [vmem:[%s1 + $0xc] sm:$0xf]
  %v119 = vld [vmem:[%s2] sm:$0x1]
  %v121 = vlaneseq
  %v122 = vshrl.u32 %v121, 7
  %v123 = vsub.s32 0, %v122
  %v124 = vrot.slane %v119, %v123
  %v190 = vunpack.c.l.b16 %v51
  %v191 = vunpack.c.l.b16 %v52
  %v192 = vunpack.c.l.b16 %v53
  %v193 = vunpack.c.l.b16 %v54
  %v194 = vunpack.c.l.b16 %v55
  %v195 = vunpack.c.l.b16 %v56
  %v196 = vunpack.c.l.b16 %v57
  %v197 = vunpack.c.l.b16 %v58
  %v198 = vunpack.c.l.b16 %v59
  %v199 = vunpack.c.l.b16 %v60
  %v200 = vunpack.c.l.b16 %v61
  %v201 = vunpack.c.l.b16 %v62
  %v202 = vunpack.c.l.b16 %v63
  %v203 = vunpack.c.l.b16 %v64
  %v204 = vunpack.c.l.b16 %v65
  %v205 = vunpack.c.l.b16 %v66
  %v206 = vunpack.c.l.b16 %v67
  %v207 = vunpack.c.l.b16 %v68
  %v208 = vunpack.c.l.b16 %v69
  %v209 = vunpack.c.l.b16 %v70
  %v210 = vunpack.c.l.b16 %v71
  %v211 = vunpack.c.l.b16 %v72
  %v212 = vunpack.c.l.b16 %v73
  %v213 = vunpack.c.l.b16 %v74
  %v214 = vunpack.c.l.b16 %v75
  %v215 = vunpack.c.l.b16 %v76
  %v216 = vunpack.c.l.b16 %v77
  %v217 = vunpack.c.l.b16 %v78
  %v218 = vunpack.c.l.b16 %v79
  %v219 = vunpack.c.l.b16 %v80
  %v220 = vunpack.c.l.b16 %v81
  %v221 = vunpack.c.l.b16 %v82
  %v222 = vunpack.c.l.b16 %v83
  %v223 = vunpack.c.l.b16 %v84
  %v224 = vunpack.c.l.b16 %v85
  %v225 = vunpack.c.l.b16 %v86
  %v226 = vunpack.c.l.b16 %v87
  %v227 = vunpack.c.l.b16 %v88
  %v228 = vunpack.c.l.b16 %v89
  %v229 = vunpack.c.l.b16 %v90
  %v230 = vunpack.c.l.b16 %v91
  %v231 = vunpack.c.l.b16 %v92
  %v232 = vunpack.c.l.b16 %v93
  %v233 = vunpack.c.l.b16 %v94
  %v234 = vunpack.c.l.b16 %v95
  %v235 = vunpack.c.l.b16 %v96
  %v236 = vunpack.c.l.b16 %v97
  %v237 = vunpack.c.l.b16 %v98
  %v238 = vunpack.c.l.b16 %v99
  %v239 = vunpack.c.l.b16 %v100
  %v240 = vunpack.c.l.b16 %v101
  %v241 = vunpack.c.l.b16 %v102
  %v242 = vunpack.c.l.b16 %v103
  %v243 = vunpack.c.l.b16 %v104
  %v244 = vunpack.c.l.b16 %v105
  %v245 = vunpack.c.l.b16 %v106
  %v246 = vunpack.c.l.b16 %v107
  %v247 = vunpack.c.l.b16 %v108
  %v248 = vunpack.c.l.b16 %v109
  %v249 = vunpack.c.l.b16 %v110
  %v250 = vunpack.c.l.b16 %v111
  %v251 = vunpack.c.l.b16 %v112
  %v252 = vunpack.c.l.b16 %v113
  %v253 = vunpack.c.l.b16 %v114
  %v254 = vpack.c.b16 %v191, %v190
  %v255 = vpack.c.b16 %v193, %v192
  %v256 = vpack.c.b16 %v195, %v194
  %v257 = vpack.c.b16 %v197, %v196
  %v258 = vpack.c.b16 %v199, %v198
  %v259 = vpack.c.b16 %v201, %v200
  %v260 = vpack.c.b16 %v203, %v202
  %v261 = vpack.c.b16 %v205, %v204
  %v262 = vpack.c.b16 %v207, %v206
  %v263 = vpack.c.b16 %v209, %v208
  %v264 = vpack.c.b16 %v211, %v210
  %v265 = vpack.c.b16 %v213, %v212
  %v266 = vpack.c.b16 %v215, %v214
  %v267 = vpack.c.b16 %v217, %v216
  %v268 = vpack.c.b16 %v219, %v218
  %v269 = vpack.c.b16 %v221, %v220
  %v270 = vpack.c.b16 %v223, %v222
  %v271 = vpack.c.b16 %v225, %v224
  %v272 = vpack.c.b16 %v227, %v226
  %v273 = vpack.c.b16 %v229, %v228
  %v274 = vpack.c.b16 %v231, %v230
  %v275 = vpack.c.b16 %v233, %v232
  %v276 = vpack.c.b16 %v235, %v234
  %v277 = vpack.c.b16 %v237, %v236
  %v278 = vpack.c.b16 %v239, %v238
  %v279 = vpack.c.b16 %v241, %v240
  %v280 = vpack.c.b16 %v243, %v242
  %v281 = vpack.c.b16 %v245, %v244
  %v282 = vpack.c.b16 %v247, %v246
  %v283 = vpack.c.b16 %v249, %v248
  %v284 = vpack.c.b16 %v251, %v250
  %v285 = vpack.c.b16 %v253, %v252
  %v290 = vunpack.c.l.b16 %v115
  %v291 = vunpack.c.l.b16 %v116
  %v292 = vunpack.c.l.b16 %v117
  %v293 = vunpack.c.l.b16 %v118
  %v294 = vpack.c.b16 %v291, %v290
  %v295 = vpack.c.b16 %v293, %v292
  %vm298 = vcmask 261120
  %v300 = vsel %vm298, %v254, 0
  %v303 = vsel %vm298, %v255, 0
  %v306 = vsel %vm298, %v256, 0
  %v309 = vsel %vm298, %v257, 0
  %v312 = vsel %vm298, %v258, 0
  %v315 = vsel %vm298, %v259, 0
  %v318 = vsel %vm298, %v260, 0
  %v321 = vsel %vm298, %v261, 0
  %v324 = vsel %vm298, %v262, 0
  %v327 = vsel %vm298, %v263, 0
  %v330 = vsel %vm298, %v264, 0
  %v333 = vsel %vm298, %v265, 0
  %v336 = vsel %vm298, %v266, 0
  %v339 = vsel %vm298, %v267, 0
  %v342 = vsel %vm298, %v268, 0
  %v345 = vsel %vm298, %v269, 0
  %v348 = vsel %vm298, %v270, 0
  %v351 = vsel %vm298, %v271, 0
  %v354 = vsel %vm298, %v272, 0
  %v357 = vsel %vm298, %v273, 0
  %v360 = vsel %vm298, %v274, 0
  %v363 = vsel %vm298, %v275, 0
  %v366 = vsel %vm298, %v276, 0
  %v369 = vsel %vm298, %v277, 0
  %v372 = vsel %vm298, %v278, 0
  %v375 = vsel %vm298, %v279, 0
  %v378 = vsel %vm298, %v280, 0
  %v381 = vsel %vm298, %v281, 0
  %v384 = vsel %vm298, %v282, 0
  %v387 = vsel %vm298, %v283, 0
  %v390 = vsel %vm298, %v284, 0
  %v393 = vsel %vm298, %v285, 0
  %395 = vmatprep.subr.bf16.mxu0 0
  %396 = vmatpush1.bf16.msra.mxu0 %v294
  %397 = vmatprep.subr.bf16.mxu0 0
  %398 = vmatpush1.bf16.msra.mxu0 %v295
  %399 = vmatprep.subr.bf16.mxu0 0
  %400 = vmatpush1.bf16.msra.mxu0 0
  %401 = vmatprep.subr.bf16.mxu0 0
  %402 = vmatpush1.bf16.msra.mxu0 0
  %403 = vmatprep.subr.bf16.mxu0 0
  %404 = vmatpush1.bf16.msra.mxu0 0
  %405 = vmatprep.subr.bf16.mxu0 0
  %406 = vmatpush1.bf16.msra.mxu0 0
  %407 = vmatprep.subr.bf16.mxu0 0
  %408 = vmatpush1.bf16.msra.mxu0 0
  %409 = vmatprep.subr.bf16.mxu0 0
  %410 = vmatpush1.bf16.msra.mxu0 0
  %411 = vmatprep.subr.bf16.mxu0 0
  %412 = vmatpush1.bf16.msra.mxu0 0
  %413 = vmatprep.subr.bf16.mxu0 0
  %414 = vmatpush1.bf16.msra.mxu0 0
  %415 = vmatprep.subr.bf16.mxu0 0
  %416 = vmatpush1.bf16.msra.mxu0 0
  %417 = vmatprep.subr.bf16.mxu0 0
  %418 = vmatpush1.bf16.msra.mxu0 0
  %419 = vmatprep.subr.bf16.mxu0 0
  %420 = vmatpush1.bf16.msra.mxu0 0
  %421 = vmatprep.subr.bf16.mxu0 0
  %422 = vmatpush1.bf16.msra.mxu0 0
  %423 = vmatprep.subr.bf16.mxu0 0
  %424 = vmatpush1.bf16.msra.mxu0 0
  %425 = vmatprep.subr.bf16.mxu0 0
  %426 = vmatpush1.bf16.msra.mxu0 0
  %427 = vmatprep.mubr.bf16.mxu0 0
  %428 = vmatmul.mubr.bf16.gmra.mrb[0].mxu0 %v300
  %v429 = vpop.f32.mrb[0].mxu0
  %v430 = vadd.f32 %v124, %v429
  %v431 = vpop.f32.mrb[0].mxu0
  %v432 = vpop.f32.mrb[0].mxu0
  %v433 = vadd.f32 %v124, %v432
  %v434 = vpop.f32.mrb[0].mxu0
  %435 = vmatprep.mubr.bf16.mxu0 0
  %436 = vmatmul.mubr.bf16.gmra.mrb[0].mxu0 %v303
  %v437 = vpop.f32.mrb[0].mxu0
  %v438 = vadd.f32 %v124, %v437
  %v439 = vpop.f32.mrb[0].mxu0
  %v440 = vpop.f32.mrb[0].mxu0
  %v441 = vadd.f32 %v124, %v440
  %v442 = vpop.f32.mrb[0].mxu0
  %443 = vmatprep.mubr.bf16.mxu0 0
  %444 = vmatmul.mubr.bf16.gmra.mrb[0].mxu0 %v306
  %v445 = vpop.f32.mrb[0].mxu0
  %v446 = vadd.f32 %v124, %v445
  %v447 = vpop.f32.mrb[0].mxu0
  %v448 = vpop.f32.mrb[0].mxu0
  %v449 = vadd.f32 %v124, %v448
  %v450 = vpop.f32.mrb[0].mxu0
  %451 = vmatprep.mubr.bf16.mxu0 0
  %452 = vmatmul.mubr.bf16.gmra.mrb[0].mxu0 %v309
  %v453 = vpop.f32.mrb[0].mxu0
  %v454 = vadd.f32 %v124, %v453
  %v455 = vpop.f32.mrb[0].mxu0
  %v456 = vpop.f32.mrb[0].mxu0
  %v457 = vadd.f32 %v124, %v456
  %v458 = vpop.f32.mrb[0].mxu0
  %459 = vmatprep.mubr.bf16.mxu0 0
  %460 = vmatmul.mubr.bf16.gmra.mrb[0].mxu0 %v312
  %v461 = vpop.f32.mrb[0].mxu0
  %v462 = vadd.f32 %v124, %v461
  %v463 = vpop.f32.mrb[0].mxu0
  %v464 = vpop.f32.mrb[0].mxu0
  %v465 = vadd.f32 %v124, %v464
  %v466 = vpop.f32.mrb[0].mxu0
  %467 = vmatprep.mubr.bf16.mxu0 0
  %468 = vmatmul.mubr.bf16.gmra.mrb[0].mxu0 %v315
  %v469 = vpop.f32.mrb[0].mxu0
  %v470 = vadd.f32 %v124, %v469
  %v471 = vpop.f32.mrb[0].mxu0
  %v472 = vpop.f32.mrb[0].mxu0
  %v473 = vadd.f32 %v124, %v472
  %v474 = vpop.f32.mrb[0].mxu0
  %475 = vmatprep.mubr.bf16.mxu0 0
  %476 = vmatmul.mubr.bf16.gmra.mrb[0].mxu0 %v318
  %v477 = vpop.f32.mrb[0].mxu0
  %v478 = vadd.f32 %v124, %v477
  %v479 = vpop.f32.mrb[0].mxu0
  %v480 = vpop.f32.mrb[0].mxu0
  %v481 = vadd.f32 %v124, %v480
  %v482 = vpop.f32.mrb[0].mxu0
  %483 = vmatprep.mubr.bf16.mxu0 0
  %484 = vmatmul.mubr.bf16.gmra.mrb[0].mxu0 %v321
  %v485 = vpop.f32.mrb[0].mxu0
  %v486 = vadd.f32 %v124, %v485
  %v487 = vpop.f32.mrb[0].mxu0
  %v488 = vpop.f32.mrb[0].mxu0
  %v489 = vadd.f32 %v124, %v488
  %v490 = vpop.f32.mrb[0].mxu0
  %491 = vmatprep.mubr.bf16.mxu0 0
  %492 = vmatmul.mubr.bf16.gmra.mrb[0].mxu0 %v324
  %v493 = vpop.f32.mrb[0].mxu0
  %v494 = vadd.f32 %v124, %v493
  %v495 = vpop.f32.mrb[0].mxu0
  %v496 = vpop.f32.mrb[0].mxu0
  %v497 = vadd.f32 %v124, %v496
  %v498 = vpop.f32.mrb[0].mxu0
  %499 = vmatprep.mubr.bf16.mxu0 0
  %500 = vmatmul.mubr.bf16.gmra.mrb[0].mxu0 %v327
  %v501 = vpop.f32.mrb[0].mxu0
  %v502 = vadd.f32 %v124, %v501
  %v503 = vpop.f32.mrb[0].mxu0
  %v504 = vpop.f32.mrb[0].mxu0
  %v505 = vadd.f32 %v124, %v504
  %v506 = vpop.f32.mrb[0].mxu0
  %507 = vmatprep.mubr.bf16.mxu0 0
  %508 = vmatmul.mubr.bf16.gmra.mrb[0].mxu0 %v330
  %v509 = vpop.f32.mrb[0].mxu0
  %v510 = vadd.f32 %v124, %v509
  %v511 = vpop.f32.mrb[0].mxu0
  %v512 = vpop.f32.mrb[0].mxu0
  %v513 = vadd.f32 %v124, %v512
  %v514 = vpop.f32.mrb[0].mxu0
  %515 = vmatprep.mubr.bf16.mxu0 0
  %516 = vmatmul.mubr.bf16.gmra.mrb[0].mxu0 %v333
  %v517 = vpop.f32.mrb[0].mxu0
  %v518 = vadd.f32 %v124, %v517
  %v519 = vpop.f32.mrb[0].mxu0
  %v520 = vpop.f32.mrb[0].mxu0
  %v521 = vadd.f32 %v124, %v520
  %v522 = vpop.f32.mrb[0].mxu0
  %523 = vmatprep.mubr.bf16.mxu0 0
  %524 = vmatmul.mubr.bf16.gmra.mrb[0].mxu0 %v336
  %v525 = vpop.f32.mrb[0].mxu0
  %v526 = vadd.f32 %v124, %v525
  %v527 = vpop.f32.mrb[0].mxu0
  %v528 = vpop.f32.mrb[0].mxu0
  %v529 = vadd.f32 %v124, %v528
  %v530 = vpop.f32.mrb[0].mxu0
  %531 = vmatprep.mubr.bf16.mxu0 0
  %532 = vmatmul.mubr.bf16.gmra.mrb[0].mxu0 %v339
  %v533 = vpop.f32.mrb[0].mxu0
  %v534 = vadd.f32 %v124, %v533
  %v535 = vpop.f32.mrb[0].mxu0
  %v536 = vpop.f32.mrb[0].mxu0
  %v537 = vadd.f32 %v124, %v536
  %v538 = vpop.f32.mrb[0].mxu0
  %539 = vmatprep.mubr.bf16.mxu0 0
  %540 = vmatmul.mubr.bf16.gmra.mrb[0].mxu0 %v342
  %v541 = vpop.f32.mrb[0].mxu0
  %v542 = vadd.f32 %v124, %v541
  %v543 = vpop.f32.mrb[0].mxu0
  %v544 = vpop.f32.mrb[0].mxu0
  %v545 = vadd.f32 %v124, %v544
  %v546 = vpop.f32.mrb[0].mxu0
  %547 = vmatprep.mubr.bf16.mxu0 0
  %548 = vmatmul.mubr.bf16.gmra.mrb[0].mxu0 %v345
  %v549 = vpop.f32.mrb[0].mxu0
  %v550 = vadd.f32 %v124, %v549
  %v551 = vpop.f32.mrb[0].mxu0
  %v552 = vpop.f32.mrb[0].mxu0
  %v553 = vadd.f32 %v124, %v552
  %v554 = vpop.f32.mrb[0].mxu0
  %555 = vmatprep.mubr.bf16.mxu0 0
  %556 = vmatmul.mubr.bf16.gmra.mrb[0].mxu0 %v348
  %v557 = vpop.f32.mrb[0].mxu0
  %v558 = vadd.f32 %v124, %v557
  %v559 = vpop.f32.mrb[0].mxu0
  %v560 = vpop.f32.mrb[0].mxu0
  %v561 = vadd.f32 %v124, %v560
  %v562 = vpop.f32.mrb[0].mxu0
  %563 = vmatprep.mubr.bf16.mxu0 0
  %564 = vmatmul.mubr.bf16.gmra.mrb[0].mxu0 %v351
  %v565 = vpop.f32.mrb[0].mxu0
  %v566 = vadd.f32 %v124, %v565
  %v567 = vpop.f32.mrb[0].mxu0
  %v568 = vpop.f32.mrb[0].mxu0
  %v569 = vadd.f32 %v124, %v568
  %v570 = vpop.f32.mrb[0].mxu0
  %571 = vmatprep.mubr.bf16.mxu0 0
  %572 = vmatmul.mubr.bf16.gmra.mrb[0].mxu0 %v354
  %v573 = vpop.f32.mrb[0].mxu0
  %v574 = vadd.f32 %v124, %v573
  %v575 = vpop.f32.mrb[0].mxu0
  %v576 = vpop.f32.mrb[0].mxu0
  %v577 = vadd.f32 %v124, %v576
  %v578 = vpop.f32.mrb[0].mxu0
  %579 = vmatprep.mubr.bf16.mxu0 0
  %580 = vmatmul.mubr.bf16.gmra.mrb[0].mxu0 %v357
  %v581 = vpop.f32.mrb[0].mxu0
  %v582 = vadd.f32 %v124, %v581
  %v583 = vpop.f32.mrb[0].mxu0
  %v584 = vpop.f32.mrb[0].mxu0
  %v585 = vadd.f32 %v124, %v584
  %v586 = vpop.f32.mrb[0].mxu0
  %587 = vmatprep.mubr.bf16.mxu0 0
  %588 = vmatmul.mubr.bf16.gmra.mrb[0].mxu0 %v360
  %v589 = vpop.f32.mrb[0].mxu0
  %v590 = vadd.f32 %v124, %v589
  %v591 = vpop.f32.mrb[0].mxu0
  %v592 = vpop.f32.mrb[0].mxu0
  %v593 = vadd.f32 %v124, %v592
  %v594 = vpop.f32.mrb[0].mxu0
  %595 = vmatprep.mubr.bf16.mxu0 0
  %596 = vmatmul.mubr.bf16.gmra.mrb[0].mxu0 %v363
  %v597 = vpop.f32.mrb[0].mxu0
  %v598 = vadd.f32 %v124, %v597
  %v599 = vpop.f32.mrb[0].mxu0
  %v600 = vpop.f32.mrb[0].mxu0
  %v601 = vadd.f32 %v124, %v600
  %v602 = vpop.f32.mrb[0].mxu0
  %603 = vmatprep.mubr.bf16.mxu0 0
  %604 = vmatmul.mubr.bf16.gmra.mrb[0].mxu0 %v366
  %v605 = vpop.f32.mrb[0].mxu0
  %v606 = vadd.f32 %v124, %v605
  %v607 = vpop.f32.mrb[0].mxu0
  %v608 = vpop.f32.mrb[0].mxu0
  %v609 = vadd.f32 %v124, %v608
  %v610 = vpop.f32.mrb[0].mxu0
  %611 = vmatprep.mubr.bf16.mxu0 0
  %612 = vmatmul.mubr.bf16.gmra.mrb[0].mxu0 %v369
  %v613 = vpop.f32.mrb[0].mxu0
  %v614 = vadd.f32 %v124, %v613
  %v615 = vpop.f32.mrb[0].mxu0
  %v616 = vpop.f32.mrb[0].mxu0
  %v617 = vadd.f32 %v124, %v616
  %v618 = vpop.f32.mrb[0].mxu0
  %619 = vmatprep.mubr.bf16.mxu0 0
  %620 = vmatmul.mubr.bf16.gmra.mrb[0].mxu0 %v372
  %v621 = vpop.f32.mrb[0].mxu0
  %v622 = vadd.f32 %v124, %v621
  %v623 = vpop.f32.mrb[0].mxu0
  %v624 = vpop.f32.mrb[0].mxu0
  %v625 = vadd.f32 %v124, %v624
  %v626 = vpop.f32.mrb[0].mxu0
  %627 = vmatprep.mubr.bf16.mxu0 0
  %628 = vmatmul.mubr.bf16.gmra.mrb[0].mxu0 %v375
  %v629 = vpop.f32.mrb[0].mxu0
  %v630 = vadd.f32 %v124, %v629
  %v631 = vpop.f32.mrb[0].mxu0
  %v632 = vpop.f32.mrb[0].mxu0
  %v633 = vadd.f32 %v124, %v632
  %v634 = vpop.f32.mrb[0].mxu0
  %635 = vmatprep.mubr.bf16.mxu0 0
  %636 = vmatmul.mubr.bf16.gmra.mrb[0].mxu0 %v378
  %v637 = vpop.f32.mrb[0].mxu0
  %v638 = vadd.f32 %v124, %v637
  %v639 = vpop.f32.mrb[0].mxu0
  %v640 = vpop.f32.mrb[0].mxu0
  %v641 = vadd.f32 %v124, %v640
  %v642 = vpop.f32.mrb[0].mxu0
  %643 = vmatprep.mubr.bf16.mxu0 0
  %644 = vmatmul.mubr.bf16.gmra.mrb[0].mxu0 %v381
  %v645 = vpop.f32.mrb[0].mxu0
  %v646 = vadd.f32 %v124, %v645
  %v647 = vpop.f32.mrb[0].mxu0
  %v648 = vpop.f32.mrb[0].mxu0
  %v649 = vadd.f32 %v124, %v648
  %v650 = vpop.f32.mrb[0].mxu0
  %651 = vmatprep.mubr.bf16.mxu0 0
  %652 = vmatmul.mubr.bf16.gmra.mrb[0].mxu0 %v384
  %v653 = vpop.f32.mrb[0].mxu0
  %v654 = vadd.f32 %v124, %v653
  %v655 = vpop.f32.mrb[0].mxu0
  %v656 = vpop.f32.mrb[0].mxu0
  %v657 = vadd.f32 %v124, %v656
  %v658 = vpop.f32.mrb[0].mxu0
  %659 = vmatprep.mubr.bf16.mxu0 0
  %660 = vmatmul.mubr.bf16.gmra.mrb[0].mxu0 %v387
  %v661 = vpop.f32.mrb[0].mxu0
  %v662 = vadd.f32 %v124, %v661
  %v663 = vpop.f32.mrb[0].mxu0
  %v664 = vpop.f32.mrb[0].mxu0
  %v665 = vadd.f32 %v124, %v664
  %v666 = vpop.f32.mrb[0].mxu0
  %667 = vmatprep.mubr.bf16.mxu0 0
  %668 = vmatmul.mubr.bf16.gmra.mrb[0].mxu0 %v390
  %v669 = vpop.f32.mrb[0].mxu0
  %v670 = vadd.f32 %v124, %v669
  %v671 = vpop.f32.mrb[0].mxu0
  %v672 = vpop.f32.mrb[0].mxu0
  %v673 = vadd.f32 %v124, %v672
  %v674 = vpop.f32.mrb[0].mxu0
  %675 = vmatprep.mubr.bf16.mxu0 0
  %676 = vmatmul.mubr.bf16.gmra.mrb[0].mxu0 %v393
  %v677 = vpop.f32.mrb[0].mxu0
  %v678 = vadd.f32 %v124, %v677
  %v679 = vpop.f32.mrb[0].mxu0
  %v680 = vpop.f32.mrb[0].mxu0
  %v681 = vadd.f32 %v124, %v680
  %v682 = vpop.f32.mrb[0].mxu0
  %683 = vdwg.mxu0
  %v684 = vmax.f32 %v430, 0.0
  %v685 = vmax.f32 %v433, 0.0
  %v686 = vmax.f32 %v438, 0.0
  %v687 = vmax.f32 %v441, 0.0
  %v688 = vmax.f32 %v446, 0.0
  %v689 = vmax.f32 %v449, 0.0
  %v690 = vmax.f32 %v454, 0.0
  %v691 = vmax.f32 %v457, 0.0
  %v692 = vmax.f32 %v462, 0.0
  %v693 = vmax.f32 %v465, 0.0
  %v694 = vmax.f32 %v470, 0.0
  %v695 = vmax.f32 %v473, 0.0
  %v696 = vmax.f32 %v478, 0.0
  %v697 = vmax.f32 %v481, 0.0
  %v698 = vmax.f32 %v486, 0.0
  %v699 = vmax.f32 %v489, 0.0
  %v700 = vmax.f32 %v494, 0.0
  %v701 = vmax.f32 %v497, 0.0
  %v702 = vmax.f32 %v502, 0.0
  %v703 = vmax.f32 %v505, 0.0
  %v704 = vmax.f32 %v510, 0.0
  %v705 = vmax.f32 %v513, 0.0
  %v706 = vmax.f32 %v518, 0.0
  %v707 = vmax.f32 %v521, 0.0
  %v708 = vmax.f32 %v526, 0.0
  %v709 = vmax.f32 %v529, 0.0
  %v710 = vmax.f32 %v534, 0.0
  %v711 = vmax.f32 %v537, 0.0
  %v712 = vmax.f32 %v542, 0.0
  %v713 = vmax.f32 %v545, 0.0
  %v714 = vmax.f32 %v550, 0.0
  %v715 = vmax.f32 %v553, 0.0
  %v716 = vmax.f32 %v558, 0.0
  %v717 = vmax.f32 %v561, 0.0
  %v718 = vmax.f32 %v566, 0.0
  %v719 = vmax.f32 %v569, 0.0
  %v720 = vmax.f32 %v574, 0.0
  %v721 = vmax.f32 %v577, 0.0
  %v722 = vmax.f32 %v582, 0.0
  %v723 = vmax.f32 %v585, 0.0
  %v724 = vmax.f32 %v590, 0.0
  %v725 = vmax.f32 %v593, 0.0
  %v726 = vmax.f32 %v598, 0.0
  %v727 = vmax.f32 %v601, 0.0
  %v728 = vmax.f32 %v606, 0.0
  %v729 = vmax.f32 %v609, 0.0
  %v730 = vmax.f32 %v614, 0.0
  %v731 = vmax.f32 %v617, 0.0
  %v732 = vmax.f32 %v622, 0.0
  %v733 = vmax.f32 %v625, 0.0
  %v734 = vmax.f32 %v630, 0.0
  %v735 = vmax.f32 %v633, 0.0
  %v736 = vmax.f32 %v638, 0.0
  %v737 = vmax.f32 %v641, 0.0
  %v738 = vmax.f32 %v646, 0.0
  %v739 = vmax.f32 %v649, 0.0
  %v740 = vmax.f32 %v654, 0.0
  %v741 = vmax.f32 %v657, 0.0
  %v742 = vmax.f32 %v662, 0.0
  %v743 = vmax.f32 %v665, 0.0
  %v744 = vmax.f32 %v670, 0.0
  %v745 = vmax.f32 %v673, 0.0
  %v746 = vmax.f32 %v678, 0.0
  %v747 = vmax.f32 %v681, 0.0
  %v748 = vld [vmem:[%s3] sm:$0xff]
  %v749 = vld [vmem:[%s3 + $0x8] sm:$0xff]
  %v750 = vpack.c.bf16 %v685, %v684
  %v751 = vpack.c.bf16 %v687, %v686
  %v752 = vpack.c.bf16 %v689, %v688
  %v753 = vpack.c.bf16 %v691, %v690
  %v754 = vpack.c.bf16 %v693, %v692
  %v755 = vpack.c.bf16 %v695, %v694
  %v756 = vpack.c.bf16 %v697, %v696
  %v757 = vpack.c.bf16 %v699, %v698
  %v758 = vpack.c.bf16 %v701, %v700
  %v759 = vpack.c.bf16 %v703, %v702
  %v760 = vpack.c.bf16 %v705, %v704
  %v761 = vpack.c.bf16 %v707, %v706
  %v762 = vpack.c.bf16 %v709, %v708
  %v763 = vpack.c.bf16 %v711, %v710
  %v764 = vpack.c.bf16 %v713, %v712
  %v765 = vpack.c.bf16 %v715, %v714
  %v766 = vpack.c.bf16 %v717, %v716
  %v767 = vpack.c.bf16 %v719, %v718
  %v768 = vpack.c.bf16 %v721, %v720
  %v769 = vpack.c.bf16 %v723, %v722
  %v770 = vpack.c.bf16 %v725, %v724
  %v771 = vpack.c.bf16 %v727, %v726
  %v772 = vpack.c.bf16 %v729, %v728
  %v773 = vpack.c.bf16 %v731, %v730
  %v774 = vpack.c.bf16 %v733, %v732
  %v775 = vpack.c.bf16 %v735, %v734
  %v776 = vpack.c.bf16 %v737, %v736
  %v777 = vpack.c.bf16 %v739, %v738
  %v778 = vpack.c.bf16 %v741, %v740
  %v779 = vpack.c.bf16 %v743, %v742
  %v780 = vpack.c.bf16 %v745, %v744
  %v781 = vpack.c.bf16 %v747, %v746
  %v784 = vunpack.c.l.b16 %v748
  %v785 = vunpack.c.h.b16 %v748
  %v786 = vunpack.c.l.b16 %v749
  %v787 = vunpack.c.h.b16 %v749
  %v788 = vpack.c.b16 %v784, %v784
  %v789 = vpack.c.b16 %v785, %v785
  %v790 = vpack.c.b16 %v786, %v786
  %v791 = vpack.c.b16 %v787, %v787
  %796 = vmatprep.subr.bf16.mxu0 0
  %797 = vmatpush1.bf16.msra.mxu0 %v750
  %798 = vmatprep.subr.bf16.mxu0 0
  %799 = vmatpush1.bf16.msra.mxu0 %v751
  %800 = vmatprep.subr.bf16.mxu0 0
  %801 = vmatpush1.bf16.msra.mxu0 %v752
  %802 = vmatprep.subr.bf16.mxu0 0
  %803 = vmatpush1.bf16.msra.mxu0 %v753
  %804 = vmatprep.subr.bf16.mxu0 0
  %805 = vmatpush1.bf16.msra.mxu0 %v754
  %806 = vmatprep.subr.bf16.mxu0 0
  %807 = vmatpush1.bf16.msra.mxu0 %v755
  %808 = vmatprep.subr.bf16.mxu0 0
  %809 = vmatpush1.bf16.msra.mxu0 %v756
  %810 = vmatprep.subr.bf16.mxu0 0
  %811 = vmatpush1.bf16.msra.mxu0 %v757
  %812 = vmatprep.subr.bf16.mxu0 0
  %813 = vmatpush1.bf16.msra.mxu0 %v758
  %814 = vmatprep.subr.bf16.mxu0 0
  %815 = vmatpush1.bf16.msra.mxu0 %v759
  %816 = vmatprep.subr.bf16.mxu0 0
  %817 = vmatpush1.bf16.msra.mxu0 %v760
  %818 = vmatprep.subr.bf16.mxu0 0
  %819 = vmatpush1.bf16.msra.mxu0 %v761
  %820 = vmatprep.subr.bf16.mxu0 0
  %821 = vmatpush1.bf16.msra.mxu0 %v762
  %822 = vmatprep.subr.bf16.mxu0 0
  %823 = vmatpush1.bf16.msra.mxu0 %v763
  %824 = vmatprep.subr.bf16.mxu0 0
  %825 = vmatpush1.bf16.msra.mxu0 %v764
  %826 = vmatprep.subr.bf16.mxu0 0
  %827 = vmatpush1.bf16.msra.mxu0 %v765
  %828 = vmatprep.mubr.bf16.mxu0 %v789
  %829 = vmatmul.mubr.bf16.gmra.mrb[0].mxu0 %v788
  %v830 = vpop.f32.mrb[0].mxu0
  %v831 = vadd.f32 0.0, %v830
  %v832 = vpop.f32.mrb[0].mxu0
  %v833 = vpop.f32.mrb[0].mxu0
  %v834 = vpop.f32.mrb[0].mxu0
  %835 = vdwg.mxu0
  %836 = vmatprep.subr.bf16.mxu0 0
  %837 = vmatpush1.bf16.msra.mxu0 %v766
  %838 = vmatprep.subr.bf16.mxu0 0
  %839 = vmatpush1.bf16.msra.mxu0 %v767
  %840 = vmatprep.subr.bf16.mxu0 0
  %841 = vmatpush1.bf16.msra.mxu0 %v768
  %842 = vmatprep.subr.bf16.mxu0 0
  %843 = vmatpush1.bf16.msra.mxu0 %v769
  %844 = vmatprep.subr.bf16.mxu0 0
  %845 = vmatpush1.bf16.msra.mxu0 %v770
  %846 = vmatprep.subr.bf16.mxu0 0
  %847 = vmatpush1.bf16.msra.mxu0 %v771
  %848 = vmatprep.subr.bf16.mxu0 0
  %849 = vmatpush1.bf16.msra.mxu0 %v772
  %850 = vmatprep.subr.bf16.mxu0 0
  %851 = vmatpush1.bf16.msra.mxu0 %v773
  %852 = vmatprep.subr.bf16.mxu0 0
  %853 = vmatpush1.bf16.msra.mxu0 %v774
  %854 = vmatprep.subr.bf16.mxu0 0
  %855 = vmatpush1.bf16.msra.mxu0 %v775
  %856 = vmatprep.subr.bf16.mxu0 0
  %857 = vmatpush1.bf16.msra.mxu0 %v776
  %858 = vmatprep.subr.bf16.mxu0 0
  %859 = vmatpush1.bf16.msra.mxu0 %v777
  %860 = vmatprep.subr.bf16.mxu0 0
  %861 = vmatpush1.bf16.msra.mxu0 %v778
  %862 = vmatprep.subr.bf16.mxu0 0
  %863 = vmatpush1.bf16.msra.mxu0 %v779
  %864 = vmatprep.subr.bf16.mxu0 0
  %865 = vmatpush1.bf16.msra.mxu0 %v780
  %866 = vmatprep.subr.bf16.mxu0 0
  %867 = vmatpush1.bf16.msra.mxu0 %v781
  %868 = vmatprep.mubr.bf16.mxu0 %v791
  %869 = vmatmul.mubr.bf16.gmra.mrb[0].mxu0 %v790
  %v870 = vpop.f32.mrb[0].mxu0
  %v871 = vadd.f32 %v831, %v870
  %v872 = vpop.f32.mrb[0].mxu0
  %v873 = vpop.f32.mrb[0].mxu0
  %v874 = vpop.f32.mrb[0].mxu0
  %875 = vdwg.mxu0
  %v876 = vpack.c.bf16 %v871, %v871
  %v877 = vld [vmem:[%s4] sm:$0xf]
  %v878 = vld [vmem:[%s4 + $0x4] sm:$0xf]
  %v879 = vld [vmem:[%s4 + $0x8] sm:$0xf]
  %v880 = vld [vmem:[%s4 + $0xc] sm:$0xf]
  %v881 = vld [vmem:[%s4 + $0x10] sm:$0xf]
  %v882 = vld [vmem:[%s4 + $0x14] sm:$0xf]
  %v883 = vld [vmem:[%s4 + $0x18] sm:$0xf]
  %v884 = vld [vmem:[%s4 + $0x1c] sm:$0xf]
  %v885 = vld [vmem:[%s4 + $0x20] sm:$0xf]
  %v886 = vld [vmem:[%s4 + $0x24] sm:$0xf]
  %v887 = vld [vmem:[%s4 + $0x28] sm:$0xf]
  %v888 = vld [vmem:[%s4 + $0x2c] sm:$0xf]
  %v889 = vld [vmem:[%s4 + $0x30] sm:$0xf]
  %v890 = vld [vmem:[%s4 + $0x34] sm:$0xf]
  %v891 = vld [vmem:[%s4 + $0x38] sm:$0xf]
  %v892 = vld [vmem:[%s4 + $0x3c] sm:$0xf]
  %v893 = vld [vmem:[%s5] sm:$0x1]
  %v895 = vlaneseq
  %v896 = vshrl.u32 %v895, 7
  %v897 = vsub.s32 0, %v896
  %v898 = vrot.slane %v893, %v897
  %v916 = vunpack.c.l.b16 %v877
  %v917 = vunpack.c.l.b16 %v878
  %v918 = vunpack.c.l.b16 %v879
  %v919 = vunpack.c.l.b16 %v880
  %v920 = vunpack.c.l.b16 %v881
  %v921 = vunpack.c.l.b16 %v882
  %v922 = vunpack.c.l.b16 %v883
  %v923 = vunpack.c.l.b16 %v884
  %v924 = vunpack.c.l.b16 %v885
  %v925 = vunpack.c.l.b16 %v886
  %v926 = vunpack.c.l.b16 %v887
  %v927 = vunpack.c.l.b16 %v888
  %v928 = vunpack.c.l.b16 %v889
  %v929 = vunpack.c.l.b16 %v890
  %v930 = vunpack.c.l.b16 %v891
  %v931 = vunpack.c.l.b16 %v892
  %v932 = vpack.c.b16 %v917, %v916
  %v933 = vpack.c.b16 %v919, %v918
  %v934 = vpack.c.b16 %v921, %v920
  %v935 = vpack.c.b16 %v923, %v922
  %v936 = vpack.c.b16 %v925, %v924
  %v937 = vpack.c.b16 %v927, %v926
  %v938 = vpack.c.b16 %v929, %v928
  %v939 = vpack.c.b16 %v931, %v930
  %948 = vmatprep.subr.bf16.mxu0 0
  %949 = vmatpush1.bf16.msra.mxu0 %v932
  %950 = vmatprep.subr.bf16.mxu0 0
  %951 = vmatpush1.bf16.msra.mxu0 %v933
  %952 = vmatprep.subr.bf16.mxu0 0
  %953 = vmatpush1.bf16.msra.mxu0 %v934
  %954 = vmatprep.subr.bf16.mxu0 0
  %955 = vmatpush1.bf16.msra.mxu0 %v935
  %956 = vmatprep.subr.bf16.mxu0 0
  %957 = vmatpush1.bf16.msra.mxu0 %v936
  %958 = vmatprep.subr.bf16.mxu0 0
  %959 = vmatpush1.bf16.msra.mxu0 %v937
  %960 = vmatprep.subr.bf16.mxu0 0
  %961 = vmatpush1.bf16.msra.mxu0 %v938
  %962 = vmatprep.subr.bf16.mxu0 0
  %963 = vmatpush1.bf16.msra.mxu0 %v939
  %964 = vmatprep.subr.bf16.mxu0 0
  %965 = vmatpush1.bf16.msra.mxu0 0
  %966 = vmatprep.subr.bf16.mxu0 0
  %967 = vmatpush1.bf16.msra.mxu0 0
  %968 = vmatprep.subr.bf16.mxu0 0
  %969 = vmatpush1.bf16.msra.mxu0 0
  %970 = vmatprep.subr.bf16.mxu0 0
  %971 = vmatpush1.bf16.msra.mxu0 0
  %972 = vmatprep.subr.bf16.mxu0 0
  %973 = vmatpush1.bf16.msra.mxu0 0
  %974 = vmatprep.subr.bf16.mxu0 0
  %975 = vmatpush1.bf16.msra.mxu0 0
  %976 = vmatprep.subr.bf16.mxu0 0
  %977 = vmatpush1.bf16.msra.mxu0 0
  %978 = vmatprep.subr.bf16.mxu0 0
  %979 = vmatpush1.bf16.msra.mxu0 0
  %980 = vmatprep.mubr.bf16.mxu0 0
  %981 = vmatmul.mubr.bf16.gmra.mrb[0].mxu0 %v876
  %v982 = vpop.f32.mrb[0].mxu0
  %v983 = vadd.f32 %v898, %v982
  %v984 = vpop.f32.mrb[0].mxu0
  %v985 = vpop.f32.mrb[0].mxu0
  %v986 = vpop.f32.mrb[0].mxu0
  %987 = vdwg.mxu0
  %v988 = vlaneseq
  %v989 = vshrl.u32 %v988, 7
  %vm990 = vcmp.lt.s32.totalorder %v989, 2
  %v991 = vsel %vm990, 1, 0
  %v992 = vcvt.s32.f32 %v991
  %v993 = vmul.f32 %v983, %v992
  %v994 = vrot.slane %v993, 4
  %v995 = vadd.f32 %v993, %v994
  %v996 = vrot.slane %v995, 2
  %v997 = vadd.f32 %v995, %v996
  %v998 = vrot.slane %v997, 1
  %v999 = vadd.f32 %v997, %v998
  %v1000 = vrcp.pop 2.0
  %v1001 = vmul.f32 %v999, %v1000
  %v1002 = vsub.f32 %v983, %v1001
  %v1003 = vmul.f32 %v1002, %v1002
  %v1004 = vmul.f32 %v1003, %v992
  %v1005 = vrot.slane %v1004, 4
  %v1006 = vadd.f32 %v1004, %v1005
  %v1007 = vrot.slane %v1006, 2
  %v1008 = vadd.f32 %v1006, %v1007
  %v1009 = vrot.slane %v1008, 1
  %v1010 = vadd.f32 %v1008, %v1009
  %v1011 = vmul.f32 %v1010, %v1000
  %v1012 = vadd.f32 %v1011, 1e-05
  %v1013 = vrsqrt.pop %v1012
  %v1014 = vmul.f32 %v1002, %v1013
  %v1015 = vld [vmem:[%s6] sm:$0x1]
  %v1017 = vlaneseq
  %v1018 = vshrl.u32 %v1017, 7
  %v1019 = vsub.s32 0, %v1018
  %v1020 = vrot.slane %v1015, %v1019
  %v1022 = vmul.f32 %v1014, %v1020
  %v1023 = vld [vmem:[%s7] sm:$0x1]
  %v1025 = vlaneseq
  %v1026 = vshrl.u32 %v1025, 7
  %v1027 = vsub.s32 0, %v1026
  %v1028 = vrot.slane %v1023, %v1027
  %v1030 = vadd.f32 %v1022, %v1028
  %v1031 = vld [vmem:[%s9] sm:$0xff]
  %v1032 = vld [vmem:[%s9 + $0x8] sm:$0xff]
  %v1033 = vld [vmem:[%s9 + $0x10] sm:$0xff]
  %v1034 = vld [vmem:[%s9 + $0x18] sm:$0xff]
  %v1035 = vld [vmem:[%s9 + $0x20] sm:$0xff]
  %v1036 = vld [vmem:[%s9 + $0x28] sm:$0xff]
  %v1037 = vld [vmem:[%s9 + $0x30] sm:$0xff]
  %v1038 = vld [vmem:[%s9 + $0x38] sm:$0xff]
  %v1039 = vld [vmem:[%s9 + $0x40] sm:$0xff]
  %v1040 = vld [vmem:[%s9 + $0x48] sm:$0xff]
  %v1041 = vld [vmem:[%s9 + $0x50] sm:$0xff]
  %v1042 = vld [vmem:[%s9 + $0x58] sm:$0xff]
  %v1043 = vld [vmem:[%s9 + $0x60] sm:$0xff]
  %v1044 = vld [vmem:[%s9 + $0x68] sm:$0xff]
  %v1045 = vld [vmem:[%s9 + $0x70] sm:$0xff]
  %v1046 = vld [vmem:[%s9 + $0x78] sm:$0xff]
  %v1047 = vld [vmem:[%s9 + $0x80] sm:$0xff]
  %v1048 = vld [vmem:[%s9 + $0x88] sm:$0xff]
  %v1049 = vld [vmem:[%s9 + $0x90] sm:$0xff]
  %v1050 = vld [vmem:[%s9 + $0x98] sm:$0xff]
  %v1051 = vld [vmem:[%s9 + $0xa0] sm:$0xff]
  %v1052 = vld [vmem:[%s9 + $0xa8] sm:$0xff]
  %v1053 = vld [vmem:[%s9 + $0xb0] sm:$0xff]
  %v1054 = vld [vmem:[%s9 + $0xb8] sm:$0xff]
  %v1055 = vld [vmem:[%s9 + $0xc0] sm:$0xff]
  %v1056 = vld [vmem:[%s9 + $0xc8] sm:$0xff]
  %v1057 = vld [vmem:[%s9 + $0xd0] sm:$0xff]
  %v1058 = vld [vmem:[%s9 + $0xd8] sm:$0xff]
  %v1059 = vld [vmem:[%s9 + $0xe0] sm:$0xff]
  %v1060 = vld [vmem:[%s9 + $0xe8] sm:$0xff]
  %v1061 = vld [vmem:[%s9 + $0xf0] sm:$0xff]
  %v1062 = vld [vmem:[%s9 + $0xf8] sm:$0xff]
  %v1063 = vld [vmem:[%s10] sm:$0xf]
  %v1064 = vpack.c.bf16 %v1030, %v1030
  %v1066 = vlaneseq
  %v1067 = vshrl.u32 %v1066, 7
  %v1068 = vsub.s32 0, %v1067
  %v1069 = vrot.slane %v1063, %v1068
  %v1070 = vlaneseq
  %v1071 = vshrl.u32 %v1070, 7
  %v1072 = vsub.s32 1, %v1071
  %v1073 = vrot.slane %v1063, %v1072
  %v1074 = vlaneseq
  %v1075 = vshrl.u32 %v1074, 7
  %v1076 = vsub.s32 2, %v1075
  %v1077 = vrot.slane %v1063, %v1076
  %v1078 = vlaneseq
  %v1079 = vshrl.u32 %v1078, 7
  %v1080 = vsub.s32 3, %v1079
  %v1081 = vrot.slane %v1063, %v1080
  %v1118 = vunpack.c.l.b16 %v1031
  %v1119 = vunpack.c.h.b16 %v1031
  %v1120 = vunpack.c.l.b16 %v1032
  %v1121 = vunpack.c.h.b16 %v1032
  %v1122 = vunpack.c.l.b16 %v1033
  %v1123 = vunpack.c.h.b16 %v1033
  %v1124 = vunpack.c.l.b16 %v1034
  %v1125 = vunpack.c.h.b16 %v1034
  %v1126 = vunpack.c.l.b16 %v1035
  %v1127 = vunpack.c.h.b16 %v1035
  %v1128 = vunpack.c.l.b16 %v1036
  %v1129 = vunpack.c.h.b16 %v1036
  %v1130 = vunpack.c.l.b16 %v1037
  %v1131 = vunpack.c.h.b16 %v1037
  %v1132 = vunpack.c.l.b16 %v1038
  %v1133 = vunpack.c.h.b16 %v1038
  %v1134 = vunpack.c.l.b16 %v1039
  %v1135 = vunpack.c.h.b16 %v1039
  %v1136 = vunpack.c.l.b16 %v1040
  %v1137 = vunpack.c.h.b16 %v1040
  %v1138 = vunpack.c.l.b16 %v1041
  %v1139 = vunpack.c.h.b16 %v1041
  %v1140 = vunpack.c.l.b16 %v1042
  %v1141 = vunpack.c.h.b16 %v1042
  %v1142 = vunpack.c.l.b16 %v1043
  %v1143 = vunpack.c.h.b16 %v1043
  %v1144 = vunpack.c.l.b16 %v1044
  %v1145 = vunpack.c.h.b16 %v1044
  %v1146 = vunpack.c.l.b16 %v1045
  %v1147 = vunpack.c.h.b16 %v1045
  %v1148 = vunpack.c.l.b16 %v1046
  %v1149 = vunpack.c.h.b16 %v1046
  %v1150 = vunpack.c.l.b16 %v1047
  %v1151 = vunpack.c.h.b16 %v1047
  %v1152 = vunpack.c.l.b16 %v1048
  %v1153 = vunpack.c.h.b16 %v1048
  %v1154 = vunpack.c.l.b16 %v1049
  %v1155 = vunpack.c.h.b16 %v1049
  %v1156 = vunpack.c.l.b16 %v1050
  %v1157 = vunpack.c.h.b16 %v1050
  %v1158 = vunpack.c.l.b16 %v1051
  %v1159 = vunpack.c.h.b16 %v1051
  %v1160 = vunpack.c.l.b16 %v1052
  %v1161 = vunpack.c.h.b16 %v1052
  %v1162 = vunpack.c.l.b16 %v1053
  %v1163 = vunpack.c.h.b16 %v1053
  %v1164 = vunpack.c.l.b16 %v1054
  %v1165 = vunpack.c.h.b16 %v1054
  %v1166 = vunpack.c.l.b16 %v1055
  %v1167 = vunpack.c.h.b16 %v1055
  %v1168 = vunpack.c.l.b16 %v1056
  %v1169 = vunpack.c.h.b16 %v1056
  %v1170 = vunpack.c.l.b16 %v1057
  %v1171 = vunpack.c.h.b16 %v1057
  %v1172 = vunpack.c.l.b16 %v1058
  %v1173 = vunpack.c.h.b16 %v1058
  %v1174 = vunpack.c.l.b16 %v1059
  %v1175 = vunpack.c.h.b16 %v1059
  %v1176 = vunpack.c.l.b16 %v1060
  %v1177 = vunpack.c.h.b16 %v1060
  %v1178 = vunpack.c.l.b16 %v1061
  %v1179 = vunpack.c.h.b16 %v1061
  %v1180 = vunpack.c.l.b16 %v1062
  %v1181 = vunpack.c.h.b16 %v1062
  %v1182 = vpack.c.b16 %v1122, %v1118
  %v1183 = vpack.c.b16 %v1123, %v1119
  %v1184 = vpack.c.b16 %v1124, %v1120
  %v1185 = vpack.c.b16 %v1125, %v1121
  %v1186 = vpack.c.b16 %v1130, %v1126
  %v1187 = vpack.c.b16 %v1131, %v1127
  %v1188 = vpack.c.b16 %v1132, %v1128
  %v1189 = vpack.c.b16 %v1133, %v1129
  %v1190 = vpack.c.b16 %v1138, %v1134
  %v1191 = vpack.c.b16 %v1139, %v1135
  %v1192 = vpack.c.b16 %v1140, %v1136
  %v1193 = vpack.c.b16 %v1141, %v1137
  %v1194 = vpack.c.b16 %v1146, %v1142
  %v1195 = vpack.c.b16 %v1147, %v1143
  %v1196 = vpack.c.b16 %v1148, %v1144
  %v1197 = vpack.c.b16 %v1149, %v1145
  %v1198 = vpack.c.b16 %v1154, %v1150
  %v1199 = vpack.c.b16 %v1155, %v1151
  %v1200 = vpack.c.b16 %v1156, %v1152
  %v1201 = vpack.c.b16 %v1157, %v1153
  %v1202 = vpack.c.b16 %v1162, %v1158
  %v1203 = vpack.c.b16 %v1163, %v1159
  %v1204 = vpack.c.b16 %v1164, %v1160
  %v1205 = vpack.c.b16 %v1165, %v1161
  %v1206 = vpack.c.b16 %v1170, %v1166
  %v1207 = vpack.c.b16 %v1171, %v1167
  %v1208 = vpack.c.b16 %v1172, %v1168
  %v1209 = vpack.c.b16 %v1173, %v1169
  %v1210 = vpack.c.b16 %v1178, %v1174
  %v1211 = vpack.c.b16 %v1179, %v1175
  %v1212 = vpack.c.b16 %v1180, %v1176
  %v1213 = vpack.c.b16 %v1181, %v1177
  %1246 = vmatprep.subr.bf16.mxu0 %v1183
  %1247 = vmatpush1.bf16.msra.mxu0 %v1182
  %1248 = vmatprep.subr.bf16.mxu0 %v1187
  %1249 = vmatpush1.bf16.msra.mxu0 %v1186
  %1250 = vmatprep.subr.bf16.mxu0 %v1191
  %1251 = vmatpush1.bf16.msra.mxu0 %v1190
  %1252 = vmatprep.subr.bf16.mxu0 %v1195
  %1253 = vmatpush1.bf16.msra.mxu0 %v1194
  %1254 = vmatprep.subr.bf16.mxu0 %v1199
  %1255 = vmatpush1.bf16.msra.mxu0 %v1198
  %1256 = vmatprep.subr.bf16.mxu0 %v1203
  %1257 = vmatpush1.bf16.msra.mxu0 %v1202
  %1258 = vmatprep.subr.bf16.mxu0 %v1207
  %1259 = vmatpush1.bf16.msra.mxu0 %v1206
  %1260 = vmatprep.subr.bf16.mxu0 %v1211
  %1261 = vmatpush1.bf16.msra.mxu0 %v1210
  %1262 = vmatprep.subr.bf16.mxu0 0
  %1263 = vmatpush1.bf16.msra.mxu0 0
  %1264 = vmatprep.subr.bf16.mxu0 0
  %1265 = vmatpush1.bf16.msra.mxu0 0
  %1266 = vmatprep.subr.bf16.mxu0 0
  %1267 = vmatpush1.bf16.msra.mxu0 0
  %1268 = vmatprep.subr.bf16.mxu0 0
  %1269 = vmatpush1.bf16.msra.mxu0 0
  %1270 = vmatprep.subr.bf16.mxu0 0
  %1271 = vmatpush1.bf16.msra.mxu0 0
  %1272 = vmatprep.subr.bf16.mxu0 0
  %1273 = vmatpush1.bf16.msra.mxu0 0
  %1274 = vmatprep.subr.bf16.mxu0 0
  %1275 = vmatpush1.bf16.msra.mxu0 0
  %1276 = vmatprep.subr.bf16.mxu0 0
  %1277 = vmatpush1.bf16.msra.mxu0 0
  %1278 = vmatprep.mubr.bf16.mxu0 0
  %1279 = vmatmul.mubr.bf16.gmra.mrb[0].mxu0 %v1064
  %v1280 = vpop.f32.mrb[0].mxu0
  %v1281 = vadd.f32 %v1069, %v1280
  %v1282 = vpop.f32.mrb[0].mxu0
  %v1283 = vadd.f32 %v1073, %v1282
  %v1284 = vpop.f32.mrb[0].mxu0
  %v1285 = vpop.f32.mrb[0].mxu0
  %1286 = vdwg.mxu0
  %1287 = vmatprep.subr.bf16.mxu0 %v1185
  %1288 = vmatpush1.bf16.msra.mxu0 %v1184
  %1289 = vmatprep.subr.bf16.mxu0 %v1189
  %1290 = vmatpush1.bf16.msra.mxu0 %v1188
  %1291 = vmatprep.subr.bf16.mxu0 %v1193
  %1292 = vmatpush1.bf16.msra.mxu0 %v1192
  %1293 = vmatprep.subr.bf16.mxu0 %v1197
  %1294 = vmatpush1.bf16.msra.mxu0 %v1196
  %1295 = vmatprep.subr.bf16.mxu0 %v1201
  %1296 = vmatpush1.bf16.msra.mxu0 %v1200
  %1297 = vmatprep.subr.bf16.mxu0 %v1205
  %1298 = vmatpush1.bf16.msra.mxu0 %v1204
  %1299 = vmatprep.subr.bf16.mxu0 %v1209
  %1300 = vmatpush1.bf16.msra.mxu0 %v1208
  %1301 = vmatprep.subr.bf16.mxu0 %v1213
  %1302 = vmatpush1.bf16.msra.mxu0 %v1212
  %1303 = vmatprep.subr.bf16.mxu0 0
  %1304 = vmatpush1.bf16.msra.mxu0 0
  %1305 = vmatprep.subr.bf16.mxu0 0
  %1306 = vmatpush1.bf16.msra.mxu0 0
  %1307 = vmatprep.subr.bf16.mxu0 0
  %1308 = vmatpush1.bf16.msra.mxu0 0
  %1309 = vmatprep.subr.bf16.mxu0 0
  %1310 = vmatpush1.bf16.msra.mxu0 0
  %1311 = vmatprep.subr.bf16.mxu0 0
  %1312 = vmatpush1.bf16.msra.mxu0 0
  %1313 = vmatprep.subr.bf16.mxu0 0
  %1314 = vmatpush1.bf16.msra.mxu0 0
  %1315 = vmatprep.subr.bf16.mxu0 0
  %1316 = vmatpush1.bf16.msra.mxu0 0
  %1317 = vmatprep.subr.bf16.mxu0 0
  %1318 = vmatpush1.bf16.msra.mxu0 0
  %1319 = vmatprep.mubr.bf16.mxu0 0
  %1320 = vmatmul.mubr.bf16.gmra.mrb[0].mxu0 %v1064
  %v1321 = vpop.f32.mrb[0].mxu0
  %v1322 = vadd.f32 %v1077, %v1321
  %v1323 = vpop.f32.mrb[0].mxu0
  %v1324 = vadd.f32 %v1081, %v1323
  %v1325 = vpop.f32.mrb[0].mxu0
  %v1326 = vpop.f32.mrb[0].mxu0
  %1327 = vdwg.mxu0
  %v1328 = vld [vmem:[%s8] sm:$0xf]
  %v1329 = vld [vmem:[%s8 + $0x4] sm:$0xf]
  %v1330 = vld [vmem:[%s8 + $0x8] sm:$0xf]
  %v1331 = vld [vmem:[%s8 + $0xc] sm:$0xf]
  %v1332 = vld [vmem:[%s8 + $0x10] sm:$0xf]
  %v1333 = vld [vmem:[%s8 + $0x14] sm:$0xf]
  %v1334 = vld [vmem:[%s8 + $0x18] sm:$0xf]
  %v1335 = vld [vmem:[%s8 + $0x1c] sm:$0xf]
  %v1344 = vunpack.c.l.b16 %v1328
  %v1345 = vunpack.c.l.b16 %v1329
  %v1346 = vunpack.c.l.b16 %v1330
  %v1347 = vunpack.c.l.b16 %v1331
  %v1348 = vunpack.c.l.b16 %v1332
  %v1349 = vunpack.c.l.b16 %v1333
  %v1350 = vunpack.c.l.b16 %v1334
  %v1351 = vunpack.c.l.b16 %v1335
  %v1352 = vpack.c.b16 %v1345, %v1344
  %v1353 = vpack.c.b16 %v1347, %v1346
  %v1354 = vpack.c.b16 %v1349, %v1348
  %v1355 = vpack.c.b16 %v1351, %v1350
  %1360 = vmatprep.subr.bf16.mxu0 %v1183
  %1361 = vmatpush1.bf16.msra.mxu0 %v1182
  %1362 = vmatprep.subr.bf16.mxu0 %v1187
  %1363 = vmatpush1.bf16.msra.mxu0 %v1186
  %1364 = vmatprep.subr.bf16.mxu0 %v1191
  %1365 = vmatpush1.bf16.msra.mxu0 %v1190
  %1366 = vmatprep.subr.bf16.mxu0 %v1195
  %1367 = vmatpush1.bf16.msra.mxu0 %v1194
  %1368 = vmatprep.subr.bf16.mxu0 %v1199
  %1369 = vmatpush1.bf16.msra.mxu0 %v1198
  %1370 = vmatprep.subr.bf16.mxu0 %v1203
  %1371 = vmatpush1.bf16.msra.mxu0 %v1202
  %1372 = vmatprep.subr.bf16.mxu0 %v1207
  %1373 = vmatpush1.bf16.msra.mxu0 %v1206
  %1374 = vmatprep.subr.bf16.mxu0 %v1211
  %1375 = vmatpush1.bf16.msra.mxu0 %v1210
  %1376 = vmatprep.subr.bf16.mxu0 0
  %1377 = vmatpush1.bf16.msra.mxu0 0
  %1378 = vmatprep.subr.bf16.mxu0 0
  %1379 = vmatpush1.bf16.msra.mxu0 0
  %1380 = vmatprep.subr.bf16.mxu0 0
  %1381 = vmatpush1.bf16.msra.mxu0 0
  %1382 = vmatprep.subr.bf16.mxu0 0
  %1383 = vmatpush1.bf16.msra.mxu0 0
  %1384 = vmatprep.subr.bf16.mxu0 0
  %1385 = vmatpush1.bf16.msra.mxu0 0
  %1386 = vmatprep.subr.bf16.mxu0 0
  %1387 = vmatpush1.bf16.msra.mxu0 0
  %1388 = vmatprep.subr.bf16.mxu0 0
  %1389 = vmatpush1.bf16.msra.mxu0 0
  %1390 = vmatprep.subr.bf16.mxu0 0
  %1391 = vmatpush1.bf16.msra.mxu0 0
  %1392 = vmatprep.mubr.bf16.mxu0 0
  %1393 = vmatmul.mubr.bf16.gmra.mrb[0].mxu0 %v1352
  %v1394 = vpop.f32.mrb[0].mxu0
  %v1395 = vadd.f32 %v1069, %v1394
  %v1396 = vpop.f32.mrb[0].mxu0
  %v1397 = vadd.f32 %v1073, %v1396
  %v1398 = vpop.f32.mrb[0].mxu0
  %v1399 = vadd.f32 %v1069, %v1398
  %v1400 = vpop.f32.mrb[0].mxu0
  %v1401 = vadd.f32 %v1073, %v1400
  %1402 = vmatprep.mubr.bf16.mxu0 0
  %1403 = vmatmul.mubr.bf16.gmra.mrb[0].mxu0 %v1353
  %v1404 = vpop.f32.mrb[0].mxu0
  %v1405 = vadd.f32 %v1069, %v1404
  %v1406 = vpop.f32.mrb[0].mxu0
  %v1407 = vadd.f32 %v1073, %v1406
  %v1408 = vpop.f32.mrb[0].mxu0
  %v1409 = vadd.f32 %v1069, %v1408
  %v1410 = vpop.f32.mrb[0].mxu0
  %v1411 = vadd.f32 %v1073, %v1410
  %1412 = vmatprep.mubr.bf16.mxu0 0
  %1413 = vmatmul.mubr.bf16.gmra.mrb[0].mxu0 %v1354
  %v1414 = vpop.f32.mrb[0].mxu0
  %v1415 = vadd.f32 %v1069, %v1414
  %v1416 = vpop.f32.mrb[0].mxu0
  %v1417 = vadd.f32 %v1073, %v1416
  %v1418 = vpop.f32.mrb[0].mxu0
  %v1419 = vadd.f32 %v1069, %v1418
  %v1420 = vpop.f32.mrb[0].mxu0
  %v1421 = vadd.f32 %v1073, %v1420
  %1422 = vmatprep.mubr.bf16.mxu0 0
  %1423 = vmatmul.mubr.bf16.gmra.mrb[0].mxu0 %v1355
  %v1424 = vpop.f32.mrb[0].mxu0
  %v1425 = vadd.f32 %v1069, %v1424
  %v1426 = vpop.f32.mrb[0].mxu0
  %v1427 = vadd.f32 %v1073, %v1426
  %v1428 = vpop.f32.mrb[0].mxu0
  %v1429 = vadd.f32 %v1069, %v1428
  %v1430 = vpop.f32.mrb[0].mxu0
  %v1431 = vadd.f32 %v1073, %v1430
  %1432 = vdwg.mxu0
  %1433 = vmatprep.subr.bf16.mxu0 %v1185
  %1434 = vmatpush1.bf16.msra.mxu0 %v1184
  %1435 = vmatprep.subr.bf16.mxu0 %v1189
  %1436 = vmatpush1.bf16.msra.mxu0 %v1188
  %1437 = vmatprep.subr.bf16.mxu0 %v1193
  %1438 = vmatpush1.bf16.msra.mxu0 %v1192
  %1439 = vmatprep.subr.bf16.mxu0 %v1197
  %1440 = vmatpush1.bf16.msra.mxu0 %v1196
  %1441 = vmatprep.subr.bf16.mxu0 %v1201
  %1442 = vmatpush1.bf16.msra.mxu0 %v1200
  %1443 = vmatprep.subr.bf16.mxu0 %v1205
  %1444 = vmatpush1.bf16.msra.mxu0 %v1204
  %1445 = vmatprep.subr.bf16.mxu0 %v1209
  %1446 = vmatpush1.bf16.msra.mxu0 %v1208
  %1447 = vmatprep.subr.bf16.mxu0 %v1213
  %1448 = vmatpush1.bf16.msra.mxu0 %v1212
  %1449 = vmatprep.subr.bf16.mxu0 0
  %1450 = vmatpush1.bf16.msra.mxu0 0
  %1451 = vmatprep.subr.bf16.mxu0 0
  %1452 = vmatpush1.bf16.msra.mxu0 0
  %1453 = vmatprep.subr.bf16.mxu0 0
  %1454 = vmatpush1.bf16.msra.mxu0 0
  %1455 = vmatprep.subr.bf16.mxu0 0
  %1456 = vmatpush1.bf16.msra.mxu0 0
  %1457 = vmatprep.subr.bf16.mxu0 0
  %1458 = vmatpush1.bf16.msra.mxu0 0
  %1459 = vmatprep.subr.bf16.mxu0 0
  %1460 = vmatpush1.bf16.msra.mxu0 0
  %1461 = vmatprep.subr.bf16.mxu0 0
  %1462 = vmatpush1.bf16.msra.mxu0 0
  %1463 = vmatprep.subr.bf16.mxu0 0
  %1464 = vmatpush1.bf16.msra.mxu0 0
  %1465 = vmatprep.mubr.bf16.mxu0 0
  %1466 = vmatmul.mubr.bf16.gmra.mrb[0].mxu0 %v1352
  %v1467 = vpop.f32.mrb[0].mxu0
  %v1468 = vadd.f32 %v1077, %v1467
  %v1469 = vpop.f32.mrb[0].mxu0
  %v1470 = vadd.f32 %v1081, %v1469
  %v1471 = vpop.f32.mrb[0].mxu0
  %v1472 = vadd.f32 %v1077, %v1471
  %v1473 = vpop.f32.mrb[0].mxu0
  %v1474 = vadd.f32 %v1081, %v1473
  %1475 = vmatprep.mubr.bf16.mxu0 0
  %1476 = vmatmul.mubr.bf16.gmra.mrb[0].mxu0 %v1353
  %v1477 = vpop.f32.mrb[0].mxu0
  %v1478 = vadd.f32 %v1077, %v1477
  %v1479 = vpop.f32.mrb[0].mxu0
  %v1480 = vadd.f32 %v1081, %v1479
  %v1481 = vpop.f32.mrb[0].mxu0
  %v1482 = vadd.f32 %v1077, %v1481
  %v1483 = vpop.f32.mrb[0].mxu0
  %v1484 = vadd.f32 %v1081, %v1483
  %1485 = vmatprep.mubr.bf16.mxu0 0
  %1486 = vmatmul.mubr.bf16.gmra.mrb[0].mxu0 %v1354
  %v1487 = vpop.f32.mrb[0].mxu0
  %v1488 = vadd.f32 %v1077, %v1487
  %v1489 = vpop.f32.mrb[0].mxu0
  %v1490 = vadd.f32 %v1081, %v1489
  %v1491 = vpop.f32.mrb[0].mxu0
  %v1492 = vadd.f32 %v1077, %v1491
  %v1493 = vpop.f32.mrb[0].mxu0
  %v1494 = vadd.f32 %v1081, %v1493
  %1495 = vmatprep.mubr.bf16.mxu0 0
  %1496 = vmatmul.mubr.bf16.gmra.mrb[0].mxu0 %v1355
  %v1497 = vpop.f32.mrb[0].mxu0
  %v1498 = vadd.f32 %v1077, %v1497
  %v1499 = vpop.f32.mrb[0].mxu0
  %v1500 = vadd.f32 %v1081, %v1499
  %v1501 = vpop.f32.mrb[0].mxu0
  %v1502 = vadd.f32 %v1077, %v1501
  %v1503 = vpop.f32.mrb[0].mxu0
  %v1504 = vadd.f32 %v1081, %v1503
  %1505 = vdwg.mxu0
  %v1506 = vld [vmem:[%s11] sm:$0xff]
  %v1507 = vld [vmem:[%s11 + $0x8] sm:$0xff]
  %v1508 = vld [vmem:[%s11 + $0x10] sm:$0xff]
  %v1509 = vld [vmem:[%s11 + $0x18] sm:$0xff]
  %v1510 = vld [vmem:[%s11 + $0x20] sm:$0xff]
  %v1511 = vld [vmem:[%s11 + $0x28] sm:$0xff]
  %v1512 = vld [vmem:[%s11 + $0x30] sm:$0xff]
  %v1513 = vld [vmem:[%s11 + $0x38] sm:$0xff]
  %v1514 = vld [vmem:[%s11 + $0x40] sm:$0xff]
  %v1515 = vld [vmem:[%s11 + $0x48] sm:$0xff]
  %v1516 = vld [vmem:[%s11 + $0x50] sm:$0xff]
  %v1517 = vld [vmem:[%s11 + $0x58] sm:$0xff]
  %v1518 = vld [vmem:[%s11 + $0x60] sm:$0xff]
  %v1519 = vld [vmem:[%s11 + $0x68] sm:$0xff]
  %v1520 = vld [vmem:[%s11 + $0x70] sm:$0xff]
  %v1521 = vld [vmem:[%s11 + $0x78] sm:$0xff]
  %v1522 = vld [vmem:[%s11 + $0x80] sm:$0xff]
  %v1523 = vld [vmem:[%s11 + $0x88] sm:$0xff]
  %v1524 = vld [vmem:[%s11 + $0x90] sm:$0xff]
  %v1525 = vld [vmem:[%s11 + $0x98] sm:$0xff]
  %v1526 = vld [vmem:[%s11 + $0xa0] sm:$0xff]
  %v1527 = vld [vmem:[%s11 + $0xa8] sm:$0xff]
  %v1528 = vld [vmem:[%s11 + $0xb0] sm:$0xff]
  %v1529 = vld [vmem:[%s11 + $0xb8] sm:$0xff]
  %v1530 = vld [vmem:[%s11 + $0xc0] sm:$0xff]
  %v1531 = vld [vmem:[%s11 + $0xc8] sm:$0xff]
  %v1532 = vld [vmem:[%s11 + $0xd0] sm:$0xff]
  %v1533 = vld [vmem:[%s11 + $0xd8] sm:$0xff]
  %v1534 = vld [vmem:[%s11 + $0xe0] sm:$0xff]
  %v1535 = vld [vmem:[%s11 + $0xe8] sm:$0xff]
  %v1536 = vld [vmem:[%s11 + $0xf0] sm:$0xff]
  %v1537 = vld [vmem:[%s11 + $0xf8] sm:$0xff]
  %v1538 = vld [vmem:[%s11 + $0x100] sm:$0xff]
  %v1539 = vld [vmem:[%s11 + $0x108] sm:$0xff]
  %v1540 = vld [vmem:[%s11 + $0x110] sm:$0xff]
  %v1541 = vld [vmem:[%s11 + $0x118] sm:$0xff]
  %v1542 = vld [vmem:[%s11 + $0x120] sm:$0xff]
  %v1543 = vld [vmem:[%s11 + $0x128] sm:$0xff]
  %v1544 = vld [vmem:[%s11 + $0x130] sm:$0xff]
  %v1545 = vld [vmem:[%s11 + $0x138] sm:$0xff]
  %v1546 = vld [vmem:[%s11 + $0x140] sm:$0xff]
  %v1547 = vld [vmem:[%s11 + $0x148] sm:$0xff]
  %v1548 = vld [vmem:[%s11 + $0x150] sm:$0xff]
  %v1549 = vld [vmem:[%s11 + $0x158] sm:$0xff]
  %v1550 = vld [vmem:[%s11 + $0x160] sm:$0xff]
  %v1551 = vld [vmem:[%s11 + $0x168] sm:$0xff]
  %v1552 = vld [vmem:[%s11 + $0x170] sm:$0xff]
  %v1553 = vld [vmem:[%s11 + $0x178] sm:$0xff]
  %v1554 = vld [vmem:[%s11 + $0x180] sm:$0xff]
  %v1555 = vld [vmem:[%s11 + $0x188] sm:$0xff]
  %v1556 = vld [vmem:[%s11 + $0x190] sm:$0xff]
  %v1557 = vld [vmem:[%s11 + $0x198] sm:$0xff]
  %v1558 = vld [vmem:[%s11 + $0x1a0] sm:$0xff]
  %v1559 = vld [vmem:[%s11 + $0x1a8] sm:$0xff]
  %v1560 = vld [vmem:[%s11 + $0x1b0] sm:$0xff]
  %v1561 = vld [vmem:[%s11 + $0x1b8] sm:$0xff]
  %v1562 = vld [vmem:[%s11 + $0x1c0] sm:$0xff]
  %v1563 = vld [vmem:[%s11 + $0x1c8] sm:$0xff]
  %v1564 = vld [vmem:[%s11 + $0x1d0] sm:$0xff]
  %v1565 = vld [vmem:[%s11 + $0x1d8] sm:$0xff]
  %v1566 = vld [vmem:[%s11 + $0x1e0] sm:$0xff]
  %v1567 = vld [vmem:[%s11 + $0x1e8] sm:$0xff]
  %v1568 = vld [vmem:[%s11 + $0x1f0] sm:$0xff]
  %v1569 = vld [vmem:[%s11 + $0x1f8] sm:$0xff]
  %v1570 = vld [vmem:[%s11 + $0x200] sm:$0xff]
  %v1571 = vld [vmem:[%s11 + $0x208] sm:$0xff]
  %v1572 = vld [vmem:[%s11 + $0x210] sm:$0xff]
  %v1573 = vld [vmem:[%s11 + $0x218] sm:$0xff]
  %v1574 = vld [vmem:[%s11 + $0x220] sm:$0xff]
  %v1575 = vld [vmem:[%s11 + $0x228] sm:$0xff]
  %v1576 = vld [vmem:[%s11 + $0x230] sm:$0xff]
  %v1577 = vld [vmem:[%s11 + $0x238] sm:$0xff]
  %v1578 = vld [vmem:[%s11 + $0x240] sm:$0xff]
  %v1579 = vld [vmem:[%s11 + $0x248] sm:$0xff]
  %v1580 = vld [vmem:[%s11 + $0x250] sm:$0xff]
  %v1581 = vld [vmem:[%s11 + $0x258] sm:$0xff]
  %v1582 = vld [vmem:[%s11 + $0x260] sm:$0xff]
  %v1583 = vld [vmem:[%s11 + $0x268] sm:$0xff]
  %v1584 = vld [vmem:[%s11 + $0x270] sm:$0xff]
  %v1585 = vld [vmem:[%s11 + $0x278] sm:$0xff]
  %v1586 = vld [vmem:[%s11 + $0x280] sm:$0xff]
  %v1587 = vld [vmem:[%s11 + $0x288] sm:$0xff]
  %v1588 = vld [vmem:[%s11 + $0x290] sm:$0xff]
  %v1589 = vld [vmem:[%s11 + $0x298] sm:$0xff]
  %v1590 = vld [vmem:[%s11 + $0x2a0] sm:$0xff]
  %v1591 = vld [vmem:[%s11 + $0x2a8] sm:$0xff]
  %v1592 = vld [vmem:[%s11 + $0x2b0] sm:$0xff]
  %v1593 = vld [vmem:[%s11 + $0x2b8] sm:$0xff]
  %v1594 = vld [vmem:[%s11 + $0x2c0] sm:$0xff]
  %v1595 = vld [vmem:[%s11 + $0x2c8] sm:$0xff]
  %v1596 = vld [vmem:[%s11 + $0x2d0] sm:$0xff]
  %v1597 = vld [vmem:[%s11 + $0x2d8] sm:$0xff]
  %v1598 = vld [vmem:[%s11 + $0x2e0] sm:$0xff]
  %v1599 = vld [vmem:[%s11 + $0x2e8] sm:$0xff]
  %v1600 = vld [vmem:[%s11 + $0x2f0] sm:$0xff]
  %v1601 = vld [vmem:[%s11 + $0x2f8] sm:$0xff]
  %v1602 = vld [vmem:[%s11 + $0x300] sm:$0xff]
  %v1603 = vld [vmem:[%s11 + $0x308] sm:$0xff]
  %v1604 = vld [vmem:[%s11 + $0x310] sm:$0xff]
  %v1605 = vld [vmem:[%s11 + $0x318] sm:$0xff]
  %v1606 = vld [vmem:[%s11 + $0x320] sm:$0xff]
  %v1607 = vld [vmem:[%s11 + $0x328] sm:$0xff]
  %v1608 = vld [vmem:[%s11 + $0x330] sm:$0xff]
  %v1609 = vld [vmem:[%s11 + $0x338] sm:$0xff]
  %v1610 = vld [vmem:[%s11 + $0x340] sm:$0xff]
  %v1611 = vld [vmem:[%s11 + $0x348] sm:$0xff]
  %v1612 = vld [vmem:[%s11 + $0x350] sm:$0xff]
  %v1613 = vld [vmem:[%s11 + $0x358] sm:$0xff]
  %v1614 = vld [vmem:[%s11 + $0x360] sm:$0xff]
  %v1615 = vld [vmem:[%s11 + $0x368] sm:$0xff]
  %v1616 = vld [vmem:[%s11 + $0x370] sm:$0xff]
  %v1617 = vld [vmem:[%s11 + $0x378] sm:$0xff]
  %v1618 = vld [vmem:[%s11 + $0x380] sm:$0xff]
  %v1619 = vld [vmem:[%s11 + $0x388] sm:$0xff]
  %v1620 = vld [vmem:[%s11 + $0x390] sm:$0xff]
  %v1621 = vld [vmem:[%s11 + $0x398] sm:$0xff]
  %v1622 = vld [vmem:[%s11 + $0x3a0] sm:$0xff]
  %v1623 = vld [vmem:[%s11 + $0x3a8] sm:$0xff]
  %v1624 = vld [vmem:[%s11 + $0x3b0] sm:$0xff]
  %v1625 = vld [vmem:[%s11 + $0x3b8] sm:$0xff]
  %v1626 = vld [vmem:[%s11 + $0x3c0] sm:$0xff]
  %v1627 = vld [vmem:[%s11 + $0x3c8] sm:$0xff]
  %v1628 = vld [vmem:[%s11 + $0x3d0] sm:$0xff]
  %v1629 = vld [vmem:[%s11 + $0x3d8] sm:$0xff]
  %v1630 = vld [vmem:[%s11 + $0x3e0] sm:$0xff]
  %v1631 = vld [vmem:[%s11 + $0x3e8] sm:$0xff]
  %v1632 = vld [vmem:[%s11 + $0x3f0] sm:$0xff]
  %v1633 = vld [vmem:[%s11 + $0x3f8] sm:$0xff]
  %v1634 = vld [vmem:[%s13] sm:$0xff]
  %v1635 = vld [vmem:[%s13 + $0x8] sm:$0xff]
  %v1636 = vld [vmem:[%s13 + $0x10] sm:$0xff]
  %v1637 = vld [vmem:[%s13 + $0x18] sm:$0xff]
  %v1638 = vld [vmem:[%s13 + $0x20] sm:$0xff]
  %v1639 = vld [vmem:[%s13 + $0x28] sm:$0xff]
  %v1640 = vld [vmem:[%s13 + $0x30] sm:$0xff]
  %v1641 = vld [vmem:[%s13 + $0x38] sm:$0xff]
  %v1642 = vld [vmem:[%s13 + $0x40] sm:$0xff]
  %v1643 = vld [vmem:[%s13 + $0x48] sm:$0xff]
  %v1644 = vld [vmem:[%s13 + $0x50] sm:$0xff]
  %v1645 = vld [vmem:[%s13 + $0x58] sm:$0xff]
  %v1646 = vld [vmem:[%s13 + $0x60] sm:$0xff]
  %v1647 = vld [vmem:[%s13 + $0x68] sm:$0xff]
  %v1648 = vld [vmem:[%s13 + $0x70] sm:$0xff]
  %v1649 = vld [vmem:[%s13 + $0x78] sm:$0xff]
  %v1650 = vld [vmem:[%s12] sm:$0xf]
  %v1652 = vlaneseq
  %v1653 = vshrl.u32 %v1652, 7
  %v1654 = vsub.s32 0, %v1653
  %v1655 = vrot.slane %v1650, %v1654
  %v1656 = vlaneseq
  %v1657 = vshrl.u32 %v1656, 7
  %v1658 = vsub.s32 1, %v1657
  %v1659 = vrot.slane %v1650, %v1658
  %v1660 = vlaneseq
  %v1661 = vshrl.u32 %v1660, 7
  %v1662 = vsub.s32 2, %v1661
  %v1663 = vrot.slane %v1650, %v1662
  %v1664 = vlaneseq
  %v1665 = vshrl.u32 %v1664, 7
  %v1666 = vsub.s32 3, %v1665
  %v1667 = vrot.slane %v1650, %v1666
  %v1672 = vld [vmem:[%s14] sm:$0x3]
  %v1674 = vlaneseq
  %v1675 = vshrl.u32 %v1674, 7
  %v1676 = vsub.s32 0, %v1675
  %v1677 = vrot.slane %v1672, %v1676
  %v1678 = vlaneseq
  %v1679 = vshrl.u32 %v1678, 7
  %v1680 = vsub.s32 1, %v1679
  %v1681 = vrot.slane %v1672, %v1680
  %v1684 = vadd.f32 %v1281, 0.0
  %v1685 = vadd.f32 %v1283, 0.0
  %v1686 = vadd.f32 %v1322, 0.0
  %v1687 = vadd.f32 %v1324, 0.0
  %v1688 = vxor.u32 %v1684, 2147483648
  %v1689 = vxor.u32 %v1685, 2147483648
  %v1690 = vxor.u32 %v1686, 2147483648
  %v1691 = vmul.f32 %v1688, 1.442695
  %v1692 = vpow.pop %v1691
  %v1693 = vmul.f32 %v1689, 1.442695
  %v1694 = vpow.pop %v1693
  %v1695 = vmul.f32 %v1690, 1.442695
  %v1696 = vpow.pop %v1695
  %v1697 = vadd.f32 %v1692, 1.0
  %v1698 = vadd.f32 %v1694, 1.0
  %v1699 = vadd.f32 %v1696, 1.0
  %v1700 = vrcp.pop %v1697
  %v1701 = vmul.f32 1.0, %v1700
  %v1702 = vrcp.pop %v1698
  %v1703 = vmul.f32 1.0, %v1702
  %v1704 = vrcp.pop %v1699
  %v1705 = vmul.f32 1.0, %v1704
  %v1706 = vtanh.pop %v1687
  %v1707 = vmul.f32 %v1703, 0.0
  %v1708 = vmul.f32 %v1701, %v1706
  %v1709 = vadd.f32 %v1707, %v1708
  %v1710 = vtanh.pop %v1709
  %v1711 = vmul.f32 %v1705, %v1710
  %v1712 = vpack.c.bf16 %v1711, %v1711
  %v1841 = vunpack.c.l.b16 %v1506
  %v1842 = vunpack.c.h.b16 %v1506
  %v1843 = vunpack.c.l.b16 %v1507
  %v1844 = vunpack.c.h.b16 %v1507
  %v1845 = vunpack.c.l.b16 %v1508
  %v1846 = vunpack.c.h.b16 %v1508
  %v1847 = vunpack.c.l.b16 %v1509
  %v1848 = vunpack.c.h.b16 %v1509
  %v1849 = vunpack.c.l.b16 %v1510
  %v1850 = vunpack.c.h.b16 %v1510
  %v1851 = vunpack.c.l.b16 %v1511
  %v1852 = vunpack.c.h.b16 %v1511
  %v1853 = vunpack.c.l.b16 %v1512
  %v1854 = vunpack.c.h.b16 %v1512
  %v1855 = vunpack.c.l.b16 %v1513
  %v1856 = vunpack.c.h.b16 %v1513
  %v1857 = vunpack.c.l.b16 %v1514
  %v1858 = vunpack.c.h.b16 %v1514
  %v1859 = vunpack.c.l.b16 %v1515
  %v1860 = vunpack.c.h.b16 %v1515
  %v1861 = vunpack.c.l.b16 %v1516
  %v1862 = vunpack.c.h.b16 %v1516
  %v1863 = vunpack.c.l.b16 %v1517
  %v1864 = vunpack.c.h.b16 %v1517
  %v1865 = vunpack.c.l.b16 %v1518
  %v1866 = vunpack.c.h.b16 %v1518
  %v1867 = vunpack.c.l.b16 %v1519
  %v1868 = vunpack.c.h.b16 %v1519
  %v1869 = vunpack.c.l.b16 %v1520
  %v1870 = vunpack.c.h.b16 %v1520
  %v1871 = vunpack.c.l.b16 %v1521
  %v1872 = vunpack.c.h.b16 %v1521
  %v1873 = vunpack.c.l.b16 %v1522
  %v1874 = vunpack.c.h.b16 %v1522
  %v1875 = vunpack.c.l.b16 %v1523
  %v1876 = vunpack.c.h.b16 %v1523
  %v1877 = vunpack.c.l.b16 %v1524
  %v1878 = vunpack.c.h.b16 %v1524
  %v1879 = vunpack.c.l.b16 %v1525
  %v1880 = vunpack.c.h.b16 %v1525
  %v1881 = vunpack.c.l.b16 %v1526
  %v1882 = vunpack.c.h.b16 %v1526
  %v1883 = vunpack.c.l.b16 %v1527
  %v1884 = vunpack.c.h.b16 %v1527
  %v1885 = vunpack.c.l.b16 %v1528
  %v1886 = vunpack.c.h.b16 %v1528
  %v1887 = vunpack.c.l.b16 %v1529
  %v1888 = vunpack.c.h.b16 %v1529
  %v1889 = vunpack.c.l.b16 %v1530
  %v1890 = vunpack.c.h.b16 %v1530
  %v1891 = vunpack.c.l.b16 %v1531
  %v1892 = vunpack.c.h.b16 %v1531
  %v1893 = vunpack.c.l.b16 %v1532
  %v1894 = vunpack.c.h.b16 %v1532
  %v1895 = vunpack.c.l.b16 %v1533
  %v1896 = vunpack.c.h.b16 %v1533
  %v1897 = vunpack.c.l.b16 %v1534
  %v1898 = vunpack.c.h.b16 %v1534
  %v1899 = vunpack.c.l.b16 %v1535
  %v1900 = vunpack.c.h.b16 %v1535
  %v1901 = vunpack.c.l.b16 %v1536
  %v1902 = vunpack.c.h.b16 %v1536
  %v1903 = vunpack.c.l.b16 %v1537
  %v1904 = vunpack.c.h.b16 %v1537
  %v1905 = vunpack.c.l.b16 %v1538
  %v1906 = vunpack.c.h.b16 %v1538
  %v1907 = vunpack.c.l.b16 %v1539
  %v1908 = vunpack.c.h.b16 %v1539
  %v1909 = vunpack.c.l.b16 %v1540
  %v1910 = vunpack.c.h.b16 %v1540
  %v1911 = vunpack.c.l.b16 %v1541
  %v1912 = vunpack.c.h.b16 %v1541
  %v1913 = vunpack.c.l.b16 %v1542
  %v1914 = vunpack.c.h.b16 %v1542
  %v1915 = vunpack.c.l.b16 %v1543
  %v1916 = vunpack.c.h.b16 %v1543
  %v1917 = vunpack.c.l.b16 %v1544
  %v1918 = vunpack.c.h.b16 %v1544
  %v1919 = vunpack.c.l.b16 %v1545
  %v1920 = vunpack.c.h.b16 %v1545
  %v1921 = vunpack.c.l.b16 %v1546
  %v1922 = vunpack.c.h.b16 %v1546
  %v1923 = vunpack.c.l.b16 %v1547
  %v1924 = vunpack.c.h.b16 %v1547
  %v1925 = vunpack.c.l.b16 %v1548
  %v1926 = vunpack.c.h.b16 %v1548
  %v1927 = vunpack.c.l.b16 %v1549
  %v1928 = vunpack.c.h.b16 %v1549
  %v1929 = vunpack.c.l.b16 %v1550
  %v1930 = vunpack.c.h.b16 %v1550
  %v1931 = vunpack.c.l.b16 %v1551
  %v1932 = vunpack.c.h.b16 %v1551
  %v1933 = vunpack.c.l.b16 %v1552
  %v1934 = vunpack.c.h.b16 %v1552
  %v1935 = vunpack.c.l.b16 %v1553
  %v1936 = vunpack.c.h.b16 %v1553
  %v1937 = vunpack.c.l.b16 %v1554
  %v1938 = vunpack.c.h.b16 %v1554
  %v1939 = vunpack.c.l.b16 %v1555
  %v1940 = vunpack.c.h.b16 %v1555
  %v1941 = vunpack.c.l.b16 %v1556
  %v1942 = vunpack.c.h.b16 %v1556
  %v1943 = vunpack.c.l.b16 %v1557
  %v1944 = vunpack.c.h.b16 %v1557
  %v1945 = vunpack.c.l.b16 %v1558
  %v1946 = vunpack.c.h.b16 %v1558
  %v1947 = vunpack.c.l.b16 %v1559
  %v1948 = vunpack.c.h.b16 %v1559
  %v1949 = vunpack.c.l.b16 %v1560
  %v1950 = vunpack.c.h.b16 %v1560
  %v1951 = vunpack.c.l.b16 %v1561
  %v1952 = vunpack.c.h.b16 %v1561
  %v1953 = vunpack.c.l.b16 %v1562
  %v1954 = vunpack.c.h.b16 %v1562
  %v1955 = vunpack.c.l.b16 %v1563
  %v1956 = vunpack.c.h.b16 %v1563
  %v1957 = vunpack.c.l.b16 %v1564
  %v1958 = vunpack.c.h.b16 %v1564
  %v1959 = vunpack.c.l.b16 %v1565
  %v1960 = vunpack.c.h.b16 %v1565
  %v1961 = vunpack.c.l.b16 %v1566
  %v1962 = vunpack.c.h.b16 %v1566
  %v1963 = vunpack.c.l.b16 %v1567
  %v1964 = vunpack.c.h.b16 %v1567
  %v1965 = vunpack.c.l.b16 %v1568
  %v1966 = vunpack.c.h.b16 %v1568
  %v1967 = vunpack.c.l.b16 %v1569
  %v1968 = vunpack.c.h.b16 %v1569
  %v1969 = vunpack.c.l.b16 %v1570
  %v1970 = vunpack.c.h.b16 %v1570
  %v1971 = vunpack.c.l.b16 %v1571
  %v1972 = vunpack.c.h.b16 %v1571
  %v1973 = vunpack.c.l.b16 %v1572
  %v1974 = vunpack.c.h.b16 %v1572
  %v1975 = vunpack.c.l.b16 %v1573
  %v1976 = vunpack.c.h.b16 %v1573
  %v1977 = vunpack.c.l.b16 %v1574
  %v1978 = vunpack.c.h.b16 %v1574
  %v1979 = vunpack.c.l.b16 %v1575
  %v1980 = vunpack.c.h.b16 %v1575
  %v1981 = vunpack.c.l.b16 %v1576
  %v1982 = vunpack.c.h.b16 %v1576
  %v1983 = vunpack.c.l.b16 %v1577
  %v1984 = vunpack.c.h.b16 %v1577
  %v1985 = vunpack.c.l.b16 %v1578
  %v1986 = vunpack.c.h.b16 %v1578
  %v1987 = vunpack.c.l.b16 %v1579
  %v1988 = vunpack.c.h.b16 %v1579
  %v1989 = vunpack.c.l.b16 %v1580
  %v1990 = vunpack.c.h.b16 %v1580
  %v1991 = vunpack.c.l.b16 %v1581
  %v1992 = vunpack.c.h.b16 %v1581
  %v1993 = vunpack.c.l.b16 %v1582
  %v1994 = vunpack.c.h.b16 %v1582
  %v1995 = vunpack.c.l.b16 %v1583
  %v1996 = vunpack.c.h.b16 %v1583
  %v1997 = vunpack.c.l.b16 %v1584
  %v1998 = vunpack.c.h.b16 %v1584
  %v1999 = vunpack.c.l.b16 %v1585
  %v2000 = vunpack.c.h.b16 %v1585
  %v2001 = vunpack.c.l.b16 %v1586
  %v2002 = vunpack.c.h.b16 %v1586
  %v2003 = vunpack.c.l.b16 %v1587
  %v2004 = vunpack.c.h.b16 %v1587
  %v2005 = vunpack.c.l.b16 %v1588
  %v2006 = vunpack.c.h.b16 %v1588
  %v2007 = vunpack.c.l.b16 %v1589
  %v2008 = vunpack.c.h.b16 %v1589
  %v2009 = vunpack.c.l.b16 %v1590
  %v2010 = vunpack.c.h.b16 %v1590
  %v2011 = vunpack.c.l.b16 %v1591
  %v2012 = vunpack.c.h.b16 %v1591
  %v2013 = vunpack.c.l.b16 %v1592
  %v2014 = vunpack.c.h.b16 %v1592
  %v2015 = vunpack.c.l.b16 %v1593
  %v2016 = vunpack.c.h.b16 %v1593
  %v2017 = vunpack.c.l.b16 %v1594
  %v2018 = vunpack.c.h.b16 %v1594
  %v2019 = vunpack.c.l.b16 %v1595
  %v2020 = vunpack.c.h.b16 %v1595
  %v2021 = vunpack.c.l.b16 %v1596
  %v2022 = vunpack.c.h.b16 %v1596
  %v2023 = vunpack.c.l.b16 %v1597
  %v2024 = vunpack.c.h.b16 %v1597
  %v2025 = vunpack.c.l.b16 %v1598
  %v2026 = vunpack.c.h.b16 %v1598
  %v2027 = vunpack.c.l.b16 %v1599
  %v2028 = vunpack.c.h.b16 %v1599
  %v2029 = vunpack.c.l.b16 %v1600
  %v2030 = vunpack.c.h.b16 %v1600
  %v2031 = vunpack.c.l.b16 %v1601
  %v2032 = vunpack.c.h.b16 %v1601
  %v2033 = vunpack.c.l.b16 %v1602
  %v2034 = vunpack.c.h.b16 %v1602
  %v2035 = vunpack.c.l.b16 %v1603
  %v2036 = vunpack.c.h.b16 %v1603
  %v2037 = vunpack.c.l.b16 %v1604
  %v2038 = vunpack.c.h.b16 %v1604
  %v2039 = vunpack.c.l.b16 %v1605
  %v2040 = vunpack.c.h.b16 %v1605
  %v2041 = vunpack.c.l.b16 %v1606
  %v2042 = vunpack.c.h.b16 %v1606
  %v2043 = vunpack.c.l.b16 %v1607
  %v2044 = vunpack.c.h.b16 %v1607
  %v2045 = vunpack.c.l.b16 %v1608
  %v2046 = vunpack.c.h.b16 %v1608
  %v2047 = vunpack.c.l.b16 %v1609
  %v2048 = vunpack.c.h.b16 %v1609
  %v2049 = vunpack.c.l.b16 %v1610
  %v2050 = vunpack.c.h.b16 %v1610
  %v2051 = vunpack.c.l.b16 %v1611
  %v2052 = vunpack.c.h.b16 %v1611
  %v2053 = vunpack.c.l.b16 %v1612
  %v2054 = vunpack.c.h.b16 %v1612
  %v2055 = vunpack.c.l.b16 %v1613
  %v2056 = vunpack.c.h.b16 %v1613
  %v2057 = vunpack.c.l.b16 %v1614
  %v2058 = vunpack.c.h.b16 %v1614
  %v2059 = vunpack.c.l.b16 %v1615
  %v2060 = vunpack.c.h.b16 %v1615
  %v2061 = vunpack.c.l.b16 %v1616
  %v2062 = vunpack.c.h.b16 %v1616
  %v2063 = vunpack.c.l.b16 %v1617
  %v2064 = vunpack.c.h.b16 %v1617
  %v2065 = vunpack.c.l.b16 %v1618
  %v2066 = vunpack.c.h.b16 %v1618
  %v2067 = vunpack.c.l.b16 %v1619
  %v2068 = vunpack.c.h.b16 %v1619
  %v2069 = vunpack.c.l.b16 %v1620
  %v2070 = vunpack.c.h.b16 %v1620
  %v2071 = vunpack.c.l.b16 %v1621
  %v2072 = vunpack.c.h.b16 %v1621
  %v2073 = vunpack.c.l.b16 %v1622
  %v2074 = vunpack.c.h.b16 %v1622
  %v2075 = vunpack.c.l.b16 %v1623
  %v2076 = vunpack.c.h.b16 %v1623
  %v2077 = vunpack.c.l.b16 %v1624
  %v2078 = vunpack.c.h.b16 %v1624
  %v2079 = vunpack.c.l.b16 %v1625
  %v2080 = vunpack.c.h.b16 %v1625
  %v2081 = vunpack.c.l.b16 %v1626
  %v2082 = vunpack.c.h.b16 %v1626
  %v2083 = vunpack.c.l.b16 %v1627
  %v2084 = vunpack.c.h.b16 %v1627
  %v2085 = vunpack.c.l.b16 %v1628
  %v2086 = vunpack.c.h.b16 %v1628
  %v2087 = vunpack.c.l.b16 %v1629
  %v2088 = vunpack.c.h.b16 %v1629
  %v2089 = vunpack.c.l.b16 %v1630
  %v2090 = vunpack.c.h.b16 %v1630
  %v2091 = vunpack.c.l.b16 %v1631
  %v2092 = vunpack.c.h.b16 %v1631
  %v2093 = vunpack.c.l.b16 %v1632
  %v2094 = vunpack.c.h.b16 %v1632
  %v2095 = vunpack.c.l.b16 %v1633
  %v2096 = vunpack.c.h.b16 %v1633
  %v2097 = vpack.c.b16 %v1849, %v1841
  %v2098 = vpack.c.b16 %v1850, %v1842
  %v2099 = vpack.c.b16 %v1851, %v1843
  %v2100 = vpack.c.b16 %v1852, %v1844
  %v2101 = vpack.c.b16 %v1853, %v1845
  %v2102 = vpack.c.b16 %v1854, %v1846
  %v2103 = vpack.c.b16 %v1855, %v1847
  %v2104 = vpack.c.b16 %v1856, %v1848
  %v2105 = vpack.c.b16 %v1865, %v1857
  %v2106 = vpack.c.b16 %v1866, %v1858
  %v2107 = vpack.c.b16 %v1867, %v1859
  %v2108 = vpack.c.b16 %v1868, %v1860
  %v2109 = vpack.c.b16 %v1869, %v1861
  %v2110 = vpack.c.b16 %v1870, %v1862
  %v2111 = vpack.c.b16 %v1871, %v1863
  %v2112 = vpack.c.b16 %v1872, %v1864
  %v2113 = vpack.c.b16 %v1881, %v1873
  %v2114 = vpack.c.b16 %v1882, %v1874
  %v2115 = vpack.c.b16 %v1883, %v1875
  %v2116 = vpack.c.b16 %v1884, %v1876
  %v2117 = vpack.c.b16 %v1885, %v1877
  %v2118 = vpack.c.b16 %v1886, %v1878
  %v2119 = vpack.c.b16 %v1887, %v1879
  %v2120 = vpack.c.b16 %v1888, %v1880
  %v2121 = vpack.c.b16 %v1897, %v1889
  %v2122 = vpack.c.b16 %v1898, %v1890
  %v2123 = vpack.c.b16 %v1899, %v1891
  %v2124 = vpack.c.b16 %v1900, %v1892
  %v2125 = vpack.c.b16 %v1901, %v1893
  %v2126 = vpack.c.b16 %v1902, %v1894
  %v2127 = vpack.c.b16 %v1903, %v1895
  %v2128 = vpack.c.b16 %v1904, %v1896
  %v2129 = vpack.c.b16 %v1913, %v1905
  %v2130 = vpack.c.b16 %v1914, %v1906
  %v2131 = vpack.c.b16 %v1915, %v1907
  %v2132 = vpack.c.b16 %v1916, %v1908
  %v2133 = vpack.c.b16 %v1917, %v1909
  %v2134 = vpack.c.b16 %v1918, %v1910
  %v2135 = vpack.c.b16 %v1919, %v1911
  %v2136 = vpack.c.b16 %v1920, %v1912
  %v2137 = vpack.c.b16 %v1929, %v1921
  %v2138 = vpack.c.b16 %v1930, %v1922
  %v2139 = vpack.c.b16 %v1931, %v1923
  %v2140 = vpack.c.b16 %v1932, %v1924
  %v2141 = vpack.c.b16 %v1933, %v1925
  %v2142 = vpack.c.b16 %v1934, %v1926
  %v2143 = vpack.c.b16 %v1935, %v1927
  %v2144 = vpack.c.b16 %v1936, %v1928
  %v2145 = vpack.c.b16 %v1945, %v1937
  %v2146 = vpack.c.b16 %v1946, %v1938
  %v2147 = vpack.c.b16 %v1947, %v1939
  %v2148 = vpack.c.b16 %v1948, %v1940
  %v2149 = vpack.c.b16 %v1949, %v1941
  %v2150 = vpack.c.b16 %v1950, %v1942
  %v2151 = vpack.c.b16 %v1951, %v1943
  %v2152 = vpack.c.b16 %v1952, %v1944
  %v2153 = vpack.c.b16 %v1961, %v1953
  %v2154 = vpack.c.b16 %v1962, %v1954
  %v2155 = vpack.c.b16 %v1963, %v1955
  %v2156 = vpack.c.b16 %v1964, %v1956
  %v2157 = vpack.c.b16 %v1965, %v1957
  %v2158 = vpack.c.b16 %v1966, %v1958
  %v2159 = vpack.c.b16 %v1967, %v1959
  %v2160 = vpack.c.b16 %v1968, %v1960
  %v2161 = vpack.c.b16 %v1977, %v1969
  %v2162 = vpack.c.b16 %v1978, %v1970
  %v2163 = vpack.c.b16 %v1979, %v1971
  %v2164 = vpack.c.b16 %v1980, %v1972
  %v2165 = vpack.c.b16 %v1981, %v1973
  %v2166 = vpack.c.b16 %v1982, %v1974
  %v2167 = vpack.c.b16 %v1983, %v1975
  %v2168 = vpack.c.b16 %v1984, %v1976
  %v2169 = vpack.c.b16 %v1993, %v1985
  %v2170 = vpack.c.b16 %v1994, %v1986
  %v2171 = vpack.c.b16 %v1995, %v1987
  %v2172 = vpack.c.b16 %v1996, %v1988
  %v2173 = vpack.c.b16 %v1997, %v1989
  %v2174 = vpack.c.b16 %v1998, %v1990
  %v2175 = vpack.c.b16 %v1999, %v1991
  %v2176 = vpack.c.b16 %v2000, %v1992
  %v2177 = vpack.c.b16 %v2009, %v2001
  %v2178 = vpack.c.b16 %v2010, %v2002
  %v2179 = vpack.c.b16 %v2011, %v2003
  %v2180 = vpack.c.b16 %v2012, %v2004
  %v2181 = vpack.c.b16 %v2013, %v2005
  %v2182 = vpack.c.b16 %v2014, %v2006
  %v2183 = vpack.c.b16 %v2015, %v2007
  %v2184 = vpack.c.b16 %v2016, %v2008
  %v2185 = vpack.c.b16 %v2025, %v2017
  %v2186 = vpack.c.b16 %v2026, %v2018
  %v2187 = vpack.c.b16 %v2027, %v2019
  %v2188 = vpack.c.b16 %v2028, %v2020
  %v2189 = vpack.c.b16 %v2029, %v2021
  %v2190 = vpack.c.b16 %v2030, %v2022
  %v2191 = vpack.c.b16 %v2031, %v2023
  %v2192 = vpack.c.b16 %v2032, %v2024
  %v2193 = vpack.c.b16 %v2041, %v2033
  %v2194 = vpack.c.b16 %v2042, %v2034
  %v2195 = vpack.c.b16 %v2043, %v2035
  %v2196 = vpack.c.b16 %v2044, %v2036
  %v2197 = vpack.c.b16 %v2045, %v2037
  %v2198 = vpack.c.b16 %v2046, %v2038
  %v2199 = vpack.c.b16 %v2047, %v2039
  %v2200 = vpack.c.b16 %v2048, %v2040
  %v2201 = vpack.c.b16 %v2057, %v2049
  %v2202 = vpack.c.b16 %v2058, %v2050
  %v2203 = vpack.c.b16 %v2059, %v2051
  %v2204 = vpack.c.b16 %v2060, %v2052
  %v2205 = vpack.c.b16 %v2061, %v2053
  %v2206 = vpack.c.b16 %v2062, %v2054
  %v2207 = vpack.c.b16 %v2063, %v2055
  %v2208 = vpack.c.b16 %v2064, %v2056
  %v2209 = vpack.c.b16 %v2073, %v2065
  %v2210 = vpack.c.b16 %v2074, %v2066
  %v2211 = vpack.c.b16 %v2075, %v2067
  %v2212 = vpack.c.b16 %v2076, %v2068
  %v2213 = vpack.c.b16 %v2077, %v2069
  %v2214 = vpack.c.b16 %v2078, %v2070
  %v2215 = vpack.c.b16 %v2079, %v2071
  %v2216 = vpack.c.b16 %v2080, %v2072
  %v2217 = vpack.c.b16 %v2089, %v2081
  %v2218 = vpack.c.b16 %v2090, %v2082
  %v2219 = vpack.c.b16 %v2091, %v2083
  %v2220 = vpack.c.b16 %v2092, %v2084
  %v2221 = vpack.c.b16 %v2093, %v2085
  %v2222 = vpack.c.b16 %v2094, %v2086
  %v2223 = vpack.c.b16 %v2095, %v2087
  %v2224 = vpack.c.b16 %v2096, %v2088
  %2353 = vmatprep.subr.bf16.mxu0 %v2098
  %2354 = vmatpush1.bf16.msra.mxu0 %v2097
  %2355 = vmatprep.subr.bf16.mxu0 %v2106
  %2356 = vmatpush1.bf16.msra.mxu0 %v2105
  %2357 = vmatprep.subr.bf16.mxu0 %v2114
  %2358 = vmatpush1.bf16.msra.mxu0 %v2113
  %2359 = vmatprep.subr.bf16.mxu0 %v2122
  %2360 = vmatpush1.bf16.msra.mxu0 %v2121
  %2361 = vmatprep.subr.bf16.mxu0 %v2130
  %2362 = vmatpush1.bf16.msra.mxu0 %v2129
  %2363 = vmatprep.subr.bf16.mxu0 %v2138
  %2364 = vmatpush1.bf16.msra.mxu0 %v2137
  %2365 = vmatprep.subr.bf16.mxu0 %v2146
  %2366 = vmatpush1.bf16.msra.mxu0 %v2145
  %2367 = vmatprep.subr.bf16.mxu0 %v2154
  %2368 = vmatpush1.bf16.msra.mxu0 %v2153
  %2369 = vmatprep.subr.bf16.mxu0 %v2162
  %2370 = vmatpush1.bf16.msra.mxu0 %v2161
  %2371 = vmatprep.subr.bf16.mxu0 %v2170
  %2372 = vmatpush1.bf16.msra.mxu0 %v2169
  %2373 = vmatprep.subr.bf16.mxu0 %v2178
  %2374 = vmatpush1.bf16.msra.mxu0 %v2177
  %2375 = vmatprep.subr.bf16.mxu0 %v2186
  %2376 = vmatpush1.bf16.msra.mxu0 %v2185
  %2377 = vmatprep.subr.bf16.mxu0 %v2194
  %2378 = vmatpush1.bf16.msra.mxu0 %v2193
  %2379 = vmatprep.subr.bf16.mxu0 %v2202
  %2380 = vmatpush1.bf16.msra.mxu0 %v2201
  %2381 = vmatprep.subr.bf16.mxu0 %v2210
  %2382 = vmatpush1.bf16.msra.mxu0 %v2209
  %2383 = vmatprep.subr.bf16.mxu0 %v2218
  %2384 = vmatpush1.bf16.msra.mxu0 %v2217
  %2385 = vmatprep.mubr.bf16.mxu0 0
  %2386 = vmatmul.mubr.bf16.gmra.mrb[0].mxu0 %v1712
  %v2387 = vpop.f32.mrb[0].mxu0
  %v2388 = vadd.f32 0.0, %v2387
  %v2389 = vpop.f32.mrb[0].mxu0
  %v2390 = vadd.f32 0.0, %v2389
  %v2391 = vpop.f32.mrb[0].mxu0
  %v2392 = vpop.f32.mrb[0].mxu0
  %2393 = vdwg.mxu0
  %2394 = vmatprep.subr.bf16.mxu0 %v2100
  %2395 = vmatpush1.bf16.msra.mxu0 %v2099
  %2396 = vmatprep.subr.bf16.mxu0 %v2108
  %2397 = vmatpush1.bf16.msra.mxu0 %v2107
  %2398 = vmatprep.subr.bf16.mxu0 %v2116
  %2399 = vmatpush1.bf16.msra.mxu0 %v2115
  %2400 = vmatprep.subr.bf16.mxu0 %v2124
  %2401 = vmatpush1.bf16.msra.mxu0 %v2123
  %2402 = vmatprep.subr.bf16.mxu0 %v2132
  %2403 = vmatpush1.bf16.msra.mxu0 %v2131
  %2404 = vmatprep.subr.bf16.mxu0 %v2140
  %2405 = vmatpush1.bf16.msra.mxu0 %v2139
  %2406 = vmatprep.subr.bf16.mxu0 %v2148
  %2407 = vmatpush1.bf16.msra.mxu0 %v2147
  %2408 = vmatprep.subr.bf16.mxu0 %v2156
  %2409 = vmatpush1.bf16.msra.mxu0 %v2155
  %2410 = vmatprep.subr.bf16.mxu0 %v2164
  %2411 = vmatpush1.bf16.msra.mxu0 %v2163
  %2412 = vmatprep.subr.bf16.mxu0 %v2172
  %2413 = vmatpush1.bf16.msra.mxu0 %v2171
  %2414 = vmatprep.subr.bf16.mxu0 %v2180
  %2415 = vmatpush1.bf16.msra.mxu0 %v2179
  %2416 = vmatprep.subr.bf16.mxu0 %v2188
  %2417 = vmatpush1.bf16.msra.mxu0 %v2187
  %2418 = vmatprep.subr.bf16.mxu0 %v2196
  %2419 = vmatpush1.bf16.msra.mxu0 %v2195
  %2420 = vmatprep.subr.bf16.mxu0 %v2204
  %2421 = vmatpush1.bf16.msra.mxu0 %v2203
  %2422 = vmatprep.subr.bf16.mxu0 %v2212
  %2423 = vmatpush1.bf16.msra.mxu0 %v2211
  %2424 = vmatprep.subr.bf16.mxu0 %v2220
  %2425 = vmatpush1.bf16.msra.mxu0 %v2219
  %2426 = vmatprep.mubr.bf16.mxu0 0
  %2427 = vmatmul.mubr.bf16.gmra.mrb[0].mxu0 %v1712
  %v2428 = vpop.f32.mrb[0].mxu0
  %v2429 = vadd.f32 0.0, %v2428
  %v2430 = vpop.f32.mrb[0].mxu0
  %v2431 = vadd.f32 0.0, %v2430
  %v2432 = vpop.f32.mrb[0].mxu0
  %v2433 = vpop.f32.mrb[0].mxu0
  %2434 = vdwg.mxu0
  %2435 = vmatprep.subr.bf16.mxu0 %v2102
  %2436 = vmatpush1.bf16.msra.mxu0 %v2101
  %2437 = vmatprep.subr.bf16.mxu0 %v2110
  %2438 = vmatpush1.bf16.msra.mxu0 %v2109
  %2439 = vmatprep.subr.bf16.mxu0 %v2118
  %2440 = vmatpush1.bf16.msra.mxu0 %v2117
  %2441 = vmatprep.subr.bf16.mxu0 %v2126
  %2442 = vmatpush1.bf16.msra.mxu0 %v2125
  %2443 = vmatprep.subr.bf16.mxu0 %v2134
  %2444 = vmatpush1.bf16.msra.mxu0 %v2133
  %2445 = vmatprep.subr.bf16.mxu0 %v2142
  %2446 = vmatpush1.bf16.msra.mxu0 %v2141
  %2447 = vmatprep.subr.bf16.mxu0 %v2150
  %2448 = vmatpush1.bf16.msra.mxu0 %v2149
  %2449 = vmatprep.subr.bf16.mxu0 %v2158
  %2450 = vmatpush1.bf16.msra.mxu0 %v2157
  %2451 = vmatprep.subr.bf16.mxu0 %v2166
  %2452 = vmatpush1.bf16.msra.mxu0 %v2165
  %2453 = vmatprep.subr.bf16.mxu0 %v2174
  %2454 = vmatpush1.bf16.msra.mxu0 %v2173
  %2455 = vmatprep.subr.bf16.mxu0 %v2182
  %2456 = vmatpush1.bf16.msra.mxu0 %v2181
  %2457 = vmatprep.subr.bf16.mxu0 %v2190
  %2458 = vmatpush1.bf16.msra.mxu0 %v2189
  %2459 = vmatprep.subr.bf16.mxu0 %v2198
  %2460 = vmatpush1.bf16.msra.mxu0 %v2197
  %2461 = vmatprep.subr.bf16.mxu0 %v2206
  %2462 = vmatpush1.bf16.msra.mxu0 %v2205
  %2463 = vmatprep.subr.bf16.mxu0 %v2214
  %2464 = vmatpush1.bf16.msra.mxu0 %v2213
  %2465 = vmatprep.subr.bf16.mxu0 %v2222
  %2466 = vmatpush1.bf16.msra.mxu0 %v2221
  %2467 = vmatprep.mubr.bf16.mxu0 0
  %2468 = vmatmul.mubr.bf16.gmra.mrb[0].mxu0 %v1712
  %v2469 = vpop.f32.mrb[0].mxu0
  %v2470 = vadd.f32 0.0, %v2469
  %v2471 = vpop.f32.mrb[0].mxu0
  %v2472 = vadd.f32 0.0, %v2471
  %v2473 = vpop.f32.mrb[0].mxu0
  %v2474 = vpop.f32.mrb[0].mxu0
  %2475 = vdwg.mxu0
  %2476 = vmatprep.subr.bf16.mxu0 %v2104
  %2477 = vmatpush1.bf16.msra.mxu0 %v2103
  %2478 = vmatprep.subr.bf16.mxu0 %v2112
  %2479 = vmatpush1.bf16.msra.mxu0 %v2111
  %2480 = vmatprep.subr.bf16.mxu0 %v2120
  %2481 = vmatpush1.bf16.msra.mxu0 %v2119
  %2482 = vmatprep.subr.bf16.mxu0 %v2128
  %2483 = vmatpush1.bf16.msra.mxu0 %v2127
  %2484 = vmatprep.subr.bf16.mxu0 %v2136
  %2485 = vmatpush1.bf16.msra.mxu0 %v2135
  %2486 = vmatprep.subr.bf16.mxu0 %v2144
  %2487 = vmatpush1.bf16.msra.mxu0 %v2143
  %2488 = vmatprep.subr.bf16.mxu0 %v2152
  %2489 = vmatpush1.bf16.msra.mxu0 %v2151
  %2490 = vmatprep.subr.bf16.mxu0 %v2160
  %2491 = vmatpush1.bf16.msra.mxu0 %v2159
  %2492 = vmatprep.subr.bf16.mxu0 %v2168
  %2493 = vmatpush1.bf16.msra.mxu0 %v2167
  %2494 = vmatprep.subr.bf16.mxu0 %v2176
  %2495 = vmatpush1.bf16.msra.mxu0 %v2175
  %2496 = vmatprep.subr.bf16.mxu0 %v2184
  %2497 = vmatpush1.bf16.msra.mxu0 %v2183
  %2498 = vmatprep.subr.bf16.mxu0 %v2192
  %2499 = vmatpush1.bf16.msra.mxu0 %v2191
  %2500 = vmatprep.subr.bf16.mxu0 %v2200
  %2501 = vmatpush1.bf16.msra.mxu0 %v2199
  %2502 = vmatprep.subr.bf16.mxu0 %v2208
  %2503 = vmatpush1.bf16.msra.mxu0 %v2207
  %2504 = vmatprep.subr.bf16.mxu0 %v2216
  %2505 = vmatpush1.bf16.msra.mxu0 %v2215
  %2506 = vmatprep.subr.bf16.mxu0 %v2224
  %2507 = vmatpush1.bf16.msra.mxu0 %v2223
  %2508 = vmatprep.mubr.bf16.mxu0 0
  %2509 = vmatmul.mubr.bf16.gmra.mrb[0].mxu0 %v1712
  %v2510 = vpop.f32.mrb[0].mxu0
  %v2511 = vadd.f32 0.0, %v2510
  %v2512 = vpop.f32.mrb[0].mxu0
  %v2513 = vadd.f32 0.0, %v2512
  %v2514 = vpop.f32.mrb[0].mxu0
  %v2515 = vpop.f32.mrb[0].mxu0
  %2516 = vdwg.mxu0
  %v2517 = vadd.f32 %v2470, %v1655
  %v2518 = vadd.f32 %v2472, %v1659
  %v2519 = vadd.f32 %v2511, %v1663
  %v2520 = vadd.f32 %v2513, %v1667
  %v2521 = vxor.u32 %v2517, 2147483648
  %v2522 = vxor.u32 %v2518, 2147483648
  %v2523 = vxor.u32 %v2519, 2147483648
  %v2524 = vmul.f32 %v2521, 1.442695
  %v2525 = vpow.pop %v2524
  %v2526 = vmul.f32 %v2522, 1.442695
  %v2527 = vpow.pop %v2526
  %v2528 = vmul.f32 %v2523, 1.442695
  %v2529 = vpow.pop %v2528
  %v2530 = vadd.f32 %v2525, 1.0
  %v2531 = vadd.f32 %v2527, 1.0
  %v2532 = vadd.f32 %v2529, 1.0
  %v2533 = vrcp.pop %v2530
  %v2534 = vmul.f32 1.0, %v2533
  %v2535 = vrcp.pop %v2531
  %v2536 = vmul.f32 1.0, %v2535
  %v2537 = vrcp.pop %v2532
  %v2538 = vmul.f32 1.0, %v2537
  %v2539 = vtanh.pop %v2520
  %v2540 = vmul.f32 %v2536, 0.0
  %v2541 = vmul.f32 %v2534, %v2539
  %v2542 = vadd.f32 %v2540, %v2541
  %v2543 = vtanh.pop %v2542
  %v2544 = vmul.f32 %v2538, %v2543
  %v2545 = vpack.c.bf16 %v2544, %v2544
  %v2562 = vunpack.c.l.b16 %v1634
  %v2563 = vunpack.c.h.b16 %v1634
  %v2564 = vunpack.c.l.b16 %v1635
  %v2565 = vunpack.c.h.b16 %v1635
  %v2566 = vunpack.c.l.b16 %v1636
  %v2567 = vunpack.c.h.b16 %v1636
  %v2568 = vunpack.c.l.b16 %v1637
  %v2569 = vunpack.c.h.b16 %v1637
  %v2570 = vunpack.c.l.b16 %v1638
  %v2571 = vunpack.c.h.b16 %v1638
  %v2572 = vunpack.c.l.b16 %v1639
  %v2573 = vunpack.c.h.b16 %v1639
  %v2574 = vunpack.c.l.b16 %v1640
  %v2575 = vunpack.c.h.b16 %v1640
  %v2576 = vunpack.c.l.b16 %v1641
  %v2577 = vunpack.c.h.b16 %v1641
  %v2578 = vunpack.c.l.b16 %v1642
  %v2579 = vunpack.c.h.b16 %v1642
  %v2580 = vunpack.c.l.b16 %v1643
  %v2581 = vunpack.c.h.b16 %v1643
  %v2582 = vunpack.c.l.b16 %v1644
  %v2583 = vunpack.c.h.b16 %v1644
  %v2584 = vunpack.c.l.b16 %v1645
  %v2585 = vunpack.c.h.b16 %v1645
  %v2586 = vunpack.c.l.b16 %v1646
  %v2587 = vunpack.c.h.b16 %v1646
  %v2588 = vunpack.c.l.b16 %v1647
  %v2589 = vunpack.c.h.b16 %v1647
  %v2590 = vunpack.c.l.b16 %v1648
  %v2591 = vunpack.c.h.b16 %v1648
  %v2592 = vunpack.c.l.b16 %v1649
  %v2593 = vunpack.c.h.b16 %v1649
  %v2594 = vpack.c.b16 %v2564, %v2562
  %v2595 = vpack.c.b16 %v2565, %v2563
  %v2596 = vpack.c.b16 %v2568, %v2566
  %v2597 = vpack.c.b16 %v2569, %v2567
  %v2598 = vpack.c.b16 %v2572, %v2570
  %v2599 = vpack.c.b16 %v2573, %v2571
  %v2600 = vpack.c.b16 %v2576, %v2574
  %v2601 = vpack.c.b16 %v2577, %v2575
  %v2602 = vpack.c.b16 %v2580, %v2578
  %v2603 = vpack.c.b16 %v2581, %v2579
  %v2604 = vpack.c.b16 %v2584, %v2582
  %v2605 = vpack.c.b16 %v2585, %v2583
  %v2606 = vpack.c.b16 %v2588, %v2586
  %v2607 = vpack.c.b16 %v2589, %v2587
  %v2608 = vpack.c.b16 %v2592, %v2590
  %v2609 = vpack.c.b16 %v2593, %v2591
  %2626 = vmatprep.subr.bf16.mxu0 %v2595
  %2627 = vmatpush1.bf16.msra.mxu0 %v2594
  %2628 = vmatprep.subr.bf16.mxu0 %v2597
  %2629 = vmatpush1.bf16.msra.mxu0 %v2596
  %2630 = vmatprep.subr.bf16.mxu0 %v2599
  %2631 = vmatpush1.bf16.msra.mxu0 %v2598
  %2632 = vmatprep.subr.bf16.mxu0 %v2601
  %2633 = vmatpush1.bf16.msra.mxu0 %v2600
  %2634 = vmatprep.subr.bf16.mxu0 %v2603
  %2635 = vmatpush1.bf16.msra.mxu0 %v2602
  %2636 = vmatprep.subr.bf16.mxu0 %v2605
  %2637 = vmatpush1.bf16.msra.mxu0 %v2604
  %2638 = vmatprep.subr.bf16.mxu0 %v2607
  %2639 = vmatpush1.bf16.msra.mxu0 %v2606
  %2640 = vmatprep.subr.bf16.mxu0 %v2609
  %2641 = vmatpush1.bf16.msra.mxu0 %v2608
  %2642 = vmatprep.subr.bf16.mxu0 0
  %2643 = vmatpush1.bf16.msra.mxu0 0
  %2644 = vmatprep.subr.bf16.mxu0 0
  %2645 = vmatpush1.bf16.msra.mxu0 0
  %2646 = vmatprep.subr.bf16.mxu0 0
  %2647 = vmatpush1.bf16.msra.mxu0 0
  %2648 = vmatprep.subr.bf16.mxu0 0
  %2649 = vmatpush1.bf16.msra.mxu0 0
  %2650 = vmatprep.subr.bf16.mxu0 0
  %2651 = vmatpush1.bf16.msra.mxu0 0
  %2652 = vmatprep.subr.bf16.mxu0 0
  %2653 = vmatpush1.bf16.msra.mxu0 0
  %2654 = vmatprep.subr.bf16.mxu0 0
  %2655 = vmatpush1.bf16.msra.mxu0 0
  %2656 = vmatprep.subr.bf16.mxu0 0
  %2657 = vmatpush1.bf16.msra.mxu0 0
  %2658 = vmatprep.mubr.bf16.mxu0 0
  %2659 = vmatmul.mubr.bf16.gmra.mrb[0].mxu0 %v2545
  %v2660 = vpop.f32.mrb[0].mxu0
  %v2661 = vadd.f32 %v1677, %v2660
  %v2662 = vpop.f32.mrb[0].mxu0
  %v2663 = vadd.f32 %v1681, %v2662
  %v2664 = vpop.f32.mrb[0].mxu0
  %v2665 = vpop.f32.mrb[0].mxu0
  %2666 = vdwg.mxu0
  %2667 = vst [vmem:[%s15] sm:$0xff] %v2661
  %2668 = vst [vmem:[%s15 + $0x8] sm:$0xff] %v2663
  %v2669 = vadd.f32 %v1395, %v2388
  %v2670 = vadd.f32 %v1397, %v2390
  %v2671 = vadd.f32 %v1468, %v2429
  %v2672 = vadd.f32 %v1470, %v2431
  %v2673 = vxor.u32 %v2669, 2147483648
  %v2674 = vxor.u32 %v2670, 2147483648
  %v2675 = vxor.u32 %v2671, 2147483648
  %v2676 = vmul.f32 %v2673, 1.442695
  %v2677 = vpow.pop %v2676
  %v2678 = vmul.f32 %v2674, 1.442695
  %v2679 = vpow.pop %v2678
  %v2680 = vmul.f32 %v2675, 1.442695
  %v2681 = vpow.pop %v2680
  %v2682 = vadd.f32 %v2677, 1.0
  %v2683 = vadd.f32 %v2679, 1.0
  %v2684 = vadd.f32 %v2681, 1.0
  %v2685 = vrcp.pop %v2682
  %v2686 = vmul.f32 1.0, %v2685
  %v2687 = vrcp.pop %v2683
  %v2688 = vmul.f32 1.0, %v2687
  %v2689 = vrcp.pop %v2684
  %v2690 = vmul.f32 1.0, %v2689
  %v2691 = vtanh.pop %v2672
  %v2692 = vmul.f32 %v2688, %v1709
  %v2693 = vmul.f32 %v2686, %v2691
  %v2694 = vadd.f32 %v2692, %v2693
  %v2695 = vtanh.pop %v2694
  %v2696 = vmul.f32 %v2690, %v2695
  %v2697 = vpack.c.bf16 %v2696, %v2696
  %2698 = vmatprep.subr.bf16.mxu0 %v2098
  %2699 = vmatpush1.bf16.msra.mxu0 %v2097
  %2700 = vmatprep.subr.bf16.mxu0 %v2106
  %2701 = vmatpush1.bf16.msra.mxu0 %v2105
  %2702 = vmatprep.subr.bf16.mxu0 %v2114
  %2703 = vmatpush1.bf16.msra.mxu0 %v2113
  %2704 = vmatprep.subr.bf16.mxu0 %v2122
  %2705 = vmatpush1.bf16.msra.mxu0 %v2121
  %2706 = vmatprep.subr.bf16.mxu0 %v2130
  %2707 = vmatpush1.bf16.msra.mxu0 %v2129
  %2708 = vmatprep.subr.bf16.mxu0 %v2138
  %2709 = vmatpush1.bf16.msra.mxu0 %v2137
  %2710 = vmatprep.subr.bf16.mxu0 %v2146
  %2711 = vmatpush1.bf16.msra.mxu0 %v2145
  %2712 = vmatprep.subr.bf16.mxu0 %v2154
  %2713 = vmatpush1.bf16.msra.mxu0 %v2153
  %2714 = vmatprep.subr.bf16.mxu0 %v2162
  %2715 = vmatpush1.bf16.msra.mxu0 %v2161
  %2716 = vmatprep.subr.bf16.mxu0 %v2170
  %2717 = vmatpush1.bf16.msra.mxu0 %v2169
  %2718 = vmatprep.subr.bf16.mxu0 %v2178
  %2719 = vmatpush1.bf16.msra.mxu0 %v2177
  %2720 = vmatprep.subr.bf16.mxu0 %v2186
  %2721 = vmatpush1.bf16.msra.mxu0 %v2185
  %2722 = vmatprep.subr.bf16.mxu0 %v2194
  %2723 = vmatpush1.bf16.msra.mxu0 %v2193
  %2724 = vmatprep.subr.bf16.mxu0 %v2202
  %2725 = vmatpush1.bf16.msra.mxu0 %v2201
  %2726 = vmatprep.subr.bf16.mxu0 %v2210
  %2727 = vmatpush1.bf16.msra.mxu0 %v2209
  %2728 = vmatprep.subr.bf16.mxu0 %v2218
  %2729 = vmatpush1.bf16.msra.mxu0 %v2217
  %2730 = vmatprep.mubr.bf16.mxu0 %v2545
  %2731 = vmatmul.mubr.bf16.gmra.mrb[0].mxu0 %v2697
  %v2732 = vpop.f32.mrb[0].mxu0
  %v2733 = vadd.f32 0.0, %v2732
  %v2734 = vpop.f32.mrb[0].mxu0
  %v2735 = vadd.f32 0.0, %v2734
  %v2736 = vpop.f32.mrb[0].mxu0
  %v2737 = vpop.f32.mrb[0].mxu0
  %2738 = vdwg.mxu0
  %2739 = vmatprep.subr.bf16.mxu0 %v2100
  %2740 = vmatpush1.bf16.msra.mxu0 %v2099
  %2741 = vmatprep.subr.bf16.mxu0 %v2108
  %2742 = vmatpush1.bf16.msra.mxu0 %v2107
  %2743 = vmatprep.subr.bf16.mxu0 %v2116
  %2744 = vmatpush1.bf16.msra.mxu0 %v2115
  %2745 = vmatprep.subr.bf16.mxu0 %v2124
  %2746 = vmatpush1.bf16.msra.mxu0 %v2123
  %2747 = vmatprep.subr.bf16.mxu0 %v2132
  %2748 = vmatpush1.bf16.msra.mxu0 %v2131
  %2749 = vmatprep.subr.bf16.mxu0 %v2140
  %2750 = vmatpush1.bf16.msra.mxu0 %v2139
  %2751 = vmatprep.subr.bf16.mxu0 %v2148
  %2752 = vmatpush1.bf16.msra.mxu0 %v2147
  %2753 = vmatprep.subr.bf16.mxu0 %v2156
  %2754 = vmatpush1.bf16.msra.mxu0 %v2155
  %2755 = vmatprep.subr.bf16.mxu0 %v2164
  %2756 = vmatpush1.bf16.msra.mxu0 %v2163
  %2757 = vmatprep.subr.bf16.mxu0 %v2172
  %2758 = vmatpush1.bf16.msra.mxu0 %v2171
  %2759 = vmatprep.subr.bf16.mxu0 %v2180
  %2760 = vmatpush1.bf16.msra.mxu0 %v2179
  %2761 = vmatprep.subr.bf16.mxu0 %v2188
  %2762 = vmatpush1.bf16.msra.mxu0 %v2187
  %2763 = vmatprep.subr.bf16.mxu0 %v2196
  %2764 = vmatpush1.bf16.msra.mxu0 %v2195
  %2765 = vmatprep.subr.bf16.mxu0 %v2204
  %2766 = vmatpush1.bf16.msra.mxu0 %v2203
  %2767 = vmatprep.subr.bf16.mxu0 %v2212
  %2768 = vmatpush1.bf16.msra.mxu0 %v2211
  %2769 = vmatprep.subr.bf16.mxu0 %v2220
  %2770 = vmatpush1.bf16.msra.mxu0 %v2219
  %2771 = vmatprep.mubr.bf16.mxu0 %v2545
  %2772 = vmatmul.mubr.bf16.gmra.mrb[0].mxu0 %v2697
  %v2773 = vpop.f32.mrb[0].mxu0
  %v2774 = vadd.f32 0.0, %v2773
  %v2775 = vpop.f32.mrb[0].mxu0
  %v2776 = vadd.f32 0.0, %v2775
  %v2777 = vpop.f32.mrb[0].mxu0
  %v2778 = vpop.f32.mrb[0].mxu0
  %2779 = vdwg.mxu0
  %2780 = vmatprep.subr.bf16.mxu0 %v2102
  %2781 = vmatpush1.bf16.msra.mxu0 %v2101
  %2782 = vmatprep.subr.bf16.mxu0 %v2110
  %2783 = vmatpush1.bf16.msra.mxu0 %v2109
  %2784 = vmatprep.subr.bf16.mxu0 %v2118
  %2785 = vmatpush1.bf16.msra.mxu0 %v2117
  %2786 = vmatprep.subr.bf16.mxu0 %v2126
  %2787 = vmatpush1.bf16.msra.mxu0 %v2125
  %2788 = vmatprep.subr.bf16.mxu0 %v2134
  %2789 = vmatpush1.bf16.msra.mxu0 %v2133
  %2790 = vmatprep.subr.bf16.mxu0 %v2142
  %2791 = vmatpush1.bf16.msra.mxu0 %v2141
  %2792 = vmatprep.subr.bf16.mxu0 %v2150
  %2793 = vmatpush1.bf16.msra.mxu0 %v2149
  %2794 = vmatprep.subr.bf16.mxu0 %v2158
  %2795 = vmatpush1.bf16.msra.mxu0 %v2157
  %2796 = vmatprep.subr.bf16.mxu0 %v2166
  %2797 = vmatpush1.bf16.msra.mxu0 %v2165
  %2798 = vmatprep.subr.bf16.mxu0 %v2174
  %2799 = vmatpush1.bf16.msra.mxu0 %v2173
  %2800 = vmatprep.subr.bf16.mxu0 %v2182
  %2801 = vmatpush1.bf16.msra.mxu0 %v2181
  %2802 = vmatprep.subr.bf16.mxu0 %v2190
  %2803 = vmatpush1.bf16.msra.mxu0 %v2189
  %2804 = vmatprep.subr.bf16.mxu0 %v2198
  %2805 = vmatpush1.bf16.msra.mxu0 %v2197
  %2806 = vmatprep.subr.bf16.mxu0 %v2206
  %2807 = vmatpush1.bf16.msra.mxu0 %v2205
  %2808 = vmatprep.subr.bf16.mxu0 %v2214
  %2809 = vmatpush1.bf16.msra.mxu0 %v2213
  %2810 = vmatprep.subr.bf16.mxu0 %v2222
  %2811 = vmatpush1.bf16.msra.mxu0 %v2221
  %2812 = vmatprep.mubr.bf16.mxu0 %v2545
  %2813 = vmatmul.mubr.bf16.gmra.mrb[0].mxu0 %v2697
  %v2814 = vpop.f32.mrb[0].mxu0
  %v2815 = vadd.f32 0.0, %v2814
  %v2816 = vpop.f32.mrb[0].mxu0
  %v2817 = vadd.f32 0.0, %v2816
  %v2818 = vpop.f32.mrb[0].mxu0
  %v2819 = vpop.f32.mrb[0].mxu0
  %2820 = vdwg.mxu0
  %2821 = vmatprep.subr.bf16.mxu0 %v2104
  %2822 = vmatpush1.bf16.msra.mxu0 %v2103
  %2823 = vmatprep.subr.bf16.mxu0 %v2112
  %2824 = vmatpush1.bf16.msra.mxu0 %v2111
  %2825 = vmatprep.subr.bf16.mxu0 %v2120
  %2826 = vmatpush1.bf16.msra.mxu0 %v2119
  %2827 = vmatprep.subr.bf16.mxu0 %v2128
  %2828 = vmatpush1.bf16.msra.mxu0 %v2127
  %2829 = vmatprep.subr.bf16.mxu0 %v2136
  %2830 = vmatpush1.bf16.msra.mxu0 %v2135
  %2831 = vmatprep.subr.bf16.mxu0 %v2144
  %2832 = vmatpush1.bf16.msra.mxu0 %v2143
  %2833 = vmatprep.subr.bf16.mxu0 %v2152
  %2834 = vmatpush1.bf16.msra.mxu0 %v2151
  %2835 = vmatprep.subr.bf16.mxu0 %v2160
  %2836 = vmatpush1.bf16.msra.mxu0 %v2159
  %2837 = vmatprep.subr.bf16.mxu0 %v2168
  %2838 = vmatpush1.bf16.msra.mxu0 %v2167
  %2839 = vmatprep.subr.bf16.mxu0 %v2176
  %2840 = vmatpush1.bf16.msra.mxu0 %v2175
  %2841 = vmatprep.subr.bf16.mxu0 %v2184
  %2842 = vmatpush1.bf16.msra.mxu0 %v2183
  %2843 = vmatprep.subr.bf16.mxu0 %v2192
  %2844 = vmatpush1.bf16.msra.mxu0 %v2191
  %2845 = vmatprep.subr.bf16.mxu0 %v2200
  %2846 = vmatpush1.bf16.msra.mxu0 %v2199
  %2847 = vmatprep.subr.bf16.mxu0 %v2208
  %2848 = vmatpush1.bf16.msra.mxu0 %v2207
  %2849 = vmatprep.subr.bf16.mxu0 %v2216
  %2850 = vmatpush1.bf16.msra.mxu0 %v2215
  %2851 = vmatprep.subr.bf16.mxu0 %v2224
  %2852 = vmatpush1.bf16.msra.mxu0 %v2223
  %2853 = vmatprep.mubr.bf16.mxu0 %v2545
  %2854 = vmatmul.mubr.bf16.gmra.mrb[0].mxu0 %v2697
  %v2855 = vpop.f32.mrb[0].mxu0
  %v2856 = vadd.f32 0.0, %v2855
  %v2857 = vpop.f32.mrb[0].mxu0
  %v2858 = vadd.f32 0.0, %v2857
  %v2859 = vpop.f32.mrb[0].mxu0
  %v2860 = vpop.f32.mrb[0].mxu0
  %2861 = vdwg.mxu0
  %v2862 = vadd.f32 %v2815, %v1655
  %v2863 = vadd.f32 %v2817, %v1659
  %v2864 = vadd.f32 %v2856, %v1663
  %v2865 = vadd.f32 %v2858, %v1667
  %v2866 = vxor.u32 %v2862, 2147483648
  %v2867 = vxor.u32 %v2863, 2147483648
  %v2868 = vxor.u32 %v2864, 2147483648
  %v2869 = vmul.f32 %v2866, 1.442695
  %v2870 = vpow.pop %v2869
  %v2871 = vmul.f32 %v2867, 1.442695
  %v2872 = vpow.pop %v2871
  %v2873 = vmul.f32 %v2868, 1.442695
  %v2874 = vpow.pop %v2873
  %v2875 = vadd.f32 %v2870, 1.0
  %v2876 = vadd.f32 %v2872, 1.0
  %v2877 = vadd.f32 %v2874, 1.0
  %v2878 = vrcp.pop %v2875
  %v2879 = vmul.f32 1.0, %v2878
  %v2880 = vrcp.pop %v2876
  %v2881 = vmul.f32 1.0, %v2880
  %v2882 = vrcp.pop %v2877
  %v2883 = vmul.f32 1.0, %v2882
  %v2884 = vtanh.pop %v2865
  %v2885 = vmul.f32 %v2881, %v2542
  %v2886 = vmul.f32 %v2879, %v2884
  %v2887 = vadd.f32 %v2885, %v2886
  %v2888 = vtanh.pop %v2887
  %v2889 = vmul.f32 %v2883, %v2888
  %v2890 = vpack.c.bf16 %v2889, %v2889
  %2891 = vmatprep.subr.bf16.mxu0 %v2595
  %2892 = vmatpush1.bf16.msra.mxu0 %v2594
  %2893 = vmatprep.subr.bf16.mxu0 %v2597
  %2894 = vmatpush1.bf16.msra.mxu0 %v2596
  %2895 = vmatprep.subr.bf16.mxu0 %v2599
  %2896 = vmatpush1.bf16.msra.mxu0 %v2598
  %2897 = vmatprep.subr.bf16.mxu0 %v2601
  %2898 = vmatpush1.bf16.msra.mxu0 %v2600
  %2899 = vmatprep.subr.bf16.mxu0 %v2603
  %2900 = vmatpush1.bf16.msra.mxu0 %v2602
  %2901 = vmatprep.subr.bf16.mxu0 %v2605
  %2902 = vmatpush1.bf16.msra.mxu0 %v2604
  %2903 = vmatprep.subr.bf16.mxu0 %v2607
  %2904 = vmatpush1.bf16.msra.mxu0 %v2606
  %2905 = vmatprep.subr.bf16.mxu0 %v2609
  %2906 = vmatpush1.bf16.msra.mxu0 %v2608
  %2907 = vmatprep.subr.bf16.mxu0 0
  %2908 = vmatpush1.bf16.msra.mxu0 0
  %2909 = vmatprep.subr.bf16.mxu0 0
  %2910 = vmatpush1.bf16.msra.mxu0 0
  %2911 = vmatprep.subr.bf16.mxu0 0
  %2912 = vmatpush1.bf16.msra.mxu0 0
  %2913 = vmatprep.subr.bf16.mxu0 0
  %2914 = vmatpush1.bf16.msra.mxu0 0
  %2915 = vmatprep.subr.bf16.mxu0 0
  %2916 = vmatpush1.bf16.msra.mxu0 0
  %2917 = vmatprep.subr.bf16.mxu0 0
  %2918 = vmatpush1.bf16.msra.mxu0 0
  %2919 = vmatprep.subr.bf16.mxu0 0
  %2920 = vmatpush1.bf16.msra.mxu0 0
  %2921 = vmatprep.subr.bf16.mxu0 0
  %2922 = vmatpush1.bf16.msra.mxu0 0
  %2923 = vmatprep.mubr.bf16.mxu0 0
  %2924 = vmatmul.mubr.bf16.gmra.mrb[0].mxu0 %v2890
  %v2925 = vpop.f32.mrb[0].mxu0
  %v2926 = vadd.f32 %v1677, %v2925
  %v2927 = vpop.f32.mrb[0].mxu0
  %v2928 = vadd.f32 %v1681, %v2927
  %v2929 = vpop.f32.mrb[0].mxu0
  %v2930 = vpop.f32.mrb[0].mxu0
  %2931 = vdwg.mxu0
  %2932 = vst [vmem:[%s15 + $0x10] sm:$0xff] %v2926
  %2933 = vst [vmem:[%s15 + $0x18] sm:$0xff] %v2928
  %v2934 = vadd.f32 %v1399, %v2733
  %v2935 = vadd.f32 %v1401, %v2735
  %v2936 = vadd.f32 %v1472, %v2774
  %v2937 = vadd.f32 %v1474, %v2776
  %v2938 = vxor.u32 %v2934, 2147483648
  %v2939 = vxor.u32 %v2935, 2147483648
  %v2940 = vxor.u32 %v2936, 2147483648
  %v2941 = vmul.f32 %v2938, 1.442695
  %v2942 = vpow.pop %v2941
  %v2943 = vmul.f32 %v2939, 1.442695
  %v2944 = vpow.pop %v2943
  %v2945 = vmul.f32 %v2940, 1.442695
  %v2946 = vpow.pop %v2945
  %v2947 = vadd.f32 %v2942, 1.0
  %v2948 = vadd.f32 %v2944, 1.0
  %v2949 = vadd.f32 %v2946, 1.0
  %v2950 = vrcp.pop %v2947
  %v2951 = vmul.f32 1.0, %v2950
  %v2952 = vrcp.pop %v2948
  %v2953 = vmul.f32 1.0, %v2952
  %v2954 = vrcp.pop %v2949
  %v2955 = vmul.f32 1.0, %v2954
  %v2956 = vtanh.pop %v2937
  %v2957 = vmul.f32 %v2953, %v2694
  %v2958 = vmul.f32 %v2951, %v2956
  %v2959 = vadd.f32 %v2957, %v2958
  %v2960 = vtanh.pop %v2959
  %v2961 = vmul.f32 %v2955, %v2960
  %v2962 = vpack.c.bf16 %v2961, %v2961
  %2963 = vmatprep.subr.bf16.mxu0 %v2098
  %2964 = vmatpush1.bf16.msra.mxu0 %v2097
  %2965 = vmatprep.subr.bf16.mxu0 %v2106
  %2966 = vmatpush1.bf16.msra.mxu0 %v2105
  %2967 = vmatprep.subr.bf16.mxu0 %v2114
  %2968 = vmatpush1.bf16.msra.mxu0 %v2113
  %2969 = vmatprep.subr.bf16.mxu0 %v2122
  %2970 = vmatpush1.bf16.msra.mxu0 %v2121
  %2971 = vmatprep.subr.bf16.mxu0 %v2130
  %2972 = vmatpush1.bf16.msra.mxu0 %v2129
  %2973 = vmatprep.subr.bf16.mxu0 %v2138
  %2974 = vmatpush1.bf16.msra.mxu0 %v2137
  %2975 = vmatprep.subr.bf16.mxu0 %v2146
  %2976 = vmatpush1.bf16.msra.mxu0 %v2145
  %2977 = vmatprep.subr.bf16.mxu0 %v2154
  %2978 = vmatpush1.bf16.msra.mxu0 %v2153
  %2979 = vmatprep.subr.bf16.mxu0 %v2162
  %2980 = vmatpush1.bf16.msra.mxu0 %v2161
  %2981 = vmatprep.subr.bf16.mxu0 %v2170
  %2982 = vmatpush1.bf16.msra.mxu0 %v2169
  %2983 = vmatprep.subr.bf16.mxu0 %v2178
  %2984 = vmatpush1.bf16.msra.mxu0 %v2177
  %2985 = vmatprep.subr.bf16.mxu0 %v2186
  %2986 = vmatpush1.bf16.msra.mxu0 %v2185
  %2987 = vmatprep.subr.bf16.mxu0 %v2194
  %2988 = vmatpush1.bf16.msra.mxu0 %v2193
  %2989 = vmatprep.subr.bf16.mxu0 %v2202
  %2990 = vmatpush1.bf16.msra.mxu0 %v2201
  %2991 = vmatprep.subr.bf16.mxu0 %v2210
  %2992 = vmatpush1.bf16.msra.mxu0 %v2209
  %2993 = vmatprep.subr.bf16.mxu0 %v2218
  %2994 = vmatpush1.bf16.msra.mxu0 %v2217
  %2995 = vmatprep.mubr.bf16.mxu0 %v2890
  %2996 = vmatmul.mubr.bf16.gmra.mrb[0].mxu0 %v2962
  %v2997 = vpop.f32.mrb[0].mxu0
  %v2998 = vadd.f32 0.0, %v2997
  %v2999 = vpop.f32.mrb[0].mxu0
  %v3000 = vadd.f32 0.0, %v2999
  %v3001 = vpop.f32.mrb[0].mxu0
  %v3002 = vpop.f32.mrb[0].mxu0
  %3003 = vdwg.mxu0
  %3004 = vmatprep.subr.bf16.mxu0 %v2100
  %3005 = vmatpush1.bf16.msra.mxu0 %v2099
  %3006 = vmatprep.subr.bf16.mxu0 %v2108
  %3007 = vmatpush1.bf16.msra.mxu0 %v2107
  %3008 = vmatprep.subr.bf16.mxu0 %v2116
  %3009 = vmatpush1.bf16.msra.mxu0 %v2115
  %3010 = vmatprep.subr.bf16.mxu0 %v2124
  %3011 = vmatpush1.bf16.msra.mxu0 %v2123
  %3012 = vmatprep.subr.bf16.mxu0 %v2132
  %3013 = vmatpush1.bf16.msra.mxu0 %v2131
  %3014 = vmatprep.subr.bf16.mxu0 %v2140
  %3015 = vmatpush1.bf16.msra.mxu0 %v2139
  %3016 = vmatprep.subr.bf16.mxu0 %v2148
  %3017 = vmatpush1.bf16.msra.mxu0 %v2147
  %3018 = vmatprep.subr.bf16.mxu0 %v2156
  %3019 = vmatpush1.bf16.msra.mxu0 %v2155
  %3020 = vmatprep.subr.bf16.mxu0 %v2164
  %3021 = vmatpush1.bf16.msra.mxu0 %v2163
  %3022 = vmatprep.subr.bf16.mxu0 %v2172
  %3023 = vmatpush1.bf16.msra.mxu0 %v2171
  %3024 = vmatprep.subr.bf16.mxu0 %v2180
  %3025 = vmatpush1.bf16.msra.mxu0 %v2179
  %3026 = vmatprep.subr.bf16.mxu0 %v2188
  %3027 = vmatpush1.bf16.msra.mxu0 %v2187
  %3028 = vmatprep.subr.bf16.mxu0 %v2196
  %3029 = vmatpush1.bf16.msra.mxu0 %v2195
  %3030 = vmatprep.subr.bf16.mxu0 %v2204
  %3031 = vmatpush1.bf16.msra.mxu0 %v2203
  %3032 = vmatprep.subr.bf16.mxu0 %v2212
  %3033 = vmatpush1.bf16.msra.mxu0 %v2211
  %3034 = vmatprep.subr.bf16.mxu0 %v2220
  %3035 = vmatpush1.bf16.msra.mxu0 %v2219
  %3036 = vmatprep.mubr.bf16.mxu0 %v2890
  %3037 = vmatmul.mubr.bf16.gmra.mrb[0].mxu0 %v2962
  %v3038 = vpop.f32.mrb[0].mxu0
  %v3039 = vadd.f32 0.0, %v3038
  %v3040 = vpop.f32.mrb[0].mxu0
  %v3041 = vadd.f32 0.0, %v3040
  %v3042 = vpop.f32.mrb[0].mxu0
  %v3043 = vpop.f32.mrb[0].mxu0
  %3044 = vdwg.mxu0
  %3045 = vmatprep.subr.bf16.mxu0 %v2102
  %3046 = vmatpush1.bf16.msra.mxu0 %v2101
  %3047 = vmatprep.subr.bf16.mxu0 %v2110
  %3048 = vmatpush1.bf16.msra.mxu0 %v2109
  %3049 = vmatprep.subr.bf16.mxu0 %v2118
  %3050 = vmatpush1.bf16.msra.mxu0 %v2117
  %3051 = vmatprep.subr.bf16.mxu0 %v2126
  %3052 = vmatpush1.bf16.msra.mxu0 %v2125
  %3053 = vmatprep.subr.bf16.mxu0 %v2134
  %3054 = vmatpush1.bf16.msra.mxu0 %v2133
  %3055 = vmatprep.subr.bf16.mxu0 %v2142
  %3056 = vmatpush1.bf16.msra.mxu0 %v2141
  %3057 = vmatprep.subr.bf16.mxu0 %v2150
  %3058 = vmatpush1.bf16.msra.mxu0 %v2149
  %3059 = vmatprep.subr.bf16.mxu0 %v2158
  %3060 = vmatpush1.bf16.msra.mxu0 %v2157
  %3061 = vmatprep.subr.bf16.mxu0 %v2166
  %3062 = vmatpush1.bf16.msra.mxu0 %v2165
  %3063 = vmatprep.subr.bf16.mxu0 %v2174
  %3064 = vmatpush1.bf16.msra.mxu0 %v2173
  %3065 = vmatprep.subr.bf16.mxu0 %v2182
  %3066 = vmatpush1.bf16.msra.mxu0 %v2181
  %3067 = vmatprep.subr.bf16.mxu0 %v2190
  %3068 = vmatpush1.bf16.msra.mxu0 %v2189
  %3069 = vmatprep.subr.bf16.mxu0 %v2198
  %3070 = vmatpush1.bf16.msra.mxu0 %v2197
  %3071 = vmatprep.subr.bf16.mxu0 %v2206
  %3072 = vmatpush1.bf16.msra.mxu0 %v2205
  %3073 = vmatprep.subr.bf16.mxu0 %v2214
  %3074 = vmatpush1.bf16.msra.mxu0 %v2213
  %3075 = vmatprep.subr.bf16.mxu0 %v2222
  %3076 = vmatpush1.bf16.msra.mxu0 %v2221
  %3077 = vmatprep.mubr.bf16.mxu0 %v2890
  %3078 = vmatmul.mubr.bf16.gmra.mrb[0].mxu0 %v2962
  %v3079 = vpop.f32.mrb[0].mxu0
  %v3080 = vadd.f32 0.0, %v3079
  %v3081 = vpop.f32.mrb[0].mxu0
  %v3082 = vadd.f32 0.0, %v3081
  %v3083 = vpop.f32.mrb[0].mxu0
  %v3084 = vpop.f32.mrb[0].mxu0
  %3085 = vdwg.mxu0
  %3086 = vmatprep.subr.bf16.mxu0 %v2104
  %3087 = vmatpush1.bf16.msra.mxu0 %v2103
  %3088 = vmatprep.subr.bf16.mxu0 %v2112
  %3089 = vmatpush1.bf16.msra.mxu0 %v2111
  %3090 = vmatprep.subr.bf16.mxu0 %v2120
  %3091 = vmatpush1.bf16.msra.mxu0 %v2119
  %3092 = vmatprep.subr.bf16.mxu0 %v2128
  %3093 = vmatpush1.bf16.msra.mxu0 %v2127
  %3094 = vmatprep.subr.bf16.mxu0 %v2136
  %3095 = vmatpush1.bf16.msra.mxu0 %v2135
  %3096 = vmatprep.subr.bf16.mxu0 %v2144
  %3097 = vmatpush1.bf16.msra.mxu0 %v2143
  %3098 = vmatprep.subr.bf16.mxu0 %v2152
  %3099 = vmatpush1.bf16.msra.mxu0 %v2151
  %3100 = vmatprep.subr.bf16.mxu0 %v2160
  %3101 = vmatpush1.bf16.msra.mxu0 %v2159
  %3102 = vmatprep.subr.bf16.mxu0 %v2168
  %3103 = vmatpush1.bf16.msra.mxu0 %v2167
  %3104 = vmatprep.subr.bf16.mxu0 %v2176
  %3105 = vmatpush1.bf16.msra.mxu0 %v2175
  %3106 = vmatprep.subr.bf16.mxu0 %v2184
  %3107 = vmatpush1.bf16.msra.mxu0 %v2183
  %3108 = vmatprep.subr.bf16.mxu0 %v2192
  %3109 = vmatpush1.bf16.msra.mxu0 %v2191
  %3110 = vmatprep.subr.bf16.mxu0 %v2200
  %3111 = vmatpush1.bf16.msra.mxu0 %v2199
  %3112 = vmatprep.subr.bf16.mxu0 %v2208
  %3113 = vmatpush1.bf16.msra.mxu0 %v2207
  %3114 = vmatprep.subr.bf16.mxu0 %v2216
  %3115 = vmatpush1.bf16.msra.mxu0 %v2215
  %3116 = vmatprep.subr.bf16.mxu0 %v2224
  %3117 = vmatpush1.bf16.msra.mxu0 %v2223
  %3118 = vmatprep.mubr.bf16.mxu0 %v2890
  %3119 = vmatmul.mubr.bf16.gmra.mrb[0].mxu0 %v2962
  %v3120 = vpop.f32.mrb[0].mxu0
  %v3121 = vadd.f32 0.0, %v3120
  %v3122 = vpop.f32.mrb[0].mxu0
  %v3123 = vadd.f32 0.0, %v3122
  %v3124 = vpop.f32.mrb[0].mxu0
  %v3125 = vpop.f32.mrb[0].mxu0
  %3126 = vdwg.mxu0
  %v3127 = vadd.f32 %v3080, %v1655
  %v3128 = vadd.f32 %v3082, %v1659
  %v3129 = vadd.f32 %v3121, %v1663
  %v3130 = vadd.f32 %v3123, %v1667
  %v3131 = vxor.u32 %v3127, 2147483648
  %v3132 = vxor.u32 %v3128, 2147483648
  %v3133 = vxor.u32 %v3129, 2147483648
  %v3134 = vmul.f32 %v3131, 1.442695
  %v3135 = vpow.pop %v3134
  %v3136 = vmul.f32 %v3132, 1.442695
  %v3137 = vpow.pop %v3136
  %v3138 = vmul.f32 %v3133, 1.442695
  %v3139 = vpow.pop %v3138
  %v3140 = vadd.f32 %v3135, 1.0
  %v3141 = vadd.f32 %v3137, 1.0
  %v3142 = vadd.f32 %v3139, 1.0
  %v3143 = vrcp.pop %v3140
  %v3144 = vmul.f32 1.0, %v3143
  %v3145 = vrcp.pop %v3141
  %v3146 = vmul.f32 1.0, %v3145
  %v3147 = vrcp.pop %v3142
  %v3148 = vmul.f32 1.0, %v3147
  %v3149 = vtanh.pop %v3130
  %v3150 = vmul.f32 %v3146, %v2887
  %v3151 = vmul.f32 %v3144, %v3149
  %v3152 = vadd.f32 %v3150, %v3151
  %v3153 = vtanh.pop %v3152
  %v3154 = vmul.f32 %v3148, %v3153
  %v3155 = vpack.c.bf16 %v3154, %v3154
  %3156 = vmatprep.subr.bf16.mxu0 %v2595
  %3157 = vmatpush1.bf16.msra.mxu0 %v2594
  %3158 = vmatprep.subr.bf16.mxu0 %v2597
  %3159 = vmatpush1.bf16.msra.mxu0 %v2596
  %3160 = vmatprep.subr.bf16.mxu0 %v2599
  %3161 = vmatpush1.bf16.msra.mxu0 %v2598
  %3162 = vmatprep.subr.bf16.mxu0 %v2601
  %3163 = vmatpush1.bf16.msra.mxu0 %v2600
  %3164 = vmatprep.subr.bf16.mxu0 %v2603
  %3165 = vmatpush1.bf16.msra.mxu0 %v2602
  %3166 = vmatprep.subr.bf16.mxu0 %v2605
  %3167 = vmatpush1.bf16.msra.mxu0 %v2604
  %3168 = vmatprep.subr.bf16.mxu0 %v2607
  %3169 = vmatpush1.bf16.msra.mxu0 %v2606
  %3170 = vmatprep.subr.bf16.mxu0 %v2609
  %3171 = vmatpush1.bf16.msra.mxu0 %v2608
  %3172 = vmatprep.subr.bf16.mxu0 0
  %3173 = vmatpush1.bf16.msra.mxu0 0
  %3174 = vmatprep.subr.bf16.mxu0 0
  %3175 = vmatpush1.bf16.msra.mxu0 0
  %3176 = vmatprep.subr.bf16.mxu0 0
  %3177 = vmatpush1.bf16.msra.mxu0 0
  %3178 = vmatprep.subr.bf16.mxu0 0
  %3179 = vmatpush1.bf16.msra.mxu0 0
  %3180 = vmatprep.subr.bf16.mxu0 0
  %3181 = vmatpush1.bf16.msra.mxu0 0
  %3182 = vmatprep.subr.bf16.mxu0 0
  %3183 = vmatpush1.bf16.msra.mxu0 0
  %3184 = vmatprep.subr.bf16.mxu0 0
  %3185 = vmatpush1.bf16.msra.mxu0 0
  %3186 = vmatprep.subr.bf16.mxu0 0
  %3187 = vmatpush1.bf16.msra.mxu0 0
  %3188 = vmatprep.mubr.bf16.mxu0 0
  %3189 = vmatmul.mubr.bf16.gmra.mrb[0].mxu0 %v3155
  %v3190 = vpop.f32.mrb[0].mxu0
  %v3191 = vadd.f32 %v1677, %v3190
  %v3192 = vpop.f32.mrb[0].mxu0
  %v3193 = vadd.f32 %v1681, %v3192
  %v3194 = vpop.f32.mrb[0].mxu0
  %v3195 = vpop.f32.mrb[0].mxu0
  %3196 = vdwg.mxu0
  %3197 = vst [vmem:[%s15 + $0x20] sm:$0xff] %v3191
  %3198 = vst [vmem:[%s15 + $0x28] sm:$0xff] %v3193
  %v3199 = vadd.f32 %v1405, %v2998
  %v3200 = vadd.f32 %v1407, %v3000
  %v3201 = vadd.f32 %v1478, %v3039
  %v3202 = vadd.f32 %v1480, %v3041
  %v3203 = vxor.u32 %v3199, 2147483648
  %v3204 = vxor.u32 %v3200, 2147483648
  %v3205 = vxor.u32 %v3201, 2147483648
  %v3206 = vmul.f32 %v3203, 1.442695
  %v3207 = vpow.pop %v3206
  %v3208 = vmul.f32 %v3204, 1.442695
  %v3209 = vpow.pop %v3208
  %v3210 = vmul.f32 %v3205, 1.442695
  %v3211 = vpow.pop %v3210
  %v3212 = vadd.f32 %v3207, 1.0
  %v3213 = vadd.f32 %v3209, 1.0
  %v3214 = vadd.f32 %v3211, 1.0
  %v3215 = vrcp.pop %v3212
  %v3216 = vmul.f32 1.0, %v3215
  %v3217 = vrcp.pop %v3213
  %v3218 = vmul.f32 1.0, %v3217
  %v3219 = vrcp.pop %v3214
  %v3220 = vmul.f32 1.0, %v3219
  %v3221 = vtanh.pop %v3202
  %v3222 = vmul.f32 %v3218, %v2959
  %v3223 = vmul.f32 %v3216, %v3221
  %v3224 = vadd.f32 %v3222, %v3223
  %v3225 = vtanh.pop %v3224
  %v3226 = vmul.f32 %v3220, %v3225
  %v3227 = vpack.c.bf16 %v3226, %v3226
  %3228 = vmatprep.subr.bf16.mxu0 %v2098
  %3229 = vmatpush1.bf16.msra.mxu0 %v2097
  %3230 = vmatprep.subr.bf16.mxu0 %v2106
  %3231 = vmatpush1.bf16.msra.mxu0 %v2105
  %3232 = vmatprep.subr.bf16.mxu0 %v2114
  %3233 = vmatpush1.bf16.msra.mxu0 %v2113
  %3234 = vmatprep.subr.bf16.mxu0 %v2122
  %3235 = vmatpush1.bf16.msra.mxu0 %v2121
  %3236 = vmatprep.subr.bf16.mxu0 %v2130
  %3237 = vmatpush1.bf16.msra.mxu0 %v2129
  %3238 = vmatprep.subr.bf16.mxu0 %v2138
  %3239 = vmatpush1.bf16.msra.mxu0 %v2137
  %3240 = vmatprep.subr.bf16.mxu0 %v2146
  %3241 = vmatpush1.bf16.msra.mxu0 %v2145
  %3242 = vmatprep.subr.bf16.mxu0 %v2154
  %3243 = vmatpush1.bf16.msra.mxu0 %v2153
  %3244 = vmatprep.subr.bf16.mxu0 %v2162
  %3245 = vmatpush1.bf16.msra.mxu0 %v2161
  %3246 = vmatprep.subr.bf16.mxu0 %v2170
  %3247 = vmatpush1.bf16.msra.mxu0 %v2169
  %3248 = vmatprep.subr.bf16.mxu0 %v2178
  %3249 = vmatpush1.bf16.msra.mxu0 %v2177
  %3250 = vmatprep.subr.bf16.mxu0 %v2186
  %3251 = vmatpush1.bf16.msra.mxu0 %v2185
  %3252 = vmatprep.subr.bf16.mxu0 %v2194
  %3253 = vmatpush1.bf16.msra.mxu0 %v2193
  %3254 = vmatprep.subr.bf16.mxu0 %v2202
  %3255 = vmatpush1.bf16.msra.mxu0 %v2201
  %3256 = vmatprep.subr.bf16.mxu0 %v2210
  %3257 = vmatpush1.bf16.msra.mxu0 %v2209
  %3258 = vmatprep.subr.bf16.mxu0 %v2218
  %3259 = vmatpush1.bf16.msra.mxu0 %v2217
  %3260 = vmatprep.mubr.bf16.mxu0 %v3155
  %3261 = vmatmul.mubr.bf16.gmra.mrb[0].mxu0 %v3227
  %v3262 = vpop.f32.mrb[0].mxu0
  %v3263 = vadd.f32 0.0, %v3262
  %v3264 = vpop.f32.mrb[0].mxu0
  %v3265 = vadd.f32 0.0, %v3264
  %v3266 = vpop.f32.mrb[0].mxu0
  %v3267 = vpop.f32.mrb[0].mxu0
  %3268 = vdwg.mxu0
  %3269 = vmatprep.subr.bf16.mxu0 %v2100
  %3270 = vmatpush1.bf16.msra.mxu0 %v2099
  %3271 = vmatprep.subr.bf16.mxu0 %v2108
  %3272 = vmatpush1.bf16.msra.mxu0 %v2107
  %3273 = vmatprep.subr.bf16.mxu0 %v2116
  %3274 = vmatpush1.bf16.msra.mxu0 %v2115
  %3275 = vmatprep.subr.bf16.mxu0 %v2124
  %3276 = vmatpush1.bf16.msra.mxu0 %v2123
  %3277 = vmatprep.subr.bf16.mxu0 %v2132
  %3278 = vmatpush1.bf16.msra.mxu0 %v2131
  %3279 = vmatprep.subr.bf16.mxu0 %v2140
  %3280 = vmatpush1.bf16.msra.mxu0 %v2139
  %3281 = vmatprep.subr.bf16.mxu0 %v2148
  %3282 = vmatpush1.bf16.msra.mxu0 %v2147
  %3283 = vmatprep.subr.bf16.mxu0 %v2156
  %3284 = vmatpush1.bf16.msra.mxu0 %v2155
  %3285 = vmatprep.subr.bf16.mxu0 %v2164
  %3286 = vmatpush1.bf16.msra.mxu0 %v2163
  %3287 = vmatprep.subr.bf16.mxu0 %v2172
  %3288 = vmatpush1.bf16.msra.mxu0 %v2171
  %3289 = vmatprep.subr.bf16.mxu0 %v2180
  %3290 = vmatpush1.bf16.msra.mxu0 %v2179
  %3291 = vmatprep.subr.bf16.mxu0 %v2188
  %3292 = vmatpush1.bf16.msra.mxu0 %v2187
  %3293 = vmatprep.subr.bf16.mxu0 %v2196
  %3294 = vmatpush1.bf16.msra.mxu0 %v2195
  %3295 = vmatprep.subr.bf16.mxu0 %v2204
  %3296 = vmatpush1.bf16.msra.mxu0 %v2203
  %3297 = vmatprep.subr.bf16.mxu0 %v2212
  %3298 = vmatpush1.bf16.msra.mxu0 %v2211
  %3299 = vmatprep.subr.bf16.mxu0 %v2220
  %3300 = vmatpush1.bf16.msra.mxu0 %v2219
  %3301 = vmatprep.mubr.bf16.mxu0 %v3155
  %3302 = vmatmul.mubr.bf16.gmra.mrb[0].mxu0 %v3227
  %v3303 = vpop.f32.mrb[0].mxu0
  %v3304 = vadd.f32 0.0, %v3303
  %v3305 = vpop.f32.mrb[0].mxu0
  %v3306 = vadd.f32 0.0, %v3305
  %v3307 = vpop.f32.mrb[0].mxu0
  %v3308 = vpop.f32.mrb[0].mxu0
  %3309 = vdwg.mxu0
  %3310 = vmatprep.subr.bf16.mxu0 %v2102
  %3311 = vmatpush1.bf16.msra.mxu0 %v2101
  %3312 = vmatprep.subr.bf16.mxu0 %v2110
  %3313 = vmatpush1.bf16.msra.mxu0 %v2109
  %3314 = vmatprep.subr.bf16.mxu0 %v2118
  %3315 = vmatpush1.bf16.msra.mxu0 %v2117
  %3316 = vmatprep.subr.bf16.mxu0 %v2126
  %3317 = vmatpush1.bf16.msra.mxu0 %v2125
  %3318 = vmatprep.subr.bf16.mxu0 %v2134
  %3319 = vmatpush1.bf16.msra.mxu0 %v2133
  %3320 = vmatprep.subr.bf16.mxu0 %v2142
  %3321 = vmatpush1.bf16.msra.mxu0 %v2141
  %3322 = vmatprep.subr.bf16.mxu0 %v2150
  %3323 = vmatpush1.bf16.msra.mxu0 %v2149
  %3324 = vmatprep.subr.bf16.mxu0 %v2158
  %3325 = vmatpush1.bf16.msra.mxu0 %v2157
  %3326 = vmatprep.subr.bf16.mxu0 %v2166
  %3327 = vmatpush1.bf16.msra.mxu0 %v2165
  %3328 = vmatprep.subr.bf16.mxu0 %v2174
  %3329 = vmatpush1.bf16.msra.mxu0 %v2173
  %3330 = vmatprep.subr.bf16.mxu0 %v2182
  %3331 = vmatpush1.bf16.msra.mxu0 %v2181
  %3332 = vmatprep.subr.bf16.mxu0 %v2190
  %3333 = vmatpush1.bf16.msra.mxu0 %v2189
  %3334 = vmatprep.subr.bf16.mxu0 %v2198
  %3335 = vmatpush1.bf16.msra.mxu0 %v2197
  %3336 = vmatprep.subr.bf16.mxu0 %v2206
  %3337 = vmatpush1.bf16.msra.mxu0 %v2205
  %3338 = vmatprep.subr.bf16.mxu0 %v2214
  %3339 = vmatpush1.bf16.msra.mxu0 %v2213
  %3340 = vmatprep.subr.bf16.mxu0 %v2222
  %3341 = vmatpush1.bf16.msra.mxu0 %v2221
  %3342 = vmatprep.mubr.bf16.mxu0 %v3155
  %3343 = vmatmul.mubr.bf16.gmra.mrb[0].mxu0 %v3227
  %v3344 = vpop.f32.mrb[0].mxu0
  %v3345 = vadd.f32 0.0, %v3344
  %v3346 = vpop.f32.mrb[0].mxu0
  %v3347 = vadd.f32 0.0, %v3346
  %v3348 = vpop.f32.mrb[0].mxu0
  %v3349 = vpop.f32.mrb[0].mxu0
  %3350 = vdwg.mxu0
  %3351 = vmatprep.subr.bf16.mxu0 %v2104
  %3352 = vmatpush1.bf16.msra.mxu0 %v2103
  %3353 = vmatprep.subr.bf16.mxu0 %v2112
  %3354 = vmatpush1.bf16.msra.mxu0 %v2111
  %3355 = vmatprep.subr.bf16.mxu0 %v2120
  %3356 = vmatpush1.bf16.msra.mxu0 %v2119
  %3357 = vmatprep.subr.bf16.mxu0 %v2128
  %3358 = vmatpush1.bf16.msra.mxu0 %v2127
  %3359 = vmatprep.subr.bf16.mxu0 %v2136
  %3360 = vmatpush1.bf16.msra.mxu0 %v2135
  %3361 = vmatprep.subr.bf16.mxu0 %v2144
  %3362 = vmatpush1.bf16.msra.mxu0 %v2143
  %3363 = vmatprep.subr.bf16.mxu0 %v2152
  %3364 = vmatpush1.bf16.msra.mxu0 %v2151
  %3365 = vmatprep.subr.bf16.mxu0 %v2160
  %3366 = vmatpush1.bf16.msra.mxu0 %v2159
  %3367 = vmatprep.subr.bf16.mxu0 %v2168
  %3368 = vmatpush1.bf16.msra.mxu0 %v2167
  %3369 = vmatprep.subr.bf16.mxu0 %v2176
  %3370 = vmatpush1.bf16.msra.mxu0 %v2175
  %3371 = vmatprep.subr.bf16.mxu0 %v2184
  %3372 = vmatpush1.bf16.msra.mxu0 %v2183
  %3373 = vmatprep.subr.bf16.mxu0 %v2192
  %3374 = vmatpush1.bf16.msra.mxu0 %v2191
  %3375 = vmatprep.subr.bf16.mxu0 %v2200
  %3376 = vmatpush1.bf16.msra.mxu0 %v2199
  %3377 = vmatprep.subr.bf16.mxu0 %v2208
  %3378 = vmatpush1.bf16.msra.mxu0 %v2207
  %3379 = vmatprep.subr.bf16.mxu0 %v2216
  %3380 = vmatpush1.bf16.msra.mxu0 %v2215
  %3381 = vmatprep.subr.bf16.mxu0 %v2224
  %3382 = vmatpush1.bf16.msra.mxu0 %v2223
  %3383 = vmatprep.mubr.bf16.mxu0 %v3155
  %3384 = vmatmul.mubr.bf16.gmra.mrb[0].mxu0 %v3227
  %v3385 = vpop.f32.mrb[0].mxu0
  %v3386 = vadd.f32 0.0, %v3385
  %v3387 = vpop.f32.mrb[0].mxu0
  %v3388 = vadd.f32 0.0, %v3387
  %v3389 = vpop.f32.mrb[0].mxu0
  %v3390 = vpop.f32.mrb[0].mxu0
  %3391 = vdwg.mxu0
  %v3392 = vadd.f32 %v3345, %v1655
  %v3393 = vadd.f32 %v3347, %v1659
  %v3394 = vadd.f32 %v3386, %v1663
  %v3395 = vadd.f32 %v3388, %v1667
  %v3396 = vxor.u32 %v3392, 2147483648
  %v3397 = vxor.u32 %v3393, 2147483648
  %v3398 = vxor.u32 %v3394, 2147483648
  %v3399 = vmul.f32 %v3396, 1.442695
  %v3400 = vpow.pop %v3399
  %v3401 = vmul.f32 %v3397, 1.442695
  %v3402 = vpow.pop %v3401
  %v3403 = vmul.f32 %v3398, 1.442695
  %v3404 = vpow.pop %v3403
  %v3405 = vadd.f32 %v3400, 1.0
  %v3406 = vadd.f32 %v3402, 1.0
  %v3407 = vadd.f32 %v3404, 1.0
  %v3408 = vrcp.pop %v3405
  %v3409 = vmul.f32 1.0, %v3408
  %v3410 = vrcp.pop %v3406
  %v3411 = vmul.f32 1.0, %v3410
  %v3412 = vrcp.pop %v3407
  %v3413 = vmul.f32 1.0, %v3412
  %v3414 = vtanh.pop %v3395
  %v3415 = vmul.f32 %v3411, %v3152
  %v3416 = vmul.f32 %v3409, %v3414
  %v3417 = vadd.f32 %v3415, %v3416
  %v3418 = vtanh.pop %v3417
  %v3419 = vmul.f32 %v3413, %v3418
  %v3420 = vpack.c.bf16 %v3419, %v3419
  %3421 = vmatprep.subr.bf16.mxu0 %v2595
  %3422 = vmatpush1.bf16.msra.mxu0 %v2594
  %3423 = vmatprep.subr.bf16.mxu0 %v2597
  %3424 = vmatpush1.bf16.msra.mxu0 %v2596
  %3425 = vmatprep.subr.bf16.mxu0 %v2599
  %3426 = vmatpush1.bf16.msra.mxu0 %v2598
  %3427 = vmatprep.subr.bf16.mxu0 %v2601
  %3428 = vmatpush1.bf16.msra.mxu0 %v2600
  %3429 = vmatprep.subr.bf16.mxu0 %v2603
  %3430 = vmatpush1.bf16.msra.mxu0 %v2602
  %3431 = vmatprep.subr.bf16.mxu0 %v2605
  %3432 = vmatpush1.bf16.msra.mxu0 %v2604
  %3433 = vmatprep.subr.bf16.mxu0 %v2607
  %3434 = vmatpush1.bf16.msra.mxu0 %v2606
  %3435 = vmatprep.subr.bf16.mxu0 %v2609
  %3436 = vmatpush1.bf16.msra.mxu0 %v2608
  %3437 = vmatprep.subr.bf16.mxu0 0
  %3438 = vmatpush1.bf16.msra.mxu0 0
  %3439 = vmatprep.subr.bf16.mxu0 0
  %3440 = vmatpush1.bf16.msra.mxu0 0
  %3441 = vmatprep.subr.bf16.mxu0 0
  %3442 = vmatpush1.bf16.msra.mxu0 0
  %3443 = vmatprep.subr.bf16.mxu0 0
  %3444 = vmatpush1.bf16.msra.mxu0 0
  %3445 = vmatprep.subr.bf16.mxu0 0
  %3446 = vmatpush1.bf16.msra.mxu0 0
  %3447 = vmatprep.subr.bf16.mxu0 0
  %3448 = vmatpush1.bf16.msra.mxu0 0
  %3449 = vmatprep.subr.bf16.mxu0 0
  %3450 = vmatpush1.bf16.msra.mxu0 0
  %3451 = vmatprep.subr.bf16.mxu0 0
  %3452 = vmatpush1.bf16.msra.mxu0 0
  %3453 = vmatprep.mubr.bf16.mxu0 0
  %3454 = vmatmul.mubr.bf16.gmra.mrb[0].mxu0 %v3420
  %v3455 = vpop.f32.mrb[0].mxu0
  %v3456 = vadd.f32 %v1677, %v3455
  %v3457 = vpop.f32.mrb[0].mxu0
  %v3458 = vadd.f32 %v1681, %v3457
  %v3459 = vpop.f32.mrb[0].mxu0
  %v3460 = vpop.f32.mrb[0].mxu0
  %3461 = vdwg.mxu0
  %3462 = vst [vmem:[%s15 + $0x30] sm:$0xff] %v3456
  %3463 = vst [vmem:[%s15 + $0x38] sm:$0xff] %v3458
  %v3464 = vadd.f32 %v1409, %v3263
  %v3465 = vadd.f32 %v1411, %v3265
  %v3466 = vadd.f32 %v1482, %v3304
  %v3467 = vadd.f32 %v1484, %v3306
  %v3468 = vxor.u32 %v3464, 2147483648
  %v3469 = vxor.u32 %v3465, 2147483648
  %v3470 = vxor.u32 %v3466, 2147483648
  %v3471 = vmul.f32 %v3468, 1.442695
  %v3472 = vpow.pop %v3471
  %v3473 = vmul.f32 %v3469, 1.442695
  %v3474 = vpow.pop %v3473
  %v3475 = vmul.f32 %v3470, 1.442695
  %v3476 = vpow.pop %v3475
  %v3477 = vadd.f32 %v3472, 1.0
  %v3478 = vadd.f32 %v3474, 1.0
  %v3479 = vadd.f32 %v3476, 1.0
  %v3480 = vrcp.pop %v3477
  %v3481 = vmul.f32 1.0, %v3480
  %v3482 = vrcp.pop %v3478
  %v3483 = vmul.f32 1.0, %v3482
  %v3484 = vrcp.pop %v3479
  %v3485 = vmul.f32 1.0, %v3484
  %v3486 = vtanh.pop %v3467
  %v3487 = vmul.f32 %v3483, %v3224
  %v3488 = vmul.f32 %v3481, %v3486
  %v3489 = vadd.f32 %v3487, %v3488
  %v3490 = vtanh.pop %v3489
  %v3491 = vmul.f32 %v3485, %v3490
  %v3492 = vpack.c.bf16 %v3491, %v3491
  %3493 = vmatprep.subr.bf16.mxu0 %v2098
  %3494 = vmatpush1.bf16.msra.mxu0 %v2097
  %3495 = vmatprep.subr.bf16.mxu0 %v2106
  %3496 = vmatpush1.bf16.msra.mxu0 %v2105
  %3497 = vmatprep.subr.bf16.mxu0 %v2114
  %3498 = vmatpush1.bf16.msra.mxu0 %v2113
  %3499 = vmatprep.subr.bf16.mxu0 %v2122
  %3500 = vmatpush1.bf16.msra.mxu0 %v2121
  %3501 = vmatprep.subr.bf16.mxu0 %v2130
  %3502 = vmatpush1.bf16.msra.mxu0 %v2129
  %3503 = vmatprep.subr.bf16.mxu0 %v2138
  %3504 = vmatpush1.bf16.msra.mxu0 %v2137
  %3505 = vmatprep.subr.bf16.mxu0 %v2146
  %3506 = vmatpush1.bf16.msra.mxu0 %v2145
  %3507 = vmatprep.subr.bf16.mxu0 %v2154
  %3508 = vmatpush1.bf16.msra.mxu0 %v2153
  %3509 = vmatprep.subr.bf16.mxu0 %v2162
  %3510 = vmatpush1.bf16.msra.mxu0 %v2161
  %3511 = vmatprep.subr.bf16.mxu0 %v2170
  %3512 = vmatpush1.bf16.msra.mxu0 %v2169
  %3513 = vmatprep.subr.bf16.mxu0 %v2178
  %3514 = vmatpush1.bf16.msra.mxu0 %v2177
  %3515 = vmatprep.subr.bf16.mxu0 %v2186
  %3516 = vmatpush1.bf16.msra.mxu0 %v2185
  %3517 = vmatprep.subr.bf16.mxu0 %v2194
  %3518 = vmatpush1.bf16.msra.mxu0 %v2193
  %3519 = vmatprep.subr.bf16.mxu0 %v2202
  %3520 = vmatpush1.bf16.msra.mxu0 %v2201
  %3521 = vmatprep.subr.bf16.mxu0 %v2210
  %3522 = vmatpush1.bf16.msra.mxu0 %v2209
  %3523 = vmatprep.subr.bf16.mxu0 %v2218
  %3524 = vmatpush1.bf16.msra.mxu0 %v2217
  %3525 = vmatprep.mubr.bf16.mxu0 %v3420
  %3526 = vmatmul.mubr.bf16.gmra.mrb[0].mxu0 %v3492
  %v3527 = vpop.f32.mrb[0].mxu0
  %v3528 = vadd.f32 0.0, %v3527
  %v3529 = vpop.f32.mrb[0].mxu0
  %v3530 = vadd.f32 0.0, %v3529
  %v3531 = vpop.f32.mrb[0].mxu0
  %v3532 = vpop.f32.mrb[0].mxu0
  %3533 = vdwg.mxu0
  %3534 = vmatprep.subr.bf16.mxu0 %v2100
  %3535 = vmatpush1.bf16.msra.mxu0 %v2099
  %3536 = vmatprep.subr.bf16.mxu0 %v2108
  %3537 = vmatpush1.bf16.msra.mxu0 %v2107
  %3538 = vmatprep.subr.bf16.mxu0 %v2116
  %3539 = vmatpush1.bf16.msra.mxu0 %v2115
  %3540 = vmatprep.subr.bf16.mxu0 %v2124
  %3541 = vmatpush1.bf16.msra.mxu0 %v2123
  %3542 = vmatprep.subr.bf16.mxu0 %v2132
  %3543 = vmatpush1.bf16.msra.mxu0 %v2131
  %3544 = vmatprep.subr.bf16.mxu0 %v2140
  %3545 = vmatpush1.bf16.msra.mxu0 %v2139
  %3546 = vmatprep.subr.bf16.mxu0 %v2148
  %3547 = vmatpush1.bf16.msra.mxu0 %v2147
  %3548 = vmatprep.subr.bf16.mxu0 %v2156
  %3549 = vmatpush1.bf16.msra.mxu0 %v2155
  %3550 = vmatprep.subr.bf16.mxu0 %v2164
  %3551 = vmatpush1.bf16.msra.mxu0 %v2163
  %3552 = vmatprep.subr.bf16.mxu0 %v2172
  %3553 = vmatpush1.bf16.msra.mxu0 %v2171
  %3554 = vmatprep.subr.bf16.mxu0 %v2180
  %3555 = vmatpush1.bf16.msra.mxu0 %v2179
  %3556 = vmatprep.subr.bf16.mxu0 %v2188
  %3557 = vmatpush1.bf16.msra.mxu0 %v2187
  %3558 = vmatprep.subr.bf16.mxu0 %v2196
  %3559 = vmatpush1.bf16.msra.mxu0 %v2195
  %3560 = vmatprep.subr.bf16.mxu0 %v2204
  %3561 = vmatpush1.bf16.msra.mxu0 %v2203
  %3562 = vmatprep.subr.bf16.mxu0 %v2212
  %3563 = vmatpush1.bf16.msra.mxu0 %v2211
  %3564 = vmatprep.subr.bf16.mxu0 %v2220
  %3565 = vmatpush1.bf16.msra.mxu0 %v2219
  %3566 = vmatprep.mubr.bf16.mxu0 %v3420
  %3567 = vmatmul.mubr.bf16.gmra.mrb[0].mxu0 %v3492
  %v3568 = vpop.f32.mrb[0].mxu0
  %v3569 = vadd.f32 0.0, %v3568
  %v3570 = vpop.f32.mrb[0].mxu0
  %v3571 = vadd.f32 0.0, %v3570
  %v3572 = vpop.f32.mrb[0].mxu0
  %v3573 = vpop.f32.mrb[0].mxu0
  %3574 = vdwg.mxu0
  %3575 = vmatprep.subr.bf16.mxu0 %v2102
  %3576 = vmatpush1.bf16.msra.mxu0 %v2101
  %3577 = vmatprep.subr.bf16.mxu0 %v2110
  %3578 = vmatpush1.bf16.msra.mxu0 %v2109
  %3579 = vmatprep.subr.bf16.mxu0 %v2118
  %3580 = vmatpush1.bf16.msra.mxu0 %v2117
  %3581 = vmatprep.subr.bf16.mxu0 %v2126
  %3582 = vmatpush1.bf16.msra.mxu0 %v2125
  %3583 = vmatprep.subr.bf16.mxu0 %v2134
  %3584 = vmatpush1.bf16.msra.mxu0 %v2133
  %3585 = vmatprep.subr.bf16.mxu0 %v2142
  %3586 = vmatpush1.bf16.msra.mxu0 %v2141
  %3587 = vmatprep.subr.bf16.mxu0 %v2150
  %3588 = vmatpush1.bf16.msra.mxu0 %v2149
  %3589 = vmatprep.subr.bf16.mxu0 %v2158
  %3590 = vmatpush1.bf16.msra.mxu0 %v2157
  %3591 = vmatprep.subr.bf16.mxu0 %v2166
  %3592 = vmatpush1.bf16.msra.mxu0 %v2165
  %3593 = vmatprep.subr.bf16.mxu0 %v2174
  %3594 = vmatpush1.bf16.msra.mxu0 %v2173
  %3595 = vmatprep.subr.bf16.mxu0 %v2182
  %3596 = vmatpush1.bf16.msra.mxu0 %v2181
  %3597 = vmatprep.subr.bf16.mxu0 %v2190
  %3598 = vmatpush1.bf16.msra.mxu0 %v2189
  %3599 = vmatprep.subr.bf16.mxu0 %v2198
  %3600 = vmatpush1.bf16.msra.mxu0 %v2197
  %3601 = vmatprep.subr.bf16.mxu0 %v2206
  %3602 = vmatpush1.bf16.msra.mxu0 %v2205
  %3603 = vmatprep.subr.bf16.mxu0 %v2214
  %3604 = vmatpush1.bf16.msra.mxu0 %v2213
  %3605 = vmatprep.subr.bf16.mxu0 %v2222
  %3606 = vmatpush1.bf16.msra.mxu0 %v2221
  %3607 = vmatprep.mubr.bf16.mxu0 %v3420
  %3608 = vmatmul.mubr.bf16.gmra.mrb[0].mxu0 %v3492
  %v3609 = vpop.f32.mrb[0].mxu0
  %v3610 = vadd.f32 0.0, %v3609
  %v3611 = vpop.f32.mrb[0].mxu0
  %v3612 = vadd.f32 0.0, %v3611
  %v3613 = vpop.f32.mrb[0].mxu0
  %v3614 = vpop.f32.mrb[0].mxu0
  %3615 = vdwg.mxu0
  %3616 = vmatprep.subr.bf16.mxu0 %v2104
  %3617 = vmatpush1.bf16.msra.mxu0 %v2103
  %3618 = vmatprep.subr.bf16.mxu0 %v2112
  %3619 = vmatpush1.bf16.msra.mxu0 %v2111
  %3620 = vmatprep.subr.bf16.mxu0 %v2120
  %3621 = vmatpush1.bf16.msra.mxu0 %v2119
  %3622 = vmatprep.subr.bf16.mxu0 %v2128
  %3623 = vmatpush1.bf16.msra.mxu0 %v2127
  %3624 = vmatprep.subr.bf16.mxu0 %v2136
  %3625 = vmatpush1.bf16.msra.mxu0 %v2135
  %3626 = vmatprep.subr.bf16.mxu0 %v2144
  %3627 = vmatpush1.bf16.msra.mxu0 %v2143
  %3628 = vmatprep.subr.bf16.mxu0 %v2152
  %3629 = vmatpush1.bf16.msra.mxu0 %v2151
  %3630 = vmatprep.subr.bf16.mxu0 %v2160
  %3631 = vmatpush1.bf16.msra.mxu0 %v2159
  %3632 = vmatprep.subr.bf16.mxu0 %v2168
  %3633 = vmatpush1.bf16.msra.mxu0 %v2167
  %3634 = vmatprep.subr.bf16.mxu0 %v2176
  %3635 = vmatpush1.bf16.msra.mxu0 %v2175
  %3636 = vmatprep.subr.bf16.mxu0 %v2184
  %3637 = vmatpush1.bf16.msra.mxu0 %v2183
  %3638 = vmatprep.subr.bf16.mxu0 %v2192
  %3639 = vmatpush1.bf16.msra.mxu0 %v2191
  %3640 = vmatprep.subr.bf16.mxu0 %v2200
  %3641 = vmatpush1.bf16.msra.mxu0 %v2199
  %3642 = vmatprep.subr.bf16.mxu0 %v2208
  %3643 = vmatpush1.bf16.msra.mxu0 %v2207
  %3644 = vmatprep.subr.bf16.mxu0 %v2216
  %3645 = vmatpush1.bf16.msra.mxu0 %v2215
  %3646 = vmatprep.subr.bf16.mxu0 %v2224
  %3647 = vmatpush1.bf16.msra.mxu0 %v2223
  %3648 = vmatprep.mubr.bf16.mxu0 %v3420
  %3649 = vmatmul.mubr.bf16.gmra.mrb[0].mxu0 %v3492
  %v3650 = vpop.f32.mrb[0].mxu0
  %v3651 = vadd.f32 0.0, %v3650
  %v3652 = vpop.f32.mrb[0].mxu0
  %v3653 = vadd.f32 0.0, %v3652
  %v3654 = vpop.f32.mrb[0].mxu0
  %v3655 = vpop.f32.mrb[0].mxu0
  %3656 = vdwg.mxu0
  %v3657 = vadd.f32 %v3610, %v1655
  %v3658 = vadd.f32 %v3612, %v1659
  %v3659 = vadd.f32 %v3651, %v1663
  %v3660 = vadd.f32 %v3653, %v1667
  %v3661 = vxor.u32 %v3657, 2147483648
  %v3662 = vxor.u32 %v3658, 2147483648
  %v3663 = vxor.u32 %v3659, 2147483648
  %v3664 = vmul.f32 %v3661, 1.442695
  %v3665 = vpow.pop %v3664
  %v3666 = vmul.f32 %v3662, 1.442695
  %v3667 = vpow.pop %v3666
  %v3668 = vmul.f32 %v3663, 1.442695
  %v3669 = vpow.pop %v3668
  %v3670 = vadd.f32 %v3665, 1.0
  %v3671 = vadd.f32 %v3667, 1.0
  %v3672 = vadd.f32 %v3669, 1.0
  %v3673 = vrcp.pop %v3670
  %v3674 = vmul.f32 1.0, %v3673
  %v3675 = vrcp.pop %v3671
  %v3676 = vmul.f32 1.0, %v3675
  %v3677 = vrcp.pop %v3672
  %v3678 = vmul.f32 1.0, %v3677
  %v3679 = vtanh.pop %v3660
  %v3680 = vmul.f32 %v3676, %v3417
  %v3681 = vmul.f32 %v3674, %v3679
  %v3682 = vadd.f32 %v3680, %v3681
  %v3683 = vtanh.pop %v3682
  %v3684 = vmul.f32 %v3678, %v3683
  %v3685 = vpack.c.bf16 %v3684, %v3684
  %3686 = vmatprep.subr.bf16.mxu0 %v2595
  %3687 = vmatpush1.bf16.msra.mxu0 %v2594
  %3688 = vmatprep.subr.bf16.mxu0 %v2597
  %3689 = vmatpush1.bf16.msra.mxu0 %v2596
  %3690 = vmatprep.subr.bf16.mxu0 %v2599
  %3691 = vmatpush1.bf16.msra.mxu0 %v2598
  %3692 = vmatprep.subr.bf16.mxu0 %v2601
  %3693 = vmatpush1.bf16.msra.mxu0 %v2600
  %3694 = vmatprep.subr.bf16.mxu0 %v2603
  %3695 = vmatpush1.bf16.msra.mxu0 %v2602
  %3696 = vmatprep.subr.bf16.mxu0 %v2605
  %3697 = vmatpush1.bf16.msra.mxu0 %v2604
  %3698 = vmatprep.subr.bf16.mxu0 %v2607
  %3699 = vmatpush1.bf16.msra.mxu0 %v2606
  %3700 = vmatprep.subr.bf16.mxu0 %v2609
  %3701 = vmatpush1.bf16.msra.mxu0 %v2608
  %3702 = vmatprep.subr.bf16.mxu0 0
  %3703 = vmatpush1.bf16.msra.mxu0 0
  %3704 = vmatprep.subr.bf16.mxu0 0
  %3705 = vmatpush1.bf16.msra.mxu0 0
  %3706 = vmatprep.subr.bf16.mxu0 0
  %3707 = vmatpush1.bf16.msra.mxu0 0
  %3708 = vmatprep.subr.bf16.mxu0 0
  %3709 = vmatpush1.bf16.msra.mxu0 0
  %3710 = vmatprep.subr.bf16.mxu0 0
  %3711 = vmatpush1.bf16.msra.mxu0 0
  %3712 = vmatprep.subr.bf16.mxu0 0
  %3713 = vmatpush1.bf16.msra.mxu0 0
  %3714 = vmatprep.subr.bf16.mxu0 0
  %3715 = vmatpush1.bf16.msra.mxu0 0
  %3716 = vmatprep.subr.bf16.mxu0 0
  %3717 = vmatpush1.bf16.msra.mxu0 0
  %3718 = vmatprep.mubr.bf16.mxu0 0
  %3719 = vmatmul.mubr.bf16.gmra.mrb[0].mxu0 %v3685
  %v3720 = vpop.f32.mrb[0].mxu0
  %v3721 = vadd.f32 %v1677, %v3720
  %v3722 = vpop.f32.mrb[0].mxu0
  %v3723 = vadd.f32 %v1681, %v3722
  %v3724 = vpop.f32.mrb[0].mxu0
  %v3725 = vpop.f32.mrb[0].mxu0
  %3726 = vdwg.mxu0
  %3727 = vst [vmem:[%s15 + $0x40] sm:$0xff] %v3721
  %3728 = vst [vmem:[%s15 + $0x48] sm:$0xff] %v3723
  %v3729 = vadd.f32 %v1415, %v3528
  %v3730 = vadd.f32 %v1417, %v3530
  %v3731 = vadd.f32 %v1488, %v3569
  %v3732 = vadd.f32 %v1490, %v3571
  %v3733 = vxor.u32 %v3729, 2147483648
  %v3734 = vxor.u32 %v3730, 2147483648
  %v3735 = vxor.u32 %v3731, 2147483648
  %v3736 = vmul.f32 %v3733, 1.442695
  %v3737 = vpow.pop %v3736
  %v3738 = vmul.f32 %v3734, 1.442695
  %v3739 = vpow.pop %v3738
  %v3740 = vmul.f32 %v3735, 1.442695
  %v3741 = vpow.pop %v3740
  %v3742 = vadd.f32 %v3737, 1.0
  %v3743 = vadd.f32 %v3739, 1.0
  %v3744 = vadd.f32 %v3741, 1.0
  %v3745 = vrcp.pop %v3742
  %v3746 = vmul.f32 1.0, %v3745
  %v3747 = vrcp.pop %v3743
  %v3748 = vmul.f32 1.0, %v3747
  %v3749 = vrcp.pop %v3744
  %v3750 = vmul.f32 1.0, %v3749
  %v3751 = vtanh.pop %v3732
  %v3752 = vmul.f32 %v3748, %v3489
  %v3753 = vmul.f32 %v3746, %v3751
  %v3754 = vadd.f32 %v3752, %v3753
  %v3755 = vtanh.pop %v3754
  %v3756 = vmul.f32 %v3750, %v3755
  %v3757 = vpack.c.bf16 %v3756, %v3756
  %3758 = vmatprep.subr.bf16.mxu0 %v2098
  %3759 = vmatpush1.bf16.msra.mxu0 %v2097
  %3760 = vmatprep.subr.bf16.mxu0 %v2106
  %3761 = vmatpush1.bf16.msra.mxu0 %v2105
  %3762 = vmatprep.subr.bf16.mxu0 %v2114
  %3763 = vmatpush1.bf16.msra.mxu0 %v2113
  %3764 = vmatprep.subr.bf16.mxu0 %v2122
  %3765 = vmatpush1.bf16.msra.mxu0 %v2121
  %3766 = vmatprep.subr.bf16.mxu0 %v2130
  %3767 = vmatpush1.bf16.msra.mxu0 %v2129
  %3768 = vmatprep.subr.bf16.mxu0 %v2138
  %3769 = vmatpush1.bf16.msra.mxu0 %v2137
  %3770 = vmatprep.subr.bf16.mxu0 %v2146
  %3771 = vmatpush1.bf16.msra.mxu0 %v2145
  %3772 = vmatprep.subr.bf16.mxu0 %v2154
  %3773 = vmatpush1.bf16.msra.mxu0 %v2153
  %3774 = vmatprep.subr.bf16.mxu0 %v2162
  %3775 = vmatpush1.bf16.msra.mxu0 %v2161
  %3776 = vmatprep.subr.bf16.mxu0 %v2170
  %3777 = vmatpush1.bf16.msra.mxu0 %v2169
  %3778 = vmatprep.subr.bf16.mxu0 %v2178
  %3779 = vmatpush1.bf16.msra.mxu0 %v2177
  %3780 = vmatprep.subr.bf16.mxu0 %v2186
  %3781 = vmatpush1.bf16.msra.mxu0 %v2185
  %3782 = vmatprep.subr.bf16.mxu0 %v2194
  %3783 = vmatpush1.bf16.msra.mxu0 %v2193
  %3784 = vmatprep.subr.bf16.mxu0 %v2202
  %3785 = vmatpush1.bf16.msra.mxu0 %v2201
  %3786 = vmatprep.subr.bf16.mxu0 %v2210
  %3787 = vmatpush1.bf16.msra.mxu0 %v2209
  %3788 = vmatprep.subr.bf16.mxu0 %v2218
  %3789 = vmatpush1.bf16.msra.mxu0 %v2217
  %3790 = vmatprep.mubr.bf16.mxu0 %v3685
  %3791 = vmatmul.mubr.bf16.gmra.mrb[0].mxu0 %v3757
  %v3792 = vpop.f32.mrb[0].mxu0
  %v3793 = vadd.f32 0.0, %v3792
  %v3794 = vpop.f32.mrb[0].mxu0
  %v3795 = vadd.f32 0.0, %v3794
  %v3796 = vpop.f32.mrb[0].mxu0
  %v3797 = vpop.f32.mrb[0].mxu0
  %3798 = vdwg.mxu0
  %3799 = vmatprep.subr.bf16.mxu0 %v2100
  %3800 = vmatpush1.bf16.msra.mxu0 %v2099
  %3801 = vmatprep.subr.bf16.mxu0 %v2108
  %3802 = vmatpush1.bf16.msra.mxu0 %v2107
  %3803 = vmatprep.subr.bf16.mxu0 %v2116
  %3804 = vmatpush1.bf16.msra.mxu0 %v2115
  %3805 = vmatprep.subr.bf16.mxu0 %v2124
  %3806 = vmatpush1.bf16.msra.mxu0 %v2123
  %3807 = vmatprep.subr.bf16.mxu0 %v2132
  %3808 = vmatpush1.bf16.msra.mxu0 %v2131
  %3809 = vmatprep.subr.bf16.mxu0 %v2140
  %3810 = vmatpush1.bf16.msra.mxu0 %v2139
  %3811 = vmatprep.subr.bf16.mxu0 %v2148
  %3812 = vmatpush1.bf16.msra.mxu0 %v2147
  %3813 = vmatprep.subr.bf16.mxu0 %v2156
  %3814 = vmatpush1.bf16.msra.mxu0 %v2155
  %3815 = vmatprep.subr.bf16.mxu0 %v2164
  %3816 = vmatpush1.bf16.msra.mxu0 %v2163
  %3817 = vmatprep.subr.bf16.mxu0 %v2172
  %3818 = vmatpush1.bf16.msra.mxu0 %v2171
  %3819 = vmatprep.subr.bf16.mxu0 %v2180
  %3820 = vmatpush1.bf16.msra.mxu0 %v2179
  %3821 = vmatprep.subr.bf16.mxu0 %v2188
  %3822 = vmatpush1.bf16.msra.mxu0 %v2187
  %3823 = vmatprep.subr.bf16.mxu0 %v2196
  %3824 = vmatpush1.bf16.msra.mxu0 %v2195
  %3825 = vmatprep.subr.bf16.mxu0 %v2204
  %3826 = vmatpush1.bf16.msra.mxu0 %v2203
  %3827 = vmatprep.subr.bf16.mxu0 %v2212
  %3828 = vmatpush1.bf16.msra.mxu0 %v2211
  %3829 = vmatprep.subr.bf16.mxu0 %v2220
  %3830 = vmatpush1.bf16.msra.mxu0 %v2219
  %3831 = vmatprep.mubr.bf16.mxu0 %v3685
  %3832 = vmatmul.mubr.bf16.gmra.mrb[0].mxu0 %v3757
  %v3833 = vpop.f32.mrb[0].mxu0
  %v3834 = vadd.f32 0.0, %v3833
  %v3835 = vpop.f32.mrb[0].mxu0
  %v3836 = vadd.f32 0.0, %v3835
  %v3837 = vpop.f32.mrb[0].mxu0
  %v3838 = vpop.f32.mrb[0].mxu0
  %3839 = vdwg.mxu0
  %3840 = vmatprep.subr.bf16.mxu0 %v2102
  %3841 = vmatpush1.bf16.msra.mxu0 %v2101
  %3842 = vmatprep.subr.bf16.mxu0 %v2110
  %3843 = vmatpush1.bf16.msra.mxu0 %v2109
  %3844 = vmatprep.subr.bf16.mxu0 %v2118
  %3845 = vmatpush1.bf16.msra.mxu0 %v2117
  %3846 = vmatprep.subr.bf16.mxu0 %v2126
  %3847 = vmatpush1.bf16.msra.mxu0 %v2125
  %3848 = vmatprep.subr.bf16.mxu0 %v2134
  %3849 = vmatpush1.bf16.msra.mxu0 %v2133
  %3850 = vmatprep.subr.bf16.mxu0 %v2142
  %3851 = vmatpush1.bf16.msra.mxu0 %v2141
  %3852 = vmatprep.subr.bf16.mxu0 %v2150
  %3853 = vmatpush1.bf16.msra.mxu0 %v2149
  %3854 = vmatprep.subr.bf16.mxu0 %v2158
  %3855 = vmatpush1.bf16.msra.mxu0 %v2157
  %3856 = vmatprep.subr.bf16.mxu0 %v2166
  %3857 = vmatpush1.bf16.msra.mxu0 %v2165
  %3858 = vmatprep.subr.bf16.mxu0 %v2174
  %3859 = vmatpush1.bf16.msra.mxu0 %v2173
  %3860 = vmatprep.subr.bf16.mxu0 %v2182
  %3861 = vmatpush1.bf16.msra.mxu0 %v2181
  %3862 = vmatprep.subr.bf16.mxu0 %v2190
  %3863 = vmatpush1.bf16.msra.mxu0 %v2189
  %3864 = vmatprep.subr.bf16.mxu0 %v2198
  %3865 = vmatpush1.bf16.msra.mxu0 %v2197
  %3866 = vmatprep.subr.bf16.mxu0 %v2206
  %3867 = vmatpush1.bf16.msra.mxu0 %v2205
  %3868 = vmatprep.subr.bf16.mxu0 %v2214
  %3869 = vmatpush1.bf16.msra.mxu0 %v2213
  %3870 = vmatprep.subr.bf16.mxu0 %v2222
  %3871 = vmatpush1.bf16.msra.mxu0 %v2221
  %3872 = vmatprep.mubr.bf16.mxu0 %v3685
  %3873 = vmatmul.mubr.bf16.gmra.mrb[0].mxu0 %v3757
  %v3874 = vpop.f32.mrb[0].mxu0
  %v3875 = vadd.f32 0.0, %v3874
  %v3876 = vpop.f32.mrb[0].mxu0
  %v3877 = vadd.f32 0.0, %v3876
  %v3878 = vpop.f32.mrb[0].mxu0
  %v3879 = vpop.f32.mrb[0].mxu0
  %3880 = vdwg.mxu0
  %3881 = vmatprep.subr.bf16.mxu0 %v2104
  %3882 = vmatpush1.bf16.msra.mxu0 %v2103
  %3883 = vmatprep.subr.bf16.mxu0 %v2112
  %3884 = vmatpush1.bf16.msra.mxu0 %v2111
  %3885 = vmatprep.subr.bf16.mxu0 %v2120
  %3886 = vmatpush1.bf16.msra.mxu0 %v2119
  %3887 = vmatprep.subr.bf16.mxu0 %v2128
  %3888 = vmatpush1.bf16.msra.mxu0 %v2127
  %3889 = vmatprep.subr.bf16.mxu0 %v2136
  %3890 = vmatpush1.bf16.msra.mxu0 %v2135
  %3891 = vmatprep.subr.bf16.mxu0 %v2144
  %3892 = vmatpush1.bf16.msra.mxu0 %v2143
  %3893 = vmatprep.subr.bf16.mxu0 %v2152
  %3894 = vmatpush1.bf16.msra.mxu0 %v2151
  %3895 = vmatprep.subr.bf16.mxu0 %v2160
  %3896 = vmatpush1.bf16.msra.mxu0 %v2159
  %3897 = vmatprep.subr.bf16.mxu0 %v2168
  %3898 = vmatpush1.bf16.msra.mxu0 %v2167
  %3899 = vmatprep.subr.bf16.mxu0 %v2176
  %3900 = vmatpush1.bf16.msra.mxu0 %v2175
  %3901 = vmatprep.subr.bf16.mxu0 %v2184
  %3902 = vmatpush1.bf16.msra.mxu0 %v2183
  %3903 = vmatprep.subr.bf16.mxu0 %v2192
  %3904 = vmatpush1.bf16.msra.mxu0 %v2191
  %3905 = vmatprep.subr.bf16.mxu0 %v2200
  %3906 = vmatpush1.bf16.msra.mxu0 %v2199
  %3907 = vmatprep.subr.bf16.mxu0 %v2208
  %3908 = vmatpush1.bf16.msra.mxu0 %v2207
  %3909 = vmatprep.subr.bf16.mxu0 %v2216
  %3910 = vmatpush1.bf16.msra.mxu0 %v2215
  %3911 = vmatprep.subr.bf16.mxu0 %v2224
  %3912 = vmatpush1.bf16.msra.mxu0 %v2223
  %3913 = vmatprep.mubr.bf16.mxu0 %v3685
  %3914 = vmatmul.mubr.bf16.gmra.mrb[0].mxu0 %v3757
  %v3915 = vpop.f32.mrb[0].mxu0
  %v3916 = vadd.f32 0.0, %v3915
  %v3917 = vpop.f32.mrb[0].mxu0
  %v3918 = vadd.f32 0.0, %v3917
  %v3919 = vpop.f32.mrb[0].mxu0
  %v3920 = vpop.f32.mrb[0].mxu0
  %3921 = vdwg.mxu0
  %v3922 = vadd.f32 %v3875, %v1655
  %v3923 = vadd.f32 %v3877, %v1659
  %v3924 = vadd.f32 %v3916, %v1663
  %v3925 = vadd.f32 %v3918, %v1667
  %v3926 = vxor.u32 %v3922, 2147483648
  %v3927 = vxor.u32 %v3923, 2147483648
  %v3928 = vxor.u32 %v3924, 2147483648
  %v3929 = vmul.f32 %v3926, 1.442695
  %v3930 = vpow.pop %v3929
  %v3931 = vmul.f32 %v3927, 1.442695
  %v3932 = vpow.pop %v3931
  %v3933 = vmul.f32 %v3928, 1.442695
  %v3934 = vpow.pop %v3933
  %v3935 = vadd.f32 %v3930, 1.0
  %v3936 = vadd.f32 %v3932, 1.0
  %v3937 = vadd.f32 %v3934, 1.0
  %v3938 = vrcp.pop %v3935
  %v3939 = vmul.f32 1.0, %v3938
  %v3940 = vrcp.pop %v3936
  %v3941 = vmul.f32 1.0, %v3940
  %v3942 = vrcp.pop %v3937
  %v3943 = vmul.f32 1.0, %v3942
  %v3944 = vtanh.pop %v3925
  %v3945 = vmul.f32 %v3941, %v3682
  %v3946 = vmul.f32 %v3939, %v3944
  %v3947 = vadd.f32 %v3945, %v3946
  %v3948 = vtanh.pop %v3947
  %v3949 = vmul.f32 %v3943, %v3948
  %v3950 = vpack.c.bf16 %v3949, %v3949
  %3951 = vmatprep.subr.bf16.mxu0 %v2595
  %3952 = vmatpush1.bf16.msra.mxu0 %v2594
  %3953 = vmatprep.subr.bf16.mxu0 %v2597
  %3954 = vmatpush1.bf16.msra.mxu0 %v2596
  %3955 = vmatprep.subr.bf16.mxu0 %v2599
  %3956 = vmatpush1.bf16.msra.mxu0 %v2598
  %3957 = vmatprep.subr.bf16.mxu0 %v2601
  %3958 = vmatpush1.bf16.msra.mxu0 %v2600
  %3959 = vmatprep.subr.bf16.mxu0 %v2603
  %3960 = vmatpush1.bf16.msra.mxu0 %v2602
  %3961 = vmatprep.subr.bf16.mxu0 %v2605
  %3962 = vmatpush1.bf16.msra.mxu0 %v2604
  %3963 = vmatprep.subr.bf16.mxu0 %v2607
  %3964 = vmatpush1.bf16.msra.mxu0 %v2606
  %3965 = vmatprep.subr.bf16.mxu0 %v2609
  %3966 = vmatpush1.bf16.msra.mxu0 %v2608
  %3967 = vmatprep.subr.bf16.mxu0 0
  %3968 = vmatpush1.bf16.msra.mxu0 0
  %3969 = vmatprep.subr.bf16.mxu0 0
  %3970 = vmatpush1.bf16.msra.mxu0 0
  %3971 = vmatprep.subr.bf16.mxu0 0
  %3972 = vmatpush1.bf16.msra.mxu0 0
  %3973 = vmatprep.subr.bf16.mxu0 0
  %3974 = vmatpush1.bf16.msra.mxu0 0
  %3975 = vmatprep.subr.bf16.mxu0 0
  %3976 = vmatpush1.bf16.msra.mxu0 0
  %3977 = vmatprep.subr.bf16.mxu0 0
  %3978 = vmatpush1.bf16.msra.mxu0 0
  %3979 = vmatprep.subr.bf16.mxu0 0
  %3980 = vmatpush1.bf16.msra.mxu0 0
  %3981 = vmatprep.subr.bf16.mxu0 0
  %3982 = vmatpush1.bf16.msra.mxu0 0
  %3983 = vmatprep.mubr.bf16.mxu0 0
  %3984 = vmatmul.mubr.bf16.gmra.mrb[0].mxu0 %v3950
  %v3985 = vpop.f32.mrb[0].mxu0
  %v3986 = vadd.f32 %v1677, %v3985
  %v3987 = vpop.f32.mrb[0].mxu0
  %v3988 = vadd.f32 %v1681, %v3987
  %v3989 = vpop.f32.mrb[0].mxu0
  %v3990 = vpop.f32.mrb[0].mxu0
  %3991 = vdwg.mxu0
  %3992 = vst [vmem:[%s15 + $0x50] sm:$0xff] %v3986
  %3993 = vst [vmem:[%s15 + $0x58] sm:$0xff] %v3988
  %v3994 = vadd.f32 %v1419, %v3793
  %v3995 = vadd.f32 %v1421, %v3795
  %v3996 = vadd.f32 %v1492, %v3834
  %v3997 = vadd.f32 %v1494, %v3836
  %v3998 = vxor.u32 %v3994, 2147483648
  %v3999 = vxor.u32 %v3995, 2147483648
  %v4000 = vxor.u32 %v3996, 2147483648
  %v4001 = vmul.f32 %v3998, 1.442695
  %v4002 = vpow.pop %v4001
  %v4003 = vmul.f32 %v3999, 1.442695
  %v4004 = vpow.pop %v4003
  %v4005 = vmul.f32 %v4000, 1.442695
  %v4006 = vpow.pop %v4005
  %v4007 = vadd.f32 %v4002, 1.0
  %v4008 = vadd.f32 %v4004, 1.0
  %v4009 = vadd.f32 %v4006, 1.0
  %v4010 = vrcp.pop %v4007
  %v4011 = vmul.f32 1.0, %v4010
  %v4012 = vrcp.pop %v4008
  %v4013 = vmul.f32 1.0, %v4012
  %v4014 = vrcp.pop %v4009
  %v4015 = vmul.f32 1.0, %v4014
  %v4016 = vtanh.pop %v3997
  %v4017 = vmul.f32 %v4013, %v3754
  %v4018 = vmul.f32 %v4011, %v4016
  %v4019 = vadd.f32 %v4017, %v4018
  %v4020 = vtanh.pop %v4019
  %v4021 = vmul.f32 %v4015, %v4020
  %v4022 = vpack.c.bf16 %v4021, %v4021
  %4023 = vmatprep.subr.bf16.mxu0 %v2098
  %4024 = vmatpush1.bf16.msra.mxu0 %v2097
  %4025 = vmatprep.subr.bf16.mxu0 %v2106
  %4026 = vmatpush1.bf16.msra.mxu0 %v2105
  %4027 = vmatprep.subr.bf16.mxu0 %v2114
  %4028 = vmatpush1.bf16.msra.mxu0 %v2113
  %4029 = vmatprep.subr.bf16.mxu0 %v2122
  %4030 = vmatpush1.bf16.msra.mxu0 %v2121
  %4031 = vmatprep.subr.bf16.mxu0 %v2130
  %4032 = vmatpush1.bf16.msra.mxu0 %v2129
  %4033 = vmatprep.subr.bf16.mxu0 %v2138
  %4034 = vmatpush1.bf16.msra.mxu0 %v2137
  %4035 = vmatprep.subr.bf16.mxu0 %v2146
  %4036 = vmatpush1.bf16.msra.mxu0 %v2145
  %4037 = vmatprep.subr.bf16.mxu0 %v2154
  %4038 = vmatpush1.bf16.msra.mxu0 %v2153
  %4039 = vmatprep.subr.bf16.mxu0 %v2162
  %4040 = vmatpush1.bf16.msra.mxu0 %v2161
  %4041 = vmatprep.subr.bf16.mxu0 %v2170
  %4042 = vmatpush1.bf16.msra.mxu0 %v2169
  %4043 = vmatprep.subr.bf16.mxu0 %v2178
  %4044 = vmatpush1.bf16.msra.mxu0 %v2177
  %4045 = vmatprep.subr.bf16.mxu0 %v2186
  %4046 = vmatpush1.bf16.msra.mxu0 %v2185
  %4047 = vmatprep.subr.bf16.mxu0 %v2194
  %4048 = vmatpush1.bf16.msra.mxu0 %v2193
  %4049 = vmatprep.subr.bf16.mxu0 %v2202
  %4050 = vmatpush1.bf16.msra.mxu0 %v2201
  %4051 = vmatprep.subr.bf16.mxu0 %v2210
  %4052 = vmatpush1.bf16.msra.mxu0 %v2209
  %4053 = vmatprep.subr.bf16.mxu0 %v2218
  %4054 = vmatpush1.bf16.msra.mxu0 %v2217
  %4055 = vmatprep.mubr.bf16.mxu0 %v3950
  %4056 = vmatmul.mubr.bf16.gmra.mrb[0].mxu0 %v4022
  %v4057 = vpop.f32.mrb[0].mxu0
  %v4058 = vadd.f32 0.0, %v4057
  %v4059 = vpop.f32.mrb[0].mxu0
  %v4060 = vadd.f32 0.0, %v4059
  %v4061 = vpop.f32.mrb[0].mxu0
  %v4062 = vpop.f32.mrb[0].mxu0
  %4063 = vdwg.mxu0
  %4064 = vmatprep.subr.bf16.mxu0 %v2100
  %4065 = vmatpush1.bf16.msra.mxu0 %v2099
  %4066 = vmatprep.subr.bf16.mxu0 %v2108
  %4067 = vmatpush1.bf16.msra.mxu0 %v2107
  %4068 = vmatprep.subr.bf16.mxu0 %v2116
  %4069 = vmatpush1.bf16.msra.mxu0 %v2115
  %4070 = vmatprep.subr.bf16.mxu0 %v2124
  %4071 = vmatpush1.bf16.msra.mxu0 %v2123
  %4072 = vmatprep.subr.bf16.mxu0 %v2132
  %4073 = vmatpush1.bf16.msra.mxu0 %v2131
  %4074 = vmatprep.subr.bf16.mxu0 %v2140
  %4075 = vmatpush1.bf16.msra.mxu0 %v2139
  %4076 = vmatprep.subr.bf16.mxu0 %v2148
  %4077 = vmatpush1.bf16.msra.mxu0 %v2147
  %4078 = vmatprep.subr.bf16.mxu0 %v2156
  %4079 = vmatpush1.bf16.msra.mxu0 %v2155
  %4080 = vmatprep.subr.bf16.mxu0 %v2164
  %4081 = vmatpush1.bf16.msra.mxu0 %v2163
  %4082 = vmatprep.subr.bf16.mxu0 %v2172
  %4083 = vmatpush1.bf16.msra.mxu0 %v2171
  %4084 = vmatprep.subr.bf16.mxu0 %v2180
  %4085 = vmatpush1.bf16.msra.mxu0 %v2179
  %4086 = vmatprep.subr.bf16.mxu0 %v2188
  %4087 = vmatpush1.bf16.msra.mxu0 %v2187
  %4088 = vmatprep.subr.bf16.mxu0 %v2196
  %4089 = vmatpush1.bf16.msra.mxu0 %v2195
  %4090 = vmatprep.subr.bf16.mxu0 %v2204
  %4091 = vmatpush1.bf16.msra.mxu0 %v2203
  %4092 = vmatprep.subr.bf16.mxu0 %v2212
  %4093 = vmatpush1.bf16.msra.mxu0 %v2211
  %4094 = vmatprep.subr.bf16.mxu0 %v2220
  %4095 = vmatpush1.bf16.msra.mxu0 %v2219
  %4096 = vmatprep.mubr.bf16.mxu0 %v3950
  %4097 = vmatmul.mubr.bf16.gmra.mrb[0].mxu0 %v4022
  %v4098 = vpop.f32.mrb[0].mxu0
  %v4099 = vadd.f32 0.0, %v4098
  %v4100 = vpop.f32.mrb[0].mxu0
  %v4101 = vadd.f32 0.0, %v4100
  %v4102 = vpop.f32.mrb[0].mxu0
  %v4103 = vpop.f32.mrb[0].mxu0
  %4104 = vdwg.mxu0
  %4105 = vmatprep.subr.bf16.mxu0 %v2102
  %4106 = vmatpush1.bf16.msra.mxu0 %v2101
  %4107 = vmatprep.subr.bf16.mxu0 %v2110
  %4108 = vmatpush1.bf16.msra.mxu0 %v2109
  %4109 = vmatprep.subr.bf16.mxu0 %v2118
  %4110 = vmatpush1.bf16.msra.mxu0 %v2117
  %4111 = vmatprep.subr.bf16.mxu0 %v2126
  %4112 = vmatpush1.bf16.msra.mxu0 %v2125
  %4113 = vmatprep.subr.bf16.mxu0 %v2134
  %4114 = vmatpush1.bf16.msra.mxu0 %v2133
  %4115 = vmatprep.subr.bf16.mxu0 %v2142
  %4116 = vmatpush1.bf16.msra.mxu0 %v2141
  %4117 = vmatprep.subr.bf16.mxu0 %v2150
  %4118 = vmatpush1.bf16.msra.mxu0 %v2149
  %4119 = vmatprep.subr.bf16.mxu0 %v2158
  %4120 = vmatpush1.bf16.msra.mxu0 %v2157
  %4121 = vmatprep.subr.bf16.mxu0 %v2166
  %4122 = vmatpush1.bf16.msra.mxu0 %v2165
  %4123 = vmatprep.subr.bf16.mxu0 %v2174
  %4124 = vmatpush1.bf16.msra.mxu0 %v2173
  %4125 = vmatprep.subr.bf16.mxu0 %v2182
  %4126 = vmatpush1.bf16.msra.mxu0 %v2181
  %4127 = vmatprep.subr.bf16.mxu0 %v2190
  %4128 = vmatpush1.bf16.msra.mxu0 %v2189
  %4129 = vmatprep.subr.bf16.mxu0 %v2198
  %4130 = vmatpush1.bf16.msra.mxu0 %v2197
  %4131 = vmatprep.subr.bf16.mxu0 %v2206
  %4132 = vmatpush1.bf16.msra.mxu0 %v2205
  %4133 = vmatprep.subr.bf16.mxu0 %v2214
  %4134 = vmatpush1.bf16.msra.mxu0 %v2213
  %4135 = vmatprep.subr.bf16.mxu0 %v2222
  %4136 = vmatpush1.bf16.msra.mxu0 %v2221
  %4137 = vmatprep.mubr.bf16.mxu0 %v3950
  %4138 = vmatmul.mubr.bf16.gmra.mrb[0].mxu0 %v4022
  %v4139 = vpop.f32.mrb[0].mxu0
  %v4140 = vadd.f32 0.0, %v4139
  %v4141 = vpop.f32.mrb[0].mxu0
  %v4142 = vadd.f32 0.0, %v4141
  %v4143 = vpop.f32.mrb[0].mxu0
  %v4144 = vpop.f32.mrb[0].mxu0
  %4145 = vdwg.mxu0
  %4146 = vmatprep.subr.bf16.mxu0 %v2104
  %4147 = vmatpush1.bf16.msra.mxu0 %v2103
  %4148 = vmatprep.subr.bf16.mxu0 %v2112
  %4149 = vmatpush1.bf16.msra.mxu0 %v2111
  %4150 = vmatprep.subr.bf16.mxu0 %v2120
  %4151 = vmatpush1.bf16.msra.mxu0 %v2119
  %4152 = vmatprep.subr.bf16.mxu0 %v2128
  %4153 = vmatpush1.bf16.msra.mxu0 %v2127
  %4154 = vmatprep.subr.bf16.mxu0 %v2136
  %4155 = vmatpush1.bf16.msra.mxu0 %v2135
  %4156 = vmatprep.subr.bf16.mxu0 %v2144
  %4157 = vmatpush1.bf16.msra.mxu0 %v2143
  %4158 = vmatprep.subr.bf16.mxu0 %v2152
  %4159 = vmatpush1.bf16.msra.mxu0 %v2151
  %4160 = vmatprep.subr.bf16.mxu0 %v2160
  %4161 = vmatpush1.bf16.msra.mxu0 %v2159
  %4162 = vmatprep.subr.bf16.mxu0 %v2168
  %4163 = vmatpush1.bf16.msra.mxu0 %v2167
  %4164 = vmatprep.subr.bf16.mxu0 %v2176
  %4165 = vmatpush1.bf16.msra.mxu0 %v2175
  %4166 = vmatprep.subr.bf16.mxu0 %v2184
  %4167 = vmatpush1.bf16.msra.mxu0 %v2183
  %4168 = vmatprep.subr.bf16.mxu0 %v2192
  %4169 = vmatpush1.bf16.msra.mxu0 %v2191
  %4170 = vmatprep.subr.bf16.mxu0 %v2200
  %4171 = vmatpush1.bf16.msra.mxu0 %v2199
  %4172 = vmatprep.subr.bf16.mxu0 %v2208
  %4173 = vmatpush1.bf16.msra.mxu0 %v2207
  %4174 = vmatprep.subr.bf16.mxu0 %v2216
  %4175 = vmatpush1.bf16.msra.mxu0 %v2215
  %4176 = vmatprep.subr.bf16.mxu0 %v2224
  %4177 = vmatpush1.bf16.msra.mxu0 %v2223
  %4178 = vmatprep.mubr.bf16.mxu0 %v3950
  %4179 = vmatmul.mubr.bf16.gmra.mrb[0].mxu0 %v4022
  %v4180 = vpop.f32.mrb[0].mxu0
  %v4181 = vadd.f32 0.0, %v4180
  %v4182 = vpop.f32.mrb[0].mxu0
  %v4183 = vadd.f32 0.0, %v4182
  %v4184 = vpop.f32.mrb[0].mxu0
  %v4185 = vpop.f32.mrb[0].mxu0
  %4186 = vdwg.mxu0
  %v4187 = vadd.f32 %v4140, %v1655
  %v4188 = vadd.f32 %v4142, %v1659
  %v4189 = vadd.f32 %v4181, %v1663
  %v4190 = vadd.f32 %v4183, %v1667
  %v4191 = vxor.u32 %v4187, 2147483648
  %v4192 = vxor.u32 %v4188, 2147483648
  %v4193 = vxor.u32 %v4189, 2147483648
  %v4194 = vmul.f32 %v4191, 1.442695
  %v4195 = vpow.pop %v4194
  %v4196 = vmul.f32 %v4192, 1.442695
  %v4197 = vpow.pop %v4196
  %v4198 = vmul.f32 %v4193, 1.442695
  %v4199 = vpow.pop %v4198
  %v4200 = vadd.f32 %v4195, 1.0
  %v4201 = vadd.f32 %v4197, 1.0
  %v4202 = vadd.f32 %v4199, 1.0
  %v4203 = vrcp.pop %v4200
  %v4204 = vmul.f32 1.0, %v4203
  %v4205 = vrcp.pop %v4201
  %v4206 = vmul.f32 1.0, %v4205
  %v4207 = vrcp.pop %v4202
  %v4208 = vmul.f32 1.0, %v4207
  %v4209 = vtanh.pop %v4190
  %v4210 = vmul.f32 %v4206, %v3947
  %v4211 = vmul.f32 %v4204, %v4209
  %v4212 = vadd.f32 %v4210, %v4211
  %v4213 = vtanh.pop %v4212
  %v4214 = vmul.f32 %v4208, %v4213
  %v4215 = vpack.c.bf16 %v4214, %v4214
  %4216 = vmatprep.subr.bf16.mxu0 %v2595
  %4217 = vmatpush1.bf16.msra.mxu0 %v2594
  %4218 = vmatprep.subr.bf16.mxu0 %v2597
  %4219 = vmatpush1.bf16.msra.mxu0 %v2596
  %4220 = vmatprep.subr.bf16.mxu0 %v2599
  %4221 = vmatpush1.bf16.msra.mxu0 %v2598
  %4222 = vmatprep.subr.bf16.mxu0 %v2601
  %4223 = vmatpush1.bf16.msra.mxu0 %v2600
  %4224 = vmatprep.subr.bf16.mxu0 %v2603
  %4225 = vmatpush1.bf16.msra.mxu0 %v2602
  %4226 = vmatprep.subr.bf16.mxu0 %v2605
  %4227 = vmatpush1.bf16.msra.mxu0 %v2604
  %4228 = vmatprep.subr.bf16.mxu0 %v2607
  %4229 = vmatpush1.bf16.msra.mxu0 %v2606
  %4230 = vmatprep.subr.bf16.mxu0 %v2609
  %4231 = vmatpush1.bf16.msra.mxu0 %v2608
  %4232 = vmatprep.subr.bf16.mxu0 0
  %4233 = vmatpush1.bf16.msra.mxu0 0
  %4234 = vmatprep.subr.bf16.mxu0 0
  %4235 = vmatpush1.bf16.msra.mxu0 0
  %4236 = vmatprep.subr.bf16.mxu0 0
  %4237 = vmatpush1.bf16.msra.mxu0 0
  %4238 = vmatprep.subr.bf16.mxu0 0
  %4239 = vmatpush1.bf16.msra.mxu0 0
  %4240 = vmatprep.subr.bf16.mxu0 0
  %4241 = vmatpush1.bf16.msra.mxu0 0
  %4242 = vmatprep.subr.bf16.mxu0 0
  %4243 = vmatpush1.bf16.msra.mxu0 0
  %4244 = vmatprep.subr.bf16.mxu0 0
  %4245 = vmatpush1.bf16.msra.mxu0 0
  %4246 = vmatprep.subr.bf16.mxu0 0
  %4247 = vmatpush1.bf16.msra.mxu0 0
  %4248 = vmatprep.mubr.bf16.mxu0 0
  %4249 = vmatmul.mubr.bf16.gmra.mrb[0].mxu0 %v4215
  %v4250 = vpop.f32.mrb[0].mxu0
  %v4251 = vadd.f32 %v1677, %v4250
  %v4252 = vpop.f32.mrb[0].mxu0
  %v4253 = vadd.f32 %v1681, %v4252
  %v4254 = vpop.f32.mrb[0].mxu0
  %v4255 = vpop.f32.mrb[0].mxu0
  %4256 = vdwg.mxu0
  %4257 = vst [vmem:[%s15 + $0x60] sm:$0xff] %v4251
  %4258 = vst [vmem:[%s15 + $0x68] sm:$0xff] %v4253
  %v4259 = vadd.f32 %v1425, %v4058
  %v4260 = vadd.f32 %v1427, %v4060
  %v4261 = vadd.f32 %v1498, %v4099
  %v4262 = vadd.f32 %v1500, %v4101
  %v4263 = vxor.u32 %v4259, 2147483648
  %v4264 = vxor.u32 %v4260, 2147483648
  %v4265 = vxor.u32 %v4261, 2147483648
  %v4266 = vmul.f32 %v4263, 1.442695
  %v4267 = vpow.pop %v4266
  %v4268 = vmul.f32 %v4264, 1.442695
  %v4269 = vpow.pop %v4268
  %v4270 = vmul.f32 %v4265, 1.442695
  %v4271 = vpow.pop %v4270
  %v4272 = vadd.f32 %v4267, 1.0
  %v4273 = vadd.f32 %v4269, 1.0
  %v4274 = vadd.f32 %v4271, 1.0
  %v4275 = vrcp.pop %v4272
  %v4276 = vmul.f32 1.0, %v4275
  %v4277 = vrcp.pop %v4273
  %v4278 = vmul.f32 1.0, %v4277
  %v4279 = vrcp.pop %v4274
  %v4280 = vmul.f32 1.0, %v4279
  %v4281 = vtanh.pop %v4262
  %v4282 = vmul.f32 %v4278, %v4019
  %v4283 = vmul.f32 %v4276, %v4281
  %v4284 = vadd.f32 %v4282, %v4283
  %v4285 = vtanh.pop %v4284
  %v4286 = vmul.f32 %v4280, %v4285
  %v4287 = vpack.c.bf16 %v4286, %v4286
  %4288 = vmatprep.subr.bf16.mxu0 %v2098
  %4289 = vmatpush1.bf16.msra.mxu0 %v2097
  %4290 = vmatprep.subr.bf16.mxu0 %v2106
  %4291 = vmatpush1.bf16.msra.mxu0 %v2105
  %4292 = vmatprep.subr.bf16.mxu0 %v2114
  %4293 = vmatpush1.bf16.msra.mxu0 %v2113
  %4294 = vmatprep.subr.bf16.mxu0 %v2122
  %4295 = vmatpush1.bf16.msra.mxu0 %v2121
  %4296 = vmatprep.subr.bf16.mxu0 %v2130
  %4297 = vmatpush1.bf16.msra.mxu0 %v2129
  %4298 = vmatprep.subr.bf16.mxu0 %v2138
  %4299 = vmatpush1.bf16.msra.mxu0 %v2137
  %4300 = vmatprep.subr.bf16.mxu0 %v2146
  %4301 = vmatpush1.bf16.msra.mxu0 %v2145
  %4302 = vmatprep.subr.bf16.mxu0 %v2154
  %4303 = vmatpush1.bf16.msra.mxu0 %v2153
  %4304 = vmatprep.subr.bf16.mxu0 %v2162
  %4305 = vmatpush1.bf16.msra.mxu0 %v2161
  %4306 = vmatprep.subr.bf16.mxu0 %v2170
  %4307 = vmatpush1.bf16.msra.mxu0 %v2169
  %4308 = vmatprep.subr.bf16.mxu0 %v2178
  %4309 = vmatpush1.bf16.msra.mxu0 %v2177
  %4310 = vmatprep.subr.bf16.mxu0 %v2186
  %4311 = vmatpush1.bf16.msra.mxu0 %v2185
  %4312 = vmatprep.subr.bf16.mxu0 %v2194
  %4313 = vmatpush1.bf16.msra.mxu0 %v2193
  %4314 = vmatprep.subr.bf16.mxu0 %v2202
  %4315 = vmatpush1.bf16.msra.mxu0 %v2201
  %4316 = vmatprep.subr.bf16.mxu0 %v2210
  %4317 = vmatpush1.bf16.msra.mxu0 %v2209
  %4318 = vmatprep.subr.bf16.mxu0 %v2218
  %4319 = vmatpush1.bf16.msra.mxu0 %v2217
  %4320 = vmatprep.mubr.bf16.mxu0 %v4215
  %4321 = vmatmul.mubr.bf16.gmra.mrb[0].mxu0 %v4287
  %v4322 = vpop.f32.mrb[0].mxu0
  %v4323 = vadd.f32 0.0, %v4322
  %v4324 = vpop.f32.mrb[0].mxu0
  %v4325 = vadd.f32 0.0, %v4324
  %v4326 = vpop.f32.mrb[0].mxu0
  %v4327 = vpop.f32.mrb[0].mxu0
  %4328 = vdwg.mxu0
  %4329 = vmatprep.subr.bf16.mxu0 %v2100
  %4330 = vmatpush1.bf16.msra.mxu0 %v2099
  %4331 = vmatprep.subr.bf16.mxu0 %v2108
  %4332 = vmatpush1.bf16.msra.mxu0 %v2107
  %4333 = vmatprep.subr.bf16.mxu0 %v2116
  %4334 = vmatpush1.bf16.msra.mxu0 %v2115
  %4335 = vmatprep.subr.bf16.mxu0 %v2124
  %4336 = vmatpush1.bf16.msra.mxu0 %v2123
  %4337 = vmatprep.subr.bf16.mxu0 %v2132
  %4338 = vmatpush1.bf16.msra.mxu0 %v2131
  %4339 = vmatprep.subr.bf16.mxu0 %v2140
  %4340 = vmatpush1.bf16.msra.mxu0 %v2139
  %4341 = vmatprep.subr.bf16.mxu0 %v2148
  %4342 = vmatpush1.bf16.msra.mxu0 %v2147
  %4343 = vmatprep.subr.bf16.mxu0 %v2156
  %4344 = vmatpush1.bf16.msra.mxu0 %v2155
  %4345 = vmatprep.subr.bf16.mxu0 %v2164
  %4346 = vmatpush1.bf16.msra.mxu0 %v2163
  %4347 = vmatprep.subr.bf16.mxu0 %v2172
  %4348 = vmatpush1.bf16.msra.mxu0 %v2171
  %4349 = vmatprep.subr.bf16.mxu0 %v2180
  %4350 = vmatpush1.bf16.msra.mxu0 %v2179
  %4351 = vmatprep.subr.bf16.mxu0 %v2188
  %4352 = vmatpush1.bf16.msra.mxu0 %v2187
  %4353 = vmatprep.subr.bf16.mxu0 %v2196
  %4354 = vmatpush1.bf16.msra.mxu0 %v2195
  %4355 = vmatprep.subr.bf16.mxu0 %v2204
  %4356 = vmatpush1.bf16.msra.mxu0 %v2203
  %4357 = vmatprep.subr.bf16.mxu0 %v2212
  %4358 = vmatpush1.bf16.msra.mxu0 %v2211
  %4359 = vmatprep.subr.bf16.mxu0 %v2220
  %4360 = vmatpush1.bf16.msra.mxu0 %v2219
  %4361 = vmatprep.mubr.bf16.mxu0 %v4215
  %4362 = vmatmul.mubr.bf16.gmra.mrb[0].mxu0 %v4287
  %v4363 = vpop.f32.mrb[0].mxu0
  %v4364 = vadd.f32 0.0, %v4363
  %v4365 = vpop.f32.mrb[0].mxu0
  %v4366 = vadd.f32 0.0, %v4365
  %v4367 = vpop.f32.mrb[0].mxu0
  %v4368 = vpop.f32.mrb[0].mxu0
  %4369 = vdwg.mxu0
  %4370 = vmatprep.subr.bf16.mxu0 %v2102
  %4371 = vmatpush1.bf16.msra.mxu0 %v2101
  %4372 = vmatprep.subr.bf16.mxu0 %v2110
  %4373 = vmatpush1.bf16.msra.mxu0 %v2109
  %4374 = vmatprep.subr.bf16.mxu0 %v2118
  %4375 = vmatpush1.bf16.msra.mxu0 %v2117
  %4376 = vmatprep.subr.bf16.mxu0 %v2126
  %4377 = vmatpush1.bf16.msra.mxu0 %v2125
  %4378 = vmatprep.subr.bf16.mxu0 %v2134
  %4379 = vmatpush1.bf16.msra.mxu0 %v2133
  %4380 = vmatprep.subr.bf16.mxu0 %v2142
  %4381 = vmatpush1.bf16.msra.mxu0 %v2141
  %4382 = vmatprep.subr.bf16.mxu0 %v2150
  %4383 = vmatpush1.bf16.msra.mxu0 %v2149
  %4384 = vmatprep.subr.bf16.mxu0 %v2158
  %4385 = vmatpush1.bf16.msra.mxu0 %v2157
  %4386 = vmatprep.subr.bf16.mxu0 %v2166
  %4387 = vmatpush1.bf16.msra.mxu0 %v2165
  %4388 = vmatprep.subr.bf16.mxu0 %v2174
  %4389 = vmatpush1.bf16.msra.mxu0 %v2173
  %4390 = vmatprep.subr.bf16.mxu0 %v2182
  %4391 = vmatpush1.bf16.msra.mxu0 %v2181
  %4392 = vmatprep.subr.bf16.mxu0 %v2190
  %4393 = vmatpush1.bf16.msra.mxu0 %v2189
  %4394 = vmatprep.subr.bf16.mxu0 %v2198
  %4395 = vmatpush1.bf16.msra.mxu0 %v2197
  %4396 = vmatprep.subr.bf16.mxu0 %v2206
  %4397 = vmatpush1.bf16.msra.mxu0 %v2205
  %4398 = vmatprep.subr.bf16.mxu0 %v2214
  %4399 = vmatpush1.bf16.msra.mxu0 %v2213
  %4400 = vmatprep.subr.bf16.mxu0 %v2222
  %4401 = vmatpush1.bf16.msra.mxu0 %v2221
  %4402 = vmatprep.mubr.bf16.mxu0 %v4215
  %4403 = vmatmul.mubr.bf16.gmra.mrb[0].mxu0 %v4287
  %v4404 = vpop.f32.mrb[0].mxu0
  %v4405 = vadd.f32 0.0, %v4404
  %v4406 = vpop.f32.mrb[0].mxu0
  %v4407 = vadd.f32 0.0, %v4406
  %v4408 = vpop.f32.mrb[0].mxu0
  %v4409 = vpop.f32.mrb[0].mxu0
  %4410 = vdwg.mxu0
  %4411 = vmatprep.subr.bf16.mxu0 %v2104
  %4412 = vmatpush1.bf16.msra.mxu0 %v2103
  %4413 = vmatprep.subr.bf16.mxu0 %v2112
  %4414 = vmatpush1.bf16.msra.mxu0 %v2111
  %4415 = vmatprep.subr.bf16.mxu0 %v2120
  %4416 = vmatpush1.bf16.msra.mxu0 %v2119
  %4417 = vmatprep.subr.bf16.mxu0 %v2128
  %4418 = vmatpush1.bf16.msra.mxu0 %v2127
  %4419 = vmatprep.subr.bf16.mxu0 %v2136
  %4420 = vmatpush1.bf16.msra.mxu0 %v2135
  %4421 = vmatprep.subr.bf16.mxu0 %v2144
  %4422 = vmatpush1.bf16.msra.mxu0 %v2143
  %4423 = vmatprep.subr.bf16.mxu0 %v2152
  %4424 = vmatpush1.bf16.msra.mxu0 %v2151
  %4425 = vmatprep.subr.bf16.mxu0 %v2160
  %4426 = vmatpush1.bf16.msra.mxu0 %v2159
  %4427 = vmatprep.subr.bf16.mxu0 %v2168
  %4428 = vmatpush1.bf16.msra.mxu0 %v2167
  %4429 = vmatprep.subr.bf16.mxu0 %v2176
  %4430 = vmatpush1.bf16.msra.mxu0 %v2175
  %4431 = vmatprep.subr.bf16.mxu0 %v2184
  %4432 = vmatpush1.bf16.msra.mxu0 %v2183
  %4433 = vmatprep.subr.bf16.mxu0 %v2192
  %4434 = vmatpush1.bf16.msra.mxu0 %v2191
  %4435 = vmatprep.subr.bf16.mxu0 %v2200
  %4436 = vmatpush1.bf16.msra.mxu0 %v2199
  %4437 = vmatprep.subr.bf16.mxu0 %v2208
  %4438 = vmatpush1.bf16.msra.mxu0 %v2207
  %4439 = vmatprep.subr.bf16.mxu0 %v2216
  %4440 = vmatpush1.bf16.msra.mxu0 %v2215
  %4441 = vmatprep.subr.bf16.mxu0 %v2224
  %4442 = vmatpush1.bf16.msra.mxu0 %v2223
  %4443 = vmatprep.mubr.bf16.mxu0 %v4215
  %4444 = vmatmul.mubr.bf16.gmra.mrb[0].mxu0 %v4287
  %v4445 = vpop.f32.mrb[0].mxu0
  %v4446 = vadd.f32 0.0, %v4445
  %v4447 = vpop.f32.mrb[0].mxu0
  %v4448 = vadd.f32 0.0, %v4447
  %v4449 = vpop.f32.mrb[0].mxu0
  %v4450 = vpop.f32.mrb[0].mxu0
  %4451 = vdwg.mxu0
  %v4452 = vadd.f32 %v4405, %v1655
  %v4453 = vadd.f32 %v4407, %v1659
  %v4454 = vadd.f32 %v4446, %v1663
  %v4455 = vadd.f32 %v4448, %v1667
  %v4456 = vxor.u32 %v4452, 2147483648
  %v4457 = vxor.u32 %v4453, 2147483648
  %v4458 = vxor.u32 %v4454, 2147483648
  %v4459 = vmul.f32 %v4456, 1.442695
  %v4460 = vpow.pop %v4459
  %v4461 = vmul.f32 %v4457, 1.442695
  %v4462 = vpow.pop %v4461
  %v4463 = vmul.f32 %v4458, 1.442695
  %v4464 = vpow.pop %v4463
  %v4465 = vadd.f32 %v4460, 1.0
  %v4466 = vadd.f32 %v4462, 1.0
  %v4467 = vadd.f32 %v4464, 1.0
  %v4468 = vrcp.pop %v4465
  %v4469 = vmul.f32 1.0, %v4468
  %v4470 = vrcp.pop %v4466
  %v4471 = vmul.f32 1.0, %v4470
  %v4472 = vrcp.pop %v4467
  %v4473 = vmul.f32 1.0, %v4472
  %v4474 = vtanh.pop %v4455
  %v4475 = vmul.f32 %v4471, %v4212
  %v4476 = vmul.f32 %v4469, %v4474
  %v4477 = vadd.f32 %v4475, %v4476
  %v4478 = vtanh.pop %v4477
  %v4479 = vmul.f32 %v4473, %v4478
  %v4480 = vpack.c.bf16 %v4479, %v4479
  %4481 = vmatprep.subr.bf16.mxu0 %v2595
  %4482 = vmatpush1.bf16.msra.mxu0 %v2594
  %4483 = vmatprep.subr.bf16.mxu0 %v2597
  %4484 = vmatpush1.bf16.msra.mxu0 %v2596
  %4485 = vmatprep.subr.bf16.mxu0 %v2599
  %4486 = vmatpush1.bf16.msra.mxu0 %v2598
  %4487 = vmatprep.subr.bf16.mxu0 %v2601
  %4488 = vmatpush1.bf16.msra.mxu0 %v2600
  %4489 = vmatprep.subr.bf16.mxu0 %v2603
  %4490 = vmatpush1.bf16.msra.mxu0 %v2602
  %4491 = vmatprep.subr.bf16.mxu0 %v2605
  %4492 = vmatpush1.bf16.msra.mxu0 %v2604
  %4493 = vmatprep.subr.bf16.mxu0 %v2607
  %4494 = vmatpush1.bf16.msra.mxu0 %v2606
  %4495 = vmatprep.subr.bf16.mxu0 %v2609
  %4496 = vmatpush1.bf16.msra.mxu0 %v2608
  %4497 = vmatprep.subr.bf16.mxu0 0
  %4498 = vmatpush1.bf16.msra.mxu0 0
  %4499 = vmatprep.subr.bf16.mxu0 0
  %4500 = vmatpush1.bf16.msra.mxu0 0
  %4501 = vmatprep.subr.bf16.mxu0 0
  %4502 = vmatpush1.bf16.msra.mxu0 0
  %4503 = vmatprep.subr.bf16.mxu0 0
  %4504 = vmatpush1.bf16.msra.mxu0 0
  %4505 = vmatprep.subr.bf16.mxu0 0
  %4506 = vmatpush1.bf16.msra.mxu0 0
  %4507 = vmatprep.subr.bf16.mxu0 0
  %4508 = vmatpush1.bf16.msra.mxu0 0
  %4509 = vmatprep.subr.bf16.mxu0 0
  %4510 = vmatpush1.bf16.msra.mxu0 0
  %4511 = vmatprep.subr.bf16.mxu0 0
  %4512 = vmatpush1.bf16.msra.mxu0 0
  %4513 = vmatprep.mubr.bf16.mxu0 0
  %4514 = vmatmul.mubr.bf16.gmra.mrb[0].mxu0 %v4480
  %v4515 = vpop.f32.mrb[0].mxu0
  %v4516 = vadd.f32 %v1677, %v4515
  %v4517 = vpop.f32.mrb[0].mxu0
  %v4518 = vadd.f32 %v1681, %v4517
  %v4519 = vpop.f32.mrb[0].mxu0
  %v4520 = vpop.f32.mrb[0].mxu0
  %4521 = vdwg.mxu0
  %4522 = vst [vmem:[%s15 + $0x70] sm:$0xff] %v4516
  %4523 = vst [vmem:[%s15 + $0x78] sm:$0xff] %v4518
  %v4524 = vadd.f32 %v1429, %v4323
  %v4525 = vadd.f32 %v1431, %v4325
  %v4526 = vadd.f32 %v1502, %v4364
  %v4527 = vadd.f32 %v1504, %v4366
  %v4528 = vxor.u32 %v4524, 2147483648
  %v4529 = vxor.u32 %v4525, 2147483648
  %v4530 = vxor.u32 %v4526, 2147483648
  %v4531 = vmul.f32 %v4528, 1.442695
  %v4532 = vpow.pop %v4531
  %v4533 = vmul.f32 %v4529, 1.442695
  %v4534 = vpow.pop %v4533
  %v4535 = vmul.f32 %v4530, 1.442695
  %v4536 = vpow.pop %v4535
  %v4537 = vadd.f32 %v4532, 1.0
  %v4538 = vadd.f32 %v4534, 1.0
  %v4539 = vadd.f32 %v4536, 1.0
  %v4540 = vrcp.pop %v4537
  %v4541 = vmul.f32 1.0, %v4540
  %v4542 = vrcp.pop %v4538
  %v4543 = vmul.f32 1.0, %v4542
  %v4544 = vrcp.pop %v4539
  %v4545 = vmul.f32 1.0, %v4544
  %v4546 = vtanh.pop %v4527
  %v4547 = vmul.f32 %v4543, %v4284
  %v4548 = vmul.f32 %v4541, %v4546
  %v4549 = vadd.f32 %v4547, %v4548
  %v4550 = vtanh.pop %v4549
  %v4551 = vmul.f32 %v4545, %v4550
  %v4552 = vpack.c.bf16 %v4551, %v4551
  %4553 = vmatprep.subr.bf16.mxu0 %v2102
  %4554 = vmatpush1.bf16.msra.mxu0 %v2101
  %4555 = vmatprep.subr.bf16.mxu0 %v2110
  %4556 = vmatpush1.bf16.msra.mxu0 %v2109
  %4557 = vmatprep.subr.bf16.mxu0 %v2118
  %4558 = vmatpush1.bf16.msra.mxu0 %v2117
  %4559 = vmatprep.subr.bf16.mxu0 %v2126
  %4560 = vmatpush1.bf16.msra.mxu0 %v2125
  %4561 = vmatprep.subr.bf16.mxu0 %v2134
  %4562 = vmatpush1.bf16.msra.mxu0 %v2133
  %4563 = vmatprep.subr.bf16.mxu0 %v2142
  %4564 = vmatpush1.bf16.msra.mxu0 %v2141
  %4565 = vmatprep.subr.bf16.mxu0 %v2150
  %4566 = vmatpush1.bf16.msra.mxu0 %v2149
  %4567 = vmatprep.subr.bf16.mxu0 %v2158
  %4568 = vmatpush1.bf16.msra.mxu0 %v2157
  %4569 = vmatprep.subr.bf16.mxu0 %v2166
  %4570 = vmatpush1.bf16.msra.mxu0 %v2165
  %4571 = vmatprep.subr.bf16.mxu0 %v2174
  %4572 = vmatpush1.bf16.msra.mxu0 %v2173
  %4573 = vmatprep.subr.bf16.mxu0 %v2182
  %4574 = vmatpush1.bf16.msra.mxu0 %v2181
  %4575 = vmatprep.subr.bf16.mxu0 %v2190
  %4576 = vmatpush1.bf16.msra.mxu0 %v2189
  %4577 = vmatprep.subr.bf16.mxu0 %v2198
  %4578 = vmatpush1.bf16.msra.mxu0 %v2197
  %4579 = vmatprep.subr.bf16.mxu0 %v2206
  %4580 = vmatpush1.bf16.msra.mxu0 %v2205
  %4581 = vmatprep.subr.bf16.mxu0 %v2214
  %4582 = vmatpush1.bf16.msra.mxu0 %v2213
  %4583 = vmatprep.subr.bf16.mxu0 %v2222
  %4584 = vmatpush1.bf16.msra.mxu0 %v2221
  %4585 = vmatprep.mubr.bf16.mxu0 %v4480
  %4586 = vmatmul.mubr.bf16.gmra.mrb[0].mxu0 %v4552
  %v4587 = vpop.f32.mrb[0].mxu0
  %v4588 = vadd.f32 0.0, %v4587
  %v4589 = vpop.f32.mrb[0].mxu0
  %v4590 = vadd.f32 0.0, %v4589
  %v4591 = vpop.f32.mrb[0].mxu0
  %v4592 = vpop.f32.mrb[0].mxu0
  %4593 = vdwg.mxu0
  %4594 = vmatprep.subr.bf16.mxu0 %v2104
  %4595 = vmatpush1.bf16.msra.mxu0 %v2103
  %4596 = vmatprep.subr.bf16.mxu0 %v2112
  %4597 = vmatpush1.bf16.msra.mxu0 %v2111
  %4598 = vmatprep.subr.bf16.mxu0 %v2120
  %4599 = vmatpush1.bf16.msra.mxu0 %v2119
  %4600 = vmatprep.subr.bf16.mxu0 %v2128
  %4601 = vmatpush1.bf16.msra.mxu0 %v2127
  %4602 = vmatprep.subr.bf16.mxu0 %v2136
  %4603 = vmatpush1.bf16.msra.mxu0 %v2135
  %4604 = vmatprep.subr.bf16.mxu0 %v2144
  %4605 = vmatpush1.bf16.msra.mxu0 %v2143
  %4606 = vmatprep.subr.bf16.mxu0 %v2152
  %4607 = vmatpush1.bf16.msra.mxu0 %v2151
  %4608 = vmatprep.subr.bf16.mxu0 %v2160
  %4609 = vmatpush1.bf16.msra.mxu0 %v2159
  %4610 = vmatprep.subr.bf16.mxu0 %v2168
  %4611 = vmatpush1.bf16.msra.mxu0 %v2167
  %4612 = vmatprep.subr.bf16.mxu0 %v2176
  %4613 = vmatpush1.bf16.msra.mxu0 %v2175
  %4614 = vmatprep.subr.bf16.mxu0 %v2184
  %4615 = vmatpush1.bf16.msra.mxu0 %v2183
  %4616 = vmatprep.subr.bf16.mxu0 %v2192
  %4617 = vmatpush1.bf16.msra.mxu0 %v2191
  %4618 = vmatprep.subr.bf16.mxu0 %v2200
  %4619 = vmatpush1.bf16.msra.mxu0 %v2199
  %4620 = vmatprep.subr.bf16.mxu0 %v2208
  %4621 = vmatpush1.bf16.msra.mxu0 %v2207
  %4622 = vmatprep.subr.bf16.mxu0 %v2216
  %4623 = vmatpush1.bf16.msra.mxu0 %v2215
  %4624 = vmatprep.subr.bf16.mxu0 %v2224
  %4625 = vmatpush1.bf16.msra.mxu0 %v2223
  %4626 = vmatprep.mubr.bf16.mxu0 %v4480
  %4627 = vmatmul.mubr.bf16.gmra.mrb[0].mxu0 %v4552
  %v4628 = vpop.f32.mrb[0].mxu0
  %v4629 = vadd.f32 0.0, %v4628
  %v4630 = vpop.f32.mrb[0].mxu0
  %v4631 = vadd.f32 0.0, %v4630
  %v4632 = vpop.f32.mrb[0].mxu0
  %v4633 = vpop.f32.mrb[0].mxu0
  %4634 = vdwg.mxu0
  %v4635 = vadd.f32 %v4588, %v1655
  %v4636 = vadd.f32 %v4590, %v1659
  %v4637 = vadd.f32 %v4629, %v1663
  %v4638 = vadd.f32 %v4631, %v1667
  %v4639 = vxor.u32 %v4635, 2147483648
  %v4640 = vxor.u32 %v4636, 2147483648
  %v4641 = vxor.u32 %v4637, 2147483648
  %v4642 = vmul.f32 %v4639, 1.442695
  %v4643 = vpow.pop %v4642
  %v4644 = vmul.f32 %v4640, 1.442695
  %v4645 = vpow.pop %v4644
  %v4646 = vmul.f32 %v4641, 1.442695
  %v4647 = vpow.pop %v4646
  %v4648 = vadd.f32 %v4643, 1.0
  %v4649 = vadd.f32 %v4645, 1.0
  %v4650 = vadd.f32 %v4647, 1.0
  %v4651 = vrcp.pop %v4648
  %v4652 = vmul.f32 1.0, %v4651
  %v4653 = vrcp.pop %v4649
  %v4654 = vmul.f32 1.0, %v4653
  %v4655 = vrcp.pop %v4650
  %v4656 = vmul.f32 1.0, %v4655
  %v4657 = vtanh.pop %v4638
  %v4658 = vmul.f32 %v4654, %v4477
  %v4659 = vmul.f32 %v4652, %v4657
  %v4660 = vadd.f32 %v4658, %v4659
  %v4661 = vtanh.pop %v4660
  %v4662 = vmul.f32 %v4656, %v4661
  %v4663 = vpack.c.bf16 %v4662, %v4662
  %4664 = vmatprep.subr.bf16.mxu0 %v2595
  %4665 = vmatpush1.bf16.msra.mxu0 %v2594
  %4666 = vmatprep.subr.bf16.mxu0 %v2597
  %4667 = vmatpush1.bf16.msra.mxu0 %v2596
  %4668 = vmatprep.subr.bf16.mxu0 %v2599
  %4669 = vmatpush1.bf16.msra.mxu0 %v2598
  %4670 = vmatprep.subr.bf16.mxu0 %v2601
  %4671 = vmatpush1.bf16.msra.mxu0 %v2600
  %4672 = vmatprep.subr.bf16.mxu0 %v2603
  %4673 = vmatpush1.bf16.msra.mxu0 %v2602
  %4674 = vmatprep.subr.bf16.mxu0 %v2605
  %4675 = vmatpush1.bf16.msra.mxu0 %v2604
  %4676 = vmatprep.subr.bf16.mxu0 %v2607
  %4677 = vmatpush1.bf16.msra.mxu0 %v2606
  %4678 = vmatprep.subr.bf16.mxu0 %v2609
  %4679 = vmatpush1.bf16.msra.mxu0 %v2608
  %4680 = vmatprep.subr.bf16.mxu0 0
  %4681 = vmatpush1.bf16.msra.mxu0 0
  %4682 = vmatprep.subr.bf16.mxu0 0
  %4683 = vmatpush1.bf16.msra.mxu0 0
  %4684 = vmatprep.subr.bf16.mxu0 0
  %4685 = vmatpush1.bf16.msra.mxu0 0
  %4686 = vmatprep.subr.bf16.mxu0 0
  %4687 = vmatpush1.bf16.msra.mxu0 0
  %4688 = vmatprep.subr.bf16.mxu0 0
  %4689 = vmatpush1.bf16.msra.mxu0 0
  %4690 = vmatprep.subr.bf16.mxu0 0
  %4691 = vmatpush1.bf16.msra.mxu0 0
  %4692 = vmatprep.subr.bf16.mxu0 0
  %4693 = vmatpush1.bf16.msra.mxu0 0
  %4694 = vmatprep.subr.bf16.mxu0 0
  %4695 = vmatpush1.bf16.msra.mxu0 0
  %4696 = vmatprep.mubr.bf16.mxu0 0
  %4697 = vmatmul.mubr.bf16.gmra.mrb[0].mxu0 %v4663
  %v4698 = vpop.f32.mrb[0].mxu0
  %v4699 = vadd.f32 %v1677, %v4698
  %v4700 = vpop.f32.mrb[0].mxu0
  %v4701 = vadd.f32 %v1681, %v4700
  %v4702 = vpop.f32.mrb[0].mxu0
  %v4703 = vpop.f32.mrb[0].mxu0
  %4704 = vdwg.mxu0
  %4705 = vst [vmem:[%s15 + $0x80] sm:$0xff] %v4699
  %4706 = vst [vmem:[%s15 + $0x88] sm:$0xff] %v4701
  // Predicated region
  $region62: #{encoder_decoder_forward.1} parent=0 // pred_check
    _
  $region63: #{encoder_decoder_forward.1} parent=0 // pred_check_branch
    %4708 = sbr.rel (0) target = $region65
  $region64: #{encoder_decoder_forward.1} parent=0 // pred_region
    _
  $region65: #{encoder_decoder_forward.1} parent=0 // pred_fallthru
    _
  // Predicated region
  $region66: #{encoder_decoder_forward.1} parent=0 // pred_check
    _
  $region67: #{encoder_decoder_forward.1} parent=0 // pred_check_branch
    %4710 = sbr.rel (0) target = $region69
  $region68: #{encoder_decoder_forward.1} parent=0 // pred_region
    _
  $region69: #{encoder_decoder_forward.1} parent=0 // pred_fallthru
    _

</llo_original>
